<compile_context>
chip_gen: v7x
topology: tpu7x:2x2x1
jax: 0.10.0
libtpu: 0.0.40
codegen_flags: <defaults>
</compile_context>

<pallas_src>
import functools

import jax
import jax.numpy as jnp
from jax.experimental import pallas as pl
from jax.experimental.pallas import tpu as pltpu


def _round_up(v, m):
    return ((v + m - 1) // m) * m


# ----------------------------- Pallas kernels ------------------------------

def _feature_net_kernel(x_ref, sel_ref, wb_ref, bconv_ref, pfc_ref, bfc_ref,
                        o_ref):
    """Fused 3x3 conv -> ReLU -> global-avg-pool -> fc for a block of images.

    x_ref   : (tb*(H+2), (W+2)*C)   bf16, row-flattened padded images
    wb_ref  : (3, (W+2)*C, W*cc)    bf16, banded conv weights (one per dy)
    sel_ref : (tb, tb*(H+2)-2)      bf16, per-image valid-row selection
    pfc_ref : (W*cc, feat)          bf16, pooling(1/(H*W)) fused with fc weight
    """
    rows = sel_ref.shape[1]                      # tb*(H+2) - 2
    x_all = x_ref[...]                           # bf16
    # Shift the bf16 INPUT (cheap) instead of the f32 results, so the three
    # partial products add at aligned offsets (plain VALU adds, no relayout).
    acc = (jnp.dot(x_all[0:rows, :], wb_ref[0],
                   preferred_element_type=jnp.float32)
           + jnp.dot(x_all[1:rows + 1, :], wb_ref[1],
                     preferred_element_type=jnp.float32)
           + jnp.dot(x_all[2:rows + 2, :], wb_ref[2],
                     preferred_element_type=jnp.float32))
    act = jnp.maximum(acc + bconv_ref[...], 0.0)                  # ReLU, f32
    # Pooling + fc on the native bf16 MXU path (f32 accumulation).
    pooled = jnp.dot(sel_ref[...], act.astype(jnp.bfloat16),
                     preferred_element_type=jnp.float32)          # (tb, W*cc)
    feats = jnp.dot(pooled.astype(jnp.bfloat16), pfc_ref[...],
                    preferred_element_type=jnp.float32) + bfc_ref[...]
    o_ref[...] = feats.astype(o_ref.dtype)                        # lane-dense


def _fused_dual_lstm_kernel(x_ref, wih_ref, whh_ref, b_ref, wout_ref,
                            bout_ref, y_ref, *, seq_len, batch):
    """Both LSTM heads fused (gate-interleaved columns, block-diag w_hh).

    Column layout of the 8*hp gate axis: [i0 i1 | f0 f1 | g0 g1 | o0 o1]
    (PyTorch gate order i, f, g, o; head index interleaved inside each gate),
    so a single matmul + lane-aligned slices drive both recurrences at once.
    The (head0 + head1)/2 average is pre-folded into wout/bout.
    """
    hp2 = whh_ref.shape[0]                       # 2 * hp (both heads' hidden)
    # Hoisted input projection for all timesteps / both heads: one MXU matmul.
    gx = jnp.dot(x_ref[...], wih_ref[...],
                 preferred_element_type=jnp.float32) + b_ref[...]  # (S*B, 8hp)
    h = jnp.zeros((batch, hp2), jnp.float32)
    c = jnp.zeros((batch, hp2), jnp.float32)
    hs = []
    # Short fixed recurrence (S=8, hp=128): full unroll is fine here.
    # TODO(synk): for the real config (lstm=512, long seq) switch to
    # lax.fori_loop(..., unroll=2-4) with gx staged in VMEM scratch.
    for t in range(seq_len):
        g = gx[t * batch:(t + 1) * batch, :] + jnp.dot(
            h.astype(whh_ref.dtype), whh_ref[...],
            preferred_element_type=jnp.float32)
        i_g = jax.nn.sigmoid(g[:, 0 * hp2:1 * hp2])   # 128-lane aligned slices
        f_g = jax.nn.sigmoid(g[:, 1 * hp2:2 * hp2])
        g_g = jnp.tanh(g[:, 2 * hp2:3 * hp2])
        o_g = jax.nn.sigmoid(g[:, 3 * hp2:4 * hp2])
        c = f_g * c + i_g * g_g
        h = o_g * jnp.tanh(c)
        hs.append(h)                       # keep in registers, write once below
    hs_all = jnp.concatenate(hs, axis=0)                          # (S*B, 2hp)
    # Deferred (averaged) output projection: one matmul + one lane-dense store.
    y = jnp.dot(hs_all.astype(wout_ref.dtype), wout_ref[...],
                preferred_element_type=jnp.float32) + bout_ref[...]
    y_ref[...] = y.astype(y_ref.dtype)


# ------------------------------ kernel wrappers -----------------------------

def pallas_feature_net(x2d, sel, wb, bconv, pfc, bfc, *, n_img, img_h, tb):
    rows_blk = tb * (img_h + 2)
    k_dim = x2d.shape[1]
    wc = wb.shape[2]
    feat = pfc.shape[1]
    grid = (n_img // tb,)
    flops = grid[0] * (3 * 2 * rows_blk * k_dim * wc
                       + 2 * tb * sel.shape[1] * wc + 2 * tb * wc * feat)
    bytes_accessed = (x2d.size * 2 + wb.size * 2 + sel.size * 2
                      + bconv.size * 4 + pfc.size * 2 + bfc.size * 4
                      + n_img * feat * 4)
    # NOTE: the weight/selection blocks are grid-invariant; at the real
    # backbone size they could be single-buffered (pipeline_mode=pl.Buffered(1))
    # against v7x's 64 MiB VMEM/TC -- negligible at these toy sizes.
    return pl.pallas_call(
        _feature_net_kernel,
        out_shape=jax.ShapeDtypeStruct((n_img, feat), jnp.float32),
        grid=grid,
        in_specs=[pl.BlockSpec((rows_blk, k_dim), lambda i: (i, 0)),
                  pl.BlockSpec(sel.shape, lambda i: (0, 0)),
                  pl.BlockSpec(wb.shape, lambda i: (0, 0, 0)),
                  pl.BlockSpec(bconv.shape, lambda i: (0, 0)),
                  pl.BlockSpec(pfc.shape, lambda i: (0, 0)),
                  pl.BlockSpec(bfc.shape, lambda i: (0, 0))],
        out_specs=pl.BlockSpec((tb, feat), lambda i: (i, 0)),
        compiler_params=pltpu.CompilerParams(
            dimension_semantics=("parallel",),
            vmem_limit_bytes=32 * 1024 * 1024),
        cost_estimate=pl.CostEstimate(flops=int(flops), transcendentals=0,
                                      bytes_accessed=int(bytes_accessed)),
    )(x2d, sel, wb, bconv, pfc, bfc)


def pallas_fused_dual_lstm(x_tm, heads, *, seq_len, batch):
    """Both LSTM heads fused in one kernel body (single launch)."""
    sb, f = x_tm.shape
    hp2 = heads["w_hh"].shape[0]
    op = heads["w_out"].shape[1]
    flops = (2 * sb * f * 4 * hp2 + seq_len * 2 * batch * hp2 * 4 * hp2
             + 2 * sb * hp2 * op)
    trans = seq_len * batch * 5 * hp2
    bytes_accessed = (x_tm.size * 2
                      + sum(int(v.size) * (2 if v.dtype == jnp.bfloat16 else 4)
                            for v in heads.values())
                      + sb * op * 4)
    return pl.pallas_call(
        functools.partial(_fused_dual_lstm_kernel, seq_len=seq_len,
                          batch=batch),
        out_shape=jax.ShapeDtypeStruct((sb, op), jnp.float32),
        grid=(1,),
        in_specs=[pl.BlockSpec((sb, f), lambda i: (0, 0)),
                  pl.BlockSpec(heads["w_ih"].shape, lambda i: (0, 0)),
                  pl.BlockSpec(heads["w_hh"].shape, lambda i: (0, 0)),
                  pl.BlockSpec(heads["b"].shape, lambda i: (0, 0)),
                  pl.BlockSpec(heads["w_out"].shape, lambda i: (0, 0)),
                  pl.BlockSpec(heads["b_out"].shape, lambda i: (0, 0))],
        out_specs=pl.BlockSpec((sb, op), lambda i: (0, 0)),
        compiler_params=pltpu.CompilerParams(
            dimension_semantics=("arbitrary",),
            vmem_limit_bytes=32 * 1024 * 1024),
        cost_estimate=pl.CostEstimate(flops=int(flops),
                                      transcendentals=int(trans),
                                      bytes_accessed=int(bytes_accessed)),
    )(x_tm, heads["w_ih"], heads["w_hh"], heads["b"],
      heads["w_out"], heads["b_out"])


# --------------------------- parameters / preparation -----------------------

def init_params(key, c_in, conv_ch, feat_size, lstm_size, out_size):
    """Logical (PyTorch-like) parameter shapes."""
    ks = jax.random.split(key, 4)
    s = 0.05

    def head(k):
        kk = jax.random.split(k, 6)
        return dict(
            w_ih=jax.random.normal(kk[0], (feat_size, 4 * lstm_size),
                                   jnp.float32) * s,
            w_hh=jax.random.normal(kk[1], (lstm_size, 4 * lstm_size),
                                   jnp.float32) * s,
            b_ih=jax.random.normal(kk[2], (4 * lstm_size,), jnp.float32) * s,
            b_hh=jax.random.normal(kk[3], (4 * lstm_size,), jnp.float32) * s,
            w_out=jax.random.normal(kk[4], (lstm_size, out_size),
                                    jnp.float32) * s,
            b_out=jax.random.normal(kk[5], (out_size,), jnp.float32) * s,
        )

    return dict(
        conv_w=jax.random.normal(ks[0], (3, 3, c_in, conv_ch), jnp.float32) * s,
        conv_b=jnp.zeros((conv_ch,), jnp.float32),
        fc_w=jax.random.normal(ks[1], (conv_ch, feat_size), jnp.float32) * s,
        fc_b=jnp.zeros((feat_size,), jnp.float32),
        temporal_head=head(ks[2]),
        ca_temp_head=head(ks[3]),
    )


def _fuse_lstm_heads(h0, h1, feat):
    """Fuse two LSTMHeads into gate-interleaved / block-diagonal bf16 weights.

    Column layout of the 8*hp axis: gate g (i,f,g,o) occupies
    [g*2hp, (g+1)*2hp); head d occupies the d-th hp-wide half of that block.
    Zero padding of hp / op is semantics-preserving (h=c=0 init).
    The final (head0+head1)/2 average is folded into w_out / b_out.
    """
    h_l = h0["w_hh"].shape[0]
    o_l = h0["w_out"].shape[1]
    hp = _round_up(h_l, 128)
    op = _round_up(o_l, 128)

    w_ih = jnp.zeros((feat, 8 * hp), jnp.float32)
    w_hh = jnp.zeros((2 * hp, 8 * hp), jnp.float32)
    b = jnp.zeros((1, 8 * hp), jnp.float32)
    w_out = jnp.zeros((2 * hp, op), jnp.float32)
    b_out = jnp.zeros((1, op), jnp.float32)

    for d, hd in enumerate((h0, h1)):
        bsum = (hd["b_ih"] + hd["b_hh"]).reshape(1, 4 * h_l)
        for g in range(4):
            col = g * 2 * hp + d * hp
            w_ih = w_ih.at[:, col:col + h_l].set(
                hd["w_ih"][:, g * h_l:(g + 1) * h_l])
            w_hh = w_hh.at[d * hp:d * hp + h_l, col:col + h_l].set(
                hd["w_hh"][:, g * h_l:(g + 1) * h_l])
            b = b.at[:, col:col + h_l].set(bsum[:, g * h_l:(g + 1) * h_l])
        w_out = w_out.at[d * hp:d * hp + h_l, :o_l].set(hd["w_out"] * 0.5)
    b_out = b_out.at[:, :o_l].set(
        0.5 * (h0["b_out"] + h1["b_out"]).reshape(1, o_l))

    return dict(w_ih=w_ih.astype(jnp.bfloat16),
                w_hh=w_hh.astype(jnp.bfloat16),
                b=b,                                   # f32 bias (added to f32)
                w_out=w_out.astype(jnp.bfloat16),
                b_out=b_out)                           # f32


def prepare_params(params, img_h, img_w):
    """One-time conversion of logical params to kernel-friendly layouts."""
    conv_w = params["conv_w"]                      # (3, 3, C, cc) = (dy,dx,c,oc)
    _, _, c_in, cc = conv_w.shape
    feat = params["fc_w"].shape[1]
    wp2 = img_w + 2

    # Banded per-dy conv weights: wb[dy, (x+dx)*C + c, x*cc + oc] = w[dy,dx,c,oc]
    dx_i = jnp.arange(3)[:, None, None]
    x_i = jnp.arange(img_w)[None, :, None]
    p_i = jnp.arange(wp2)[None, None, :]
    band = (p_i == x_i + dx_i).astype(jnp.float32)          # (3, W, W+2)
    wb = jnp.einsum('axp,yaco->ypcxo', band, conv_w)        # (3, W+2, C, W, cc)
    wb = wb.reshape(3, wp2 * c_in, img_w * cc).astype(jnp.bfloat16)

    bconv = jnp.tile(params["conv_b"].reshape(1, cc), (1, img_w))   # (1, W*cc)
    pfc = (jnp.tile(params["fc_w"], (img_w, 1))
           / float(img_h * img_w)).astype(jnp.bfloat16)
    bfc = params["fc_b"].reshape(1, feat)

    heads = _fuse_lstm_heads(params["temporal_head"], params["ca_temp_head"],
                             feat)
    return dict(conv_wb=wb, conv_b=bconv, pool_fc=pfc, fc_b=bfc, heads=heads)


# ------------------------------- forward pass -------------------------------

def temporal_cnn_forward(prep, x, long_term, *, out_size):
    """TemporalCNN.forward with seq_len=None, do_lstm=True, trainee=False."""
    b, s, c, img_h, img_w = x.shape
    n = b * s
    feat = prep["fc_b"].shape[1]
    wc = prep["conv_wb"].shape[2]                        # W * conv_ch

    # --- extract_image_features: flatten(end_dim=1) -> featureNet (fused) ----
    # transpose+pad+cast stay one fused XLA producer of x2d (inside jit).
    xi = jnp.transpose(x.reshape(n, c, img_h, img_w), (0, 2, 3, 1))   # NHWC
    xp = jnp.pad(xi, ((0, 0), (1, 1), (1, 1), (0, 0)))
    x2d = xp.reshape(n * (img_h + 2), (img_w + 2) * c).astype(jnp.bfloat16)

    # Images per grid step: as many as a VMEM budget allows, while keeping at
    # least 2 grid steps so v7x megacore can shard the parallel axis.
    bytes_per_img = ((img_h + 2) * (img_w + 2) * c * 2 * 2     # bf16 in, 2 bufs
                     + (img_h + 2) * wc * 4 * 2)               # f32 acc / act
    cap = max(1, min(n // 2 if n >= 2 else 1,
                     (8 * 1024 * 1024) // max(bytes_per_img, 1)))
    tb = max(d for d in range(1, n + 1) if n % d == 0 and d <= cap)

    rows = tb * (img_h + 2) - 2
    r_i = jnp.arange(rows)[None, :]
    n_i = jnp.arange(tb)[:, None]
    sel = ((r_i >= n_i * (img_h + 2)) &
           (r_i < n_i * (img_h + 2) + img_h)).astype(jnp.bfloat16)

    feats = pallas_feature_net(x2d, sel, prep["conv_wb"], prep["conv_b"],
                               prep["pool_fc"], prep["fc_b"],
                               n_img=n, img_h=img_h, tb=tb)
    xf = feats.reshape(b, s, feat)                           # (B, S, feat)

    # --- long-term response: tiny, so plain jnp (no kernel-launch overhead) --
    single = jnp.mean(xf * long_term, axis=-1)[0]            # (S,)
    multi = jnp.flip(jnp.cumsum(jnp.flip(single)))           # suffix sums
    idx = jnp.argmax(multi)

    # TODO(synk): CrossAttention class is not provided in the source; self.CA
    # is Identity (returns x), so CA(x, long_term[:, idx:, :]) == x and the
    # ragged slice is index-computed but not materialized.
    x_tm = jnp.transpose(xf, (1, 0, 2)).reshape(s * b, feat).astype(
        jnp.bfloat16)                                        # time-major flat

    # Fused dual LSTM heads; kernel output is already (head0 + head1) / 2.
    y = pallas_fused_dual_lstm(x_tm, prep["heads"], seq_len=s, batch=b)
    out = jnp.transpose(y.reshape(s, b, -1), (1, 0, 2))[..., :out_size]
    return [out], idx


# ---------------------------------- main ------------------------------------

if __name__ == "__main__":
    B, S = 2, 8          # batch of clips, frames per clip
    C, H, W = 4, 16, 16  # per-frame NCHW
    conv_ch = 16
    feat_size = 128      # stands in for the backbone feature size (768 orig)
    lstm_size = 32       # stands in for 512 (zero-padded to 128 lanes)
    out_size = 8

    key = jax.random.PRNGKey(0)
    k_param, k_x, k_lt = jax.random.split(key, 3)

    params = init_params(k_param, C, conv_ch, feat_size, lstm_size, out_size)
    prep = prepare_params(params, H, W)

    x = jax.random.normal(k_x, (B, S, C, H, W), jnp.float32)
    long_term = jax.random.normal(k_lt, (B, S, feat_size), jnp.float32)

    fwd = jax.jit(functools.partial(temporal_cnn_forward, out_size=out_size))
    out_list, idx = fwd(prep, x, long_term)
    out = out_list[0]
    jax.block_until_ready(out)
    jax.block_until_ready(idx)
    assert out.shape == (B, S, out_size), out.shape
    assert 0 <= int(idx) < S
    print("KERNEL_OK")
</pallas_src>

<mosaic_0001>
module attributes {stable_mosaic.version = 11 : i64} {
  func.func @_fused_dual_lstm_kernel(%arg0: i32, %arg1: memref<16x128xbf16, #tpu.memory_space<vmem>>, %arg2: memref<128x1024xbf16, #tpu.memory_space<vmem>>, %arg3: memref<256x1024xbf16, #tpu.memory_space<vmem>>, %arg4: memref<1x1024xf32, #tpu.memory_space<vmem>>, %arg5: memref<256x128xbf16, #tpu.memory_space<vmem>>, %arg6: memref<1x128xf32, #tpu.memory_space<vmem>>, %arg7: memref<16x128xf32, #tpu.memory_space<vmem>>) attributes {dimension_semantics = [#tpu.dimension_semantics<arbitrary>], iteration_bounds = array<i64: 1>, scalar_prefetch = 0 : i64, scratch_operands = 0 : i64, tpu.core_type = #tpu.core_type<tc>, window_params = [{pipeline_mode = #tpu.pipeline_mode<synchronous>, transform_indices = @transform_0, window_bounds = array<i64: 16, 128>}, {pipeline_mode = #tpu.pipeline_mode<synchronous>, transform_indices = @transform_1, window_bounds = array<i64: 128, 1024>}, {pipeline_mode = #tpu.pipeline_mode<synchronous>, transform_indices = @transform_2, window_bounds = array<i64: 256, 1024>}, {pipeline_mode = #tpu.pipeline_mode<synchronous>, transform_indices = @transform_3, window_bounds = array<i64: 1, 1024>}, {pipeline_mode = #tpu.pipeline_mode<synchronous>, transform_indices = @transform_4, window_bounds = array<i64: 256, 128>}, {pipeline_mode = #tpu.pipeline_mode<synchronous>, transform_indices = @transform_5, window_bounds = array<i64: 1, 128>}, {pipeline_mode = #tpu.pipeline_mode<synchronous>, transform_indices = @transform_6, window_bounds = array<i64: 16, 128>}]} {
    %c0 = arith.constant 0 : index
    %c0_0 = arith.constant 0 : index
    %0 = vector.load %arg1[%c0, %c0_0] : memref<16x128xbf16, #tpu.memory_space<vmem>>, vector<16x128xbf16>
    %c0_1 = arith.constant 0 : index
    %c0_2 = arith.constant 0 : index
    %1 = vector.load %arg2[%c0_1, %c0_2] : memref<128x1024xbf16, #tpu.memory_space<vmem>>, vector<128x1024xbf16>
    %cst = arith.constant dense<0.000000e+00> : vector<16x1024xf32>
    %2 = tpu.matmul %0, %1, %cst {dimension_numbers = #tpu.dot_dimension_numbers<[1], [0], [0], [1], [0, 0, 1, 1], [], []>} : vector<16x128xbf16>, vector<128x1024xbf16>, vector<16x1024xf32> -> vector<16x1024xf32>
    %c0_3 = arith.constant 0 : index
    %c0_4 = arith.constant 0 : index
    %3 = vector.load %arg4[%c0_3, %c0_4] : memref<1x1024xf32, #tpu.memory_space<vmem>>, vector<1x1024xf32>
    %4 = vector.broadcast %3 : vector<1x1024xf32> to vector<16x1024xf32>
    %5 = arith.addf %2, %4 : vector<16x1024xf32>
    %cst_5 = arith.constant 0.000000e+00 : f32
    %6 = vector.broadcast %cst_5 : f32 to vector<2x256xf32>
    %cst_6 = arith.constant 0.000000e+00 : f32
    %7 = vector.broadcast %cst_6 : f32 to vector<2x256xf32>
    %8 = vector.extract_strided_slice %5 {offsets = [0, 0], sizes = [2, 1024], strides = [1, 1]} : vector<16x1024xf32> to vector<2x1024xf32>
    %9 = arith.truncf %6 : vector<2x256xf32> to vector<2x256xbf16>
    %c0_7 = arith.constant 0 : index
    %c0_8 = arith.constant 0 : index
    %10 = vector.load %arg3[%c0_7, %c0_8] : memref<256x1024xbf16, #tpu.memory_space<vmem>>, vector<256x1024xbf16>
    %cst_9 = arith.constant dense<0.000000e+00> : vector<2x1024xf32>
    %11 = tpu.matmul %9, %10, %cst_9 {dimension_numbers = #tpu.dot_dimension_numbers<[1], [0], [0], [1], [0, 0, 1, 1], [], []>} : vector<2x256xbf16>, vector<256x1024xbf16>, vector<2x1024xf32> -> vector<2x1024xf32>
    %12 = arith.addf %8, %11 : vector<2x1024xf32>
    %13 = vector.extract_strided_slice %12 {offsets = [0, 0], sizes = [2, 256], strides = [1, 1]} : vector<2x1024xf32> to vector<2x256xf32>
    %14 = arith.negf %13 : vector<2x256xf32>
    %15 = math.exp %14 : vector<2x256xf32>
    %cst_10 = arith.constant 1.000000e+00 : f32
    %16 = vector.broadcast %cst_10 : f32 to vector<2x256xf32>
    %17 = arith.addf %16, %15 : vector<2x256xf32>
    %18 = arith.divf %16, %17 : vector<2x256xf32>
    %19 = vector.extract_strided_slice %12 {offsets = [0, 256], sizes = [2, 256], strides = [1, 1]} : vector<2x1024xf32> to vector<2x256xf32>
    %20 = arith.negf %19 : vector<2x256xf32>
    %21 = math.exp %20 : vector<2x256xf32>
    %cst_11 = arith.constant 1.000000e+00 : f32
    %22 = vector.broadcast %cst_11 : f32 to vector<2x256xf32>
    %23 = arith.addf %22, %21 : vector<2x256xf32>
    %24 = arith.divf %22, %23 : vector<2x256xf32>
    %25 = vector.extract_strided_slice %12 {offsets = [0, 512], sizes = [2, 256], strides = [1, 1]} : vector<2x1024xf32> to vector<2x256xf32>
    %26 = math.tanh %25 : vector<2x256xf32>
    %27 = vector.extract_strided_slice %12 {offsets = [0, 768], sizes = [2, 256], strides = [1, 1]} : vector<2x1024xf32> to vector<2x256xf32>
    %28 = arith.negf %27 : vector<2x256xf32>
    %29 = math.exp %28 : vector<2x256xf32>
    %cst_12 = arith.constant 1.000000e+00 : f32
    %30 = vector.broadcast %cst_12 : f32 to vector<2x256xf32>
    %31 = arith.addf %30, %29 : vector<2x256xf32>
    %32 = arith.divf %30, %31 : vector<2x256xf32>
    %33 = arith.mulf %24, %7 : vector<2x256xf32>
    %34 = arith.mulf %18, %26 : vector<2x256xf32>
    %35 = arith.addf %33, %34 : vector<2x256xf32>
    %36 = math.tanh %35 : vector<2x256xf32>
    %37 = arith.mulf %32, %36 : vector<2x256xf32>
    %38 = vector.extract_strided_slice %5 {offsets = [2, 0], sizes = [2, 1024], strides = [1, 1]} : vector<16x1024xf32> to vector<2x1024xf32>
    %39 = arith.truncf %37 : vector<2x256xf32> to vector<2x256xbf16>
    %c0_13 = arith.constant 0 : index
    %c0_14 = arith.constant 0 : index
    %40 = vector.load %arg3[%c0_13, %c0_14] : memref<256x1024xbf16, #tpu.memory_space<vmem>>, vector<256x1024xbf16>
    %cst_15 = arith.constant dense<0.000000e+00> : vector<2x1024xf32>
    %41 = tpu.matmul %39, %40, %cst_15 {dimension_numbers = #tpu.dot_dimension_numbers<[1], [0], [0], [1], [0, 0, 1, 1], [], []>} : vector<2x256xbf16>, vector<256x1024xbf16>, vector<2x1024xf32> -> vector<2x1024xf32>
    %42 = arith.addf %38, %41 : vector<2x1024xf32>
    %43 = vector.extract_strided_slice %42 {offsets = [0, 0], sizes = [2, 256], strides = [1, 1]} : vector<2x1024xf32> to vector<2x256xf32>
    %44 = arith.negf %43 : vector<2x256xf32>
    %45 = math.exp %44 : vector<2x256xf32>
    %cst_16 = arith.constant 1.000000e+00 : f32
    %46 = vector.broadcast %cst_16 : f32 to vector<2x256xf32>
    %47 = arith.addf %46, %45 : vector<2x256xf32>
    %48 = arith.divf %46, %47 : vector<2x256xf32>
    %49 = vector.extract_strided_slice %42 {offsets = [0, 256], sizes = [2, 256], strides = [1, 1]} : vector<2x1024xf32> to vector<2x256xf32>
    %50 = arith.negf %49 : vector<2x256xf32>
    %51 = math.exp %50 : vector<2x256xf32>
    %cst_17 = arith.constant 1.000000e+00 : f32
    %52 = vector.broadcast %cst_17 : f32 to vector<2x256xf32>
    %53 = arith.addf %52, %51 : vector<2x256xf32>
    %54 = arith.divf %52, %53 : vector<2x256xf32>
    %55 = vector.extract_strided_slice %42 {offsets = [0, 512], sizes = [2, 256], strides = [1, 1]} : vector<2x1024xf32> to vector<2x256xf32>
    %56 = math.tanh %55 : vector<2x256xf32>
    %57 = vector.extract_strided_slice %42 {offsets = [0, 768], sizes = [2, 256], strides = [1, 1]} : vector<2x1024xf32> to vector<2x256xf32>
    %58 = arith.negf %57 : vector<2x256xf32>
    %59 = math.exp %58 : vector<2x256xf32>
    %cst_18 = arith.constant 1.000000e+00 : f32
    %60 = vector.broadcast %cst_18 : f32 to vector<2x256xf32>
    %61 = arith.addf %60, %59 : vector<2x256xf32>
    %62 = arith.divf %60, %61 : vector<2x256xf32>
    %63 = arith.mulf %54, %35 : vector<2x256xf32>
    %64 = arith.mulf %48, %56 : vector<2x256xf32>
    %65 = arith.addf %63, %64 : vector<2x256xf32>
    %66 = math.tanh %65 : vector<2x256xf32>
    %67 = arith.mulf %62, %66 : vector<2x256xf32>
    %68 = vector.extract_strided_slice %5 {offsets = [4, 0], sizes = [2, 1024], strides = [1, 1]} : vector<16x1024xf32> to vector<2x1024xf32>
    %69 = arith.truncf %67 : vector<2x256xf32> to vector<2x256xbf16>
    %c0_19 = arith.constant 0 : index
    %c0_20 = arith.constant 0 : index
    %70 = vector.load %arg3[%c0_19, %c0_20] : memref<256x1024xbf16, #tpu.memory_space<vmem>>, vector<256x1024xbf16>
    %cst_21 = arith.constant dense<0.000000e+00> : vector<2x1024xf32>
    %71 = tpu.matmul %69, %70, %cst_21 {dimension_numbers = #tpu.dot_dimension_numbers<[1], [0], [0], [1], [0, 0, 1, 1], [], []>} : vector<2x256xbf16>, vector<256x1024xbf16>, vector<2x1024xf32> -> vector<2x1024xf32>
    %72 = arith.addf %68, %71 : vector<2x1024xf32>
    %73 = vector.extract_strided_slice %72 {offsets = [0, 0], sizes = [2, 256], strides = [1, 1]} : vector<2x1024xf32> to vector<2x256xf32>
    %74 = arith.negf %73 : vector<2x256xf32>
    %75 = math.exp %74 : vector<2x256xf32>
    %cst_22 = arith.constant 1.000000e+00 : f32
    %76 = vector.broadcast %cst_22 : f32 to vector<2x256xf32>
    %77 = arith.addf %76, %75 : vector<2x256xf32>
    %78 = arith.divf %76, %77 : vector<2x256xf32>
    %79 = vector.extract_strided_slice %72 {offsets = [0, 256], sizes = [2, 256], strides = [1, 1]} : vector<2x1024xf32> to vector<2x256xf32>
    %80 = arith.negf %79 : vector<2x256xf32>
    %81 = math.exp %80 : vector<2x256xf32>
    %cst_23 = arith.constant 1.000000e+00 : f32
    %82 = vector.broadcast %cst_23 : f32 to vector<2x256xf32>
    %83 = arith.addf %82, %81 : vector<2x256xf32>
    %84 = arith.divf %82, %83 : vector<2x256xf32>
    %85 = vector.extract_strided_slice %72 {offsets = [0, 512], sizes = [2, 256], strides = [1, 1]} : vector<2x1024xf32> to vector<2x256xf32>
    %86 = math.tanh %85 : vector<2x256xf32>
    %87 = vector.extract_strided_slice %72 {offsets = [0, 768], sizes = [2, 256], strides = [1, 1]} : vector<2x1024xf32> to vector<2x256xf32>
    %88 = arith.negf %87 : vector<2x256xf32>
    %89 = math.exp %88 : vector<2x256xf32>
    %cst_24 = arith.constant 1.000000e+00 : f32
    %90 = vector.broadcast %cst_24 : f32 to vector<2x256xf32>
    %91 = arith.addf %90, %89 : vector<2x256xf32>
    %92 = arith.divf %90, %91 : vector<2x256xf32>
    %93 = arith.mulf %84, %65 : vector<2x256xf32>
    %94 = arith.mulf %78, %86 : vector<2x256xf32>
    %95 = arith.addf %93, %94 : vector<2x256xf32>
    %96 = math.tanh %95 : vector<2x256xf32>
    %97 = arith.mulf %92, %96 : vector<2x256xf32>
    %98 = vector.extract_strided_slice %5 {offsets = [6, 0], sizes = [2, 1024], strides = [1, 1]} : vector<16x1024xf32> to vector<2x1024xf32>
    %99 = arith.truncf %97 : vector<2x256xf32> to vector<2x256xbf16>
    %c0_25 = arith.constant 0 : index
    %c0_26 = arith.constant 0 : index
    %100 = vector.load %arg3[%c0_25, %c0_26] : memref<256x1024xbf16, #tpu.memory_space<vmem>>, vector<256x1024xbf16>
    %cst_27 = arith.constant dense<0.000000e+00> : vector<2x1024xf32>
    %101 = tpu.matmul %99, %100, %cst_27 {dimension_numbers = #tpu.dot_dimension_numbers<[1], [0], [0], [1], [0, 0, 1, 1], [], []>} : vector<2x256xbf16>, vector<256x1024xbf16>, vector<2x1024xf32> -> vector<2x1024xf32>
    %102 = arith.addf %98, %101 : vector<2x1024xf32>
    %103 = vector.extract_strided_slice %102 {offsets = [0, 0], sizes = [2, 256], strides = [1, 1]} : vector<2x1024xf32> to vector<2x256xf32>
    %104 = arith.negf %103 : vector<2x256xf32>
    %105 = math.exp %104 : vector<2x256xf32>
    %cst_28 = arith.constant 1.000000e+00 : f32
    %106 = vector.broadcast %cst_28 : f32 to vector<2x256xf32>
    %107 = arith.addf %106, %105 : vector<2x256xf32>
    %108 = arith.divf %106, %107 : vector<2x256xf32>
    %109 = vector.extract_strided_slice %102 {offsets = [0, 256], sizes = [2, 256], strides = [1, 1]} : vector<2x1024xf32> to vector<2x256xf32>
    %110 = arith.negf %109 : vector<2x256xf32>
    %111 = math.exp %110 : vector<2x256xf32>
    %cst_29 = arith.constant 1.000000e+00 : f32
    %112 = vector.broadcast %cst_29 : f32 to vector<2x256xf32>
    %113 = arith.addf %112, %111 : vector<2x256xf32>
    %114 = arith.divf %112, %113 : vector<2x256xf32>
    %115 = vector.extract_strided_slice %102 {offsets = [0, 512], sizes = [2, 256], strides = [1, 1]} : vector<2x1024xf32> to vector<2x256xf32>
    %116 = math.tanh %115 : vector<2x256xf32>
    %117 = vector.extract_strided_slice %102 {offsets = [0, 768], sizes = [2, 256], strides = [1, 1]} : vector<2x1024xf32> to vector<2x256xf32>
    %118 = arith.negf %117 : vector<2x256xf32>
    %119 = math.exp %118 : vector<2x256xf32>
    %cst_30 = arith.constant 1.000000e+00 : f32
    %120 = vector.broadcast %cst_30 : f32 to vector<2x256xf32>
    %121 = arith.addf %120, %119 : vector<2x256xf32>
    %122 = arith.divf %120, %121 : vector<2x256xf32>
    %123 = arith.mulf %114, %95 : vector<2x256xf32>
    %124 = arith.mulf %108, %116 : vector<2x256xf32>
    %125 = arith.addf %123, %124 : vector<2x256xf32>
    %126 = math.tanh %125 : vector<2x256xf32>
    %127 = arith.mulf %122, %126 : vector<2x256xf32>
    %128 = vector.extract_strided_slice %5 {offsets = [8, 0], sizes = [2, 1024], strides = [1, 1]} : vector<16x1024xf32> to vector<2x1024xf32>
    %129 = arith.truncf %127 : vector<2x256xf32> to vector<2x256xbf16>
    %c0_31 = arith.constant 0 : index
    %c0_32 = arith.constant 0 : index
    %130 = vector.load %arg3[%c0_31, %c0_32] : memref<256x1024xbf16, #tpu.memory_space<vmem>>, vector<256x1024xbf16>
    %cst_33 = arith.constant dense<0.000000e+00> : vector<2x1024xf32>
    %131 = tpu.matmul %129, %130, %cst_33 {dimension_numbers = #tpu.dot_dimension_numbers<[1], [0], [0], [1], [0, 0, 1, 1], [], []>} : vector<2x256xbf16>, vector<256x1024xbf16>, vector<2x1024xf32> -> vector<2x1024xf32>
    %132 = arith.addf %128, %131 : vector<2x1024xf32>
    %133 = vector.extract_strided_slice %132 {offsets = [0, 0], sizes = [2, 256], strides = [1, 1]} : vector<2x1024xf32> to vector<2x256xf32>
    %134 = arith.negf %133 : vector<2x256xf32>
    %135 = math.exp %134 : vector<2x256xf32>
    %cst_34 = arith.constant 1.000000e+00 : f32
    %136 = vector.broadcast %cst_34 : f32 to vector<2x256xf32>
    %137 = arith.addf %136, %135 : vector<2x256xf32>
    %138 = arith.divf %136, %137 : vector<2x256xf32>
    %139 = vector.extract_strided_slice %132 {offsets = [0, 256], sizes = [2, 256], strides = [1, 1]} : vector<2x1024xf32> to vector<2x256xf32>
    %140 = arith.negf %139 : vector<2x256xf32>
    %141 = math.exp %140 : vector<2x256xf32>
    %cst_35 = arith.constant 1.000000e+00 : f32
    %142 = vector.broadcast %cst_35 : f32 to vector<2x256xf32>
    %143 = arith.addf %142, %141 : vector<2x256xf32>
    %144 = arith.divf %142, %143 : vector<2x256xf32>
    %145 = vector.extract_strided_slice %132 {offsets = [0, 512], sizes = [2, 256], strides = [1, 1]} : vector<2x1024xf32> to vector<2x256xf32>
    %146 = math.tanh %145 : vector<2x256xf32>
    %147 = vector.extract_strided_slice %132 {offsets = [0, 768], sizes = [2, 256], strides = [1, 1]} : vector<2x1024xf32> to vector<2x256xf32>
    %148 = arith.negf %147 : vector<2x256xf32>
    %149 = math.exp %148 : vector<2x256xf32>
    %cst_36 = arith.constant 1.000000e+00 : f32
    %150 = vector.broadcast %cst_36 : f32 to vector<2x256xf32>
    %151 = arith.addf %150, %149 : vector<2x256xf32>
    %152 = arith.divf %150, %151 : vector<2x256xf32>
    %153 = arith.mulf %144, %125 : vector<2x256xf32>
    %154 = arith.mulf %138, %146 : vector<2x256xf32>
    %155 = arith.addf %153, %154 : vector<2x256xf32>
    %156 = math.tanh %155 : vector<2x256xf32>
    %157 = arith.mulf %152, %156 : vector<2x256xf32>
    %158 = vector.extract_strided_slice %5 {offsets = [10, 0], sizes = [2, 1024], strides = [1, 1]} : vector<16x1024xf32> to vector<2x1024xf32>
    %159 = arith.truncf %157 : vector<2x256xf32> to vector<2x256xbf16>
    %c0_37 = arith.constant 0 : index
    %c0_38 = arith.constant 0 : index
    %160 = vector.load %arg3[%c0_37, %c0_38] : memref<256x1024xbf16, #tpu.memory_space<vmem>>, vector<256x1024xbf16>
    %cst_39 = arith.constant dense<0.000000e+00> : vector<2x1024xf32>
    %161 = tpu.matmul %159, %160, %cst_39 {dimension_numbers = #tpu.dot_dimension_numbers<[1], [0], [0], [1], [0, 0, 1, 1], [], []>} : vector<2x256xbf16>, vector<256x1024xbf16>, vector<2x1024xf32> -> vector<2x1024xf32>
    %162 = arith.addf %158, %161 : vector<2x1024xf32>
    %163 = vector.extract_strided_slice %162 {offsets = [0, 0], sizes = [2, 256], strides = [1, 1]} : vector<2x1024xf32> to vector<2x256xf32>
    %164 = arith.negf %163 : vector<2x256xf32>
    %165 = math.exp %164 : vector<2x256xf32>
    %cst_40 = arith.constant 1.000000e+00 : f32
    %166 = vector.broadcast %cst_40 : f32 to vector<2x256xf32>
    %167 = arith.addf %166, %165 : vector<2x256xf32>
    %168 = arith.divf %166, %167 : vector<2x256xf32>
    %169 = vector.extract_strided_slice %162 {offsets = [0, 256], sizes = [2, 256], strides = [1, 1]} : vector<2x1024xf32> to vector<2x256xf32>
    %170 = arith.negf %169 : vector<2x256xf32>
    %171 = math.exp %170 : vector<2x256xf32>
    %cst_41 = arith.constant 1.000000e+00 : f32
    %172 = vector.broadcast %cst_41 : f32 to vector<2x256xf32>
    %173 = arith.addf %172, %171 : vector<2x256xf32>
    %174 = arith.divf %172, %173 : vector<2x256xf32>
    %175 = vector.extract_strided_slice %162 {offsets = [0, 512], sizes = [2, 256], strides = [1, 1]} : vector<2x1024xf32> to vector<2x256xf32>
    %176 = math.tanh %175 : vector<2x256xf32>
    %177 = vector.extract_strided_slice %162 {offsets = [0, 768], sizes = [2, 256], strides = [1, 1]} : vector<2x1024xf32> to vector<2x256xf32>
    %178 = arith.negf %177 : vector<2x256xf32>
    %179 = math.exp %178 : vector<2x256xf32>
    %cst_42 = arith.constant 1.000000e+00 : f32
    %180 = vector.broadcast %cst_42 : f32 to vector<2x256xf32>
    %181 = arith.addf %180, %179 : vector<2x256xf32>
    %182 = arith.divf %180, %181 : vector<2x256xf32>
    %183 = arith.mulf %174, %155 : vector<2x256xf32>
    %184 = arith.mulf %168, %176 : vector<2x256xf32>
    %185 = arith.addf %183, %184 : vector<2x256xf32>
    %186 = math.tanh %185 : vector<2x256xf32>
    %187 = arith.mulf %182, %186 : vector<2x256xf32>
    %188 = vector.extract_strided_slice %5 {offsets = [12, 0], sizes = [2, 1024], strides = [1, 1]} : vector<16x1024xf32> to vector<2x1024xf32>
    %189 = arith.truncf %187 : vector<2x256xf32> to vector<2x256xbf16>
    %c0_43 = arith.constant 0 : index
    %c0_44 = arith.constant 0 : index
    %190 = vector.load %arg3[%c0_43, %c0_44] : memref<256x1024xbf16, #tpu.memory_space<vmem>>, vector<256x1024xbf16>
    %cst_45 = arith.constant dense<0.000000e+00> : vector<2x1024xf32>
    %191 = tpu.matmul %189, %190, %cst_45 {dimension_numbers = #tpu.dot_dimension_numbers<[1], [0], [0], [1], [0, 0, 1, 1], [], []>} : vector<2x256xbf16>, vector<256x1024xbf16>, vector<2x1024xf32> -> vector<2x1024xf32>
    %192 = arith.addf %188, %191 : vector<2x1024xf32>
    %193 = vector.extract_strided_slice %192 {offsets = [0, 0], sizes = [2, 256], strides = [1, 1]} : vector<2x1024xf32> to vector<2x256xf32>
    %194 = arith.negf %193 : vector<2x256xf32>
    %195 = math.exp %194 : vector<2x256xf32>
    %cst_46 = arith.constant 1.000000e+00 : f32
    %196 = vector.broadcast %cst_46 : f32 to vector<2x256xf32>
    %197 = arith.addf %196, %195 : vector<2x256xf32>
    %198 = arith.divf %196, %197 : vector<2x256xf32>
    %199 = vector.extract_strided_slice %192 {offsets = [0, 256], sizes = [2, 256], strides = [1, 1]} : vector<2x1024xf32> to vector<2x256xf32>
    %200 = arith.negf %199 : vector<2x256xf32>
    %201 = math.exp %200 : vector<2x256xf32>
    %cst_47 = arith.constant 1.000000e+00 : f32
    %202 = vector.broadcast %cst_47 : f32 to vector<2x256xf32>
    %203 = arith.addf %202, %201 : vector<2x256xf32>
    %204 = arith.divf %202, %203 : vector<2x256xf32>
    %205 = vector.extract_strided_slice %192 {offsets = [0, 512], sizes = [2, 256], strides = [1, 1]} : vector<2x1024xf32> to vector<2x256xf32>
    %206 = math.tanh %205 : vector<2x256xf32>
    %207 = vector.extract_strided_slice %192 {offsets = [0, 768], sizes = [2, 256], strides = [1, 1]} : vector<2x1024xf32> to vector<2x256xf32>
    %208 = arith.negf %207 : vector<2x256xf32>
    %209 = math.exp %208 : vector<2x256xf32>
    %cst_48 = arith.constant 1.000000e+00 : f32
    %210 = vector.broadcast %cst_48 : f32 to vector<2x256xf32>
    %211 = arith.addf %210, %209 : vector<2x256xf32>
    %212 = arith.divf %210, %211 : vector<2x256xf32>
    %213 = arith.mulf %204, %185 : vector<2x256xf32>
    %214 = arith.mulf %198, %206 : vector<2x256xf32>
    %215 = arith.addf %213, %214 : vector<2x256xf32>
    %216 = math.tanh %215 : vector<2x256xf32>
    %217 = arith.mulf %212, %216 : vector<2x256xf32>
    %218 = vector.extract_strided_slice %5 {offsets = [14, 0], sizes = [2, 1024], strides = [1, 1]} : vector<16x1024xf32> to vector<2x1024xf32>
    %219 = arith.truncf %217 : vector<2x256xf32> to vector<2x256xbf16>
    %c0_49 = arith.constant 0 : index
    %c0_50 = arith.constant 0 : index
    %220 = vector.load %arg3[%c0_49, %c0_50] : memref<256x1024xbf16, #tpu.memory_space<vmem>>, vector<256x1024xbf16>
    %cst_51 = arith.constant dense<0.000000e+00> : vector<2x1024xf32>
    %221 = tpu.matmul %219, %220, %cst_51 {dimension_numbers = #tpu.dot_dimension_numbers<[1], [0], [0], [1], [0, 0, 1, 1], [], []>} : vector<2x256xbf16>, vector<256x1024xbf16>, vector<2x1024xf32> -> vector<2x1024xf32>
    %222 = arith.addf %218, %221 : vector<2x1024xf32>
    %223 = vector.extract_strided_slice %222 {offsets = [0, 0], sizes = [2, 256], strides = [1, 1]} : vector<2x1024xf32> to vector<2x256xf32>
    %224 = arith.negf %223 : vector<2x256xf32>
    %225 = math.exp %224 : vector<2x256xf32>
    %cst_52 = arith.constant 1.000000e+00 : f32
    %226 = vector.broadcast %cst_52 : f32 to vector<2x256xf32>
    %227 = arith.addf %226, %225 : vector<2x256xf32>
    %228 = arith.divf %226, %227 : vector<2x256xf32>
    %229 = vector.extract_strided_slice %222 {offsets = [0, 256], sizes = [2, 256], strides = [1, 1]} : vector<2x1024xf32> to vector<2x256xf32>
    %230 = arith.negf %229 : vector<2x256xf32>
    %231 = math.exp %230 : vector<2x256xf32>
    %cst_53 = arith.constant 1.000000e+00 : f32
    %232 = vector.broadcast %cst_53 : f32 to vector<2x256xf32>
    %233 = arith.addf %232, %231 : vector<2x256xf32>
    %234 = arith.divf %232, %233 : vector<2x256xf32>
    %235 = vector.extract_strided_slice %222 {offsets = [0, 512], sizes = [2, 256], strides = [1, 1]} : vector<2x1024xf32> to vector<2x256xf32>
    %236 = math.tanh %235 : vector<2x256xf32>
    %237 = vector.extract_strided_slice %222 {offsets = [0, 768], sizes = [2, 256], strides = [1, 1]} : vector<2x1024xf32> to vector<2x256xf32>
    %238 = arith.negf %237 : vector<2x256xf32>
    %239 = math.exp %238 : vector<2x256xf32>
    %cst_54 = arith.constant 1.000000e+00 : f32
    %240 = vector.broadcast %cst_54 : f32 to vector<2x256xf32>
    %241 = arith.addf %240, %239 : vector<2x256xf32>
    %242 = arith.divf %240, %241 : vector<2x256xf32>
    %243 = arith.mulf %234, %215 : vector<2x256xf32>
    %244 = arith.mulf %228, %236 : vector<2x256xf32>
    %245 = arith.addf %243, %244 : vector<2x256xf32>
    %246 = math.tanh %245 : vector<2x256xf32>
    %247 = arith.mulf %242, %246 : vector<2x256xf32>
    %248 = tpu.concatenate %37, %67, %97, %127, %157, %187, %217, %247 in 0 : vector<2x256xf32>, vector<2x256xf32>, vector<2x256xf32>, vector<2x256xf32>, vector<2x256xf32>, vector<2x256xf32>, vector<2x256xf32>, vector<2x256xf32> -> vector<16x256xf32>
    %249 = arith.truncf %248 : vector<16x256xf32> to vector<16x256xbf16>
    %c0_55 = arith.constant 0 : index
    %c0_56 = arith.constant 0 : index
    %250 = vector.load %arg5[%c0_55, %c0_56] : memref<256x128xbf16, #tpu.memory_space<vmem>>, vector<256x128xbf16>
    %cst_57 = arith.constant dense<0.000000e+00> : vector<16x128xf32>
    %251 = tpu.matmul %249, %250, %cst_57 {dimension_numbers = #tpu.dot_dimension_numbers<[1], [0], [0], [1], [0, 0, 1, 1], [], []>} : vector<16x256xbf16>, vector<256x128xbf16>, vector<16x128xf32> -> vector<16x128xf32>
    %c0_58 = arith.constant 0 : index
    %c0_59 = arith.constant 0 : index
    %252 = vector.load %arg6[%c0_58, %c0_59] : memref<1x128xf32, #tpu.memory_space<vmem>>, vector<1x128xf32>
    %253 = vector.broadcast %252 : vector<1x128xf32> to vector<16x128xf32>
    %254 = arith.addf %251, %253 : vector<16x128xf32>
    %c0_60 = arith.constant 0 : index
    %c0_61 = arith.constant 0 : index
    %255 = vector.load %arg7[%c0_60, %c0_61] : memref<16x128xf32, #tpu.memory_space<vmem>>, vector<16x128xf32>
    tpu.vector_store %arg7[%c0_60, %c0_61], %254 {strides = array<i32>} : memref<16x128xf32, #tpu.memory_space<vmem>>, vector<16x128xf32>,
    return
  }
  func.func @transform_0(%arg0: i32) -> (i32, i32) {
    %c0_i32 = arith.constant 0 : i32
    %c0_i32_0 = arith.constant 0 : i32
    %c0_i32_1 = arith.constant 0 : i32
    return %c0_i32, %c0_i32_0 : i32, i32
  }
  func.func @transform_1(%arg0: i32) -> (i32, i32) {
    %c0_i32 = arith.constant 0 : i32
    %c0_i32_0 = arith.constant 0 : i32
    %c0_i32_1 = arith.constant 0 : i32
    return %c0_i32, %c0_i32_0 : i32, i32
  }
  func.func @transform_2(%arg0: i32) -> (i32, i32) {
    %c0_i32 = arith.constant 0 : i32
    %c0_i32_0 = arith.constant 0 : i32
    %c0_i32_1 = arith.constant 0 : i32
    return %c0_i32, %c0_i32_0 : i32, i32
  }
  func.func @transform_3(%arg0: i32) -> (i32, i32) {
    %c0_i32 = arith.constant 0 : i32
    %c0_i32_0 = arith.constant 0 : i32
    %c0_i32_1 = arith.constant 0 : i32
    return %c0_i32, %c0_i32_0 : i32, i32
  }
  func.func @transform_4(%arg0: i32) -> (i32, i32) {
    %c0_i32 = arith.constant 0 : i32
    %c0_i32_0 = arith.constant 0 : i32
    %c0_i32_1 = arith.constant 0 : i32
    return %c0_i32, %c0_i32_0 : i32, i32
  }
  func.func @transform_5(%arg0: i32) -> (i32, i32) {
    %c0_i32 = arith.constant 0 : i32
    %c0_i32_0 = arith.constant 0 : i32
    %c0_i32_1 = arith.constant 0 : i32
    return %c0_i32, %c0_i32_0 : i32, i32
  }
  func.func @transform_6(%arg0: i32) -> (i32, i32) {
    %c0_i32 = arith.constant 0 : i32
    %c0_i32_0 = arith.constant 0 : i32
    %c0_i32_1 = arith.constant 0 : i32
    return %c0_i32, %c0_i32_0 : i32, i32
  }
}

module attributes {stable_mosaic.version = 11 : i64} {
  func.func @_feature_net_kernel(%arg0: i32, %arg1: memref<144x72xbf16, #tpu.memory_space<vmem>>, %arg2: memref<8x142xbf16, #tpu.memory_space<vmem>>, %arg3: memref<3x72x256xbf16, #tpu.memory_space<vmem>>, %arg4: memref<1x256xf32, #tpu.memory_space<vmem>>, %arg5: memref<256x128xbf16, #tpu.memory_space<vmem>>, %arg6: memref<1x128xf32, #tpu.memory_space<vmem>>, %arg7: memref<8x128xf32, #tpu.memory_space<vmem>>) attributes {dimension_semantics = [#tpu.dimension_semantics<parallel>], iteration_bounds = array<i64: 2>, scalar_prefetch = 0 : i64, scratch_operands = 0 : i64, tpu.core_type = #tpu.core_type<tc>, window_params = [{transform_indices = @transform_0, window_bounds = array<i64: 144, 72>}, {pipeline_mode = #tpu.pipeline_mode<synchronous>, transform_indices = @transform_1, window_bounds = array<i64: 8, 142>}, {pipeline_mode = #tpu.pipeline_mode<synchronous>, transform_indices = @transform_2, window_bounds = array<i64: 3, 72, 256>}, {pipeline_mode = #tpu.pipeline_mode<synchronous>, transform_indices = @transform_3, window_bounds = array<i64: 1, 256>}, {pipeline_mode = #tpu.pipeline_mode<synchronous>, transform_indices = @transform_4, window_bounds = array<i64: 256, 128>}, {pipeline_mode = #tpu.pipeline_mode<synchronous>, transform_indices = @transform_5, window_bounds = array<i64: 1, 128>}, {transform_indices = @transform_6, window_bounds = array<i64: 8, 128>}]} {
    %c0 = arith.constant 0 : index
    %c0_0 = arith.constant 0 : index
    %0 = vector.load %arg1[%c0, %c0_0] : memref<144x72xbf16, #tpu.memory_space<vmem>>, vector<144x72xbf16>
    %1 = vector.extract_strided_slice %0 {offsets = [0, 0], sizes = [142, 72], strides = [1, 1]} : vector<144x72xbf16> to vector<142x72xbf16>
    %c0_1 = arith.constant 0 : index
    %c0_2 = arith.constant 0 : index
    %c0_3 = arith.constant 0 : index
    %2 = vector.load %arg3[%c0_1, %c0_2, %c0_3] : memref<3x72x256xbf16, #tpu.memory_space<vmem>>, vector<1x72x256xbf16>
    %3 = vector.shape_cast %2 : vector<1x72x256xbf16> to vector<72x256xbf16>
    %cst = arith.constant dense<0.000000e+00> : vector<142x256xf32>
    %4 = tpu.matmul %1, %3, %cst {dimension_numbers = #tpu.dot_dimension_numbers<[1], [0], [0], [1], [0, 0, 1, 1], [], []>} : vector<142x72xbf16>, vector<72x256xbf16>, vector<142x256xf32> -> vector<142x256xf32>
    %5 = vector.extract_strided_slice %0 {offsets = [1, 0], sizes = [142, 72], strides = [1, 1]} : vector<144x72xbf16> to vector<142x72xbf16>
    %c1 = arith.constant 1 : index
    %c0_4 = arith.constant 0 : index
    %c0_5 = arith.constant 0 : index
    %6 = vector.load %arg3[%c1, %c0_4, %c0_5] : memref<3x72x256xbf16, #tpu.memory_space<vmem>>, vector<1x72x256xbf16>
    %7 = vector.shape_cast %6 : vector<1x72x256xbf16> to vector<72x256xbf16>
    %cst_6 = arith.constant dense<0.000000e+00> : vector<142x256xf32>
    %8 = tpu.matmul %5, %7, %cst_6 {dimension_numbers = #tpu.dot_dimension_numbers<[1], [0], [0], [1], [0, 0, 1, 1], [], []>} : vector<142x72xbf16>, vector<72x256xbf16>, vector<142x256xf32> -> vector<142x256xf32>
    %9 = arith.addf %4, %8 : vector<142x256xf32>
    %10 = vector.extract_strided_slice %0 {offsets = [2, 0], sizes = [142, 72], strides = [1, 1]} : vector<144x72xbf16> to vector<142x72xbf16>
    %c2 = arith.constant 2 : index
    %c0_7 = arith.constant 0 : index
    %c0_8 = arith.constant 0 : index
    %11 = vector.load %arg3[%c2, %c0_7, %c0_8] : memref<3x72x256xbf16, #tpu.memory_space<vmem>>, vector<1x72x256xbf16>
    %12 = vector.shape_cast %11 : vector<1x72x256xbf16> to vector<72x256xbf16>
    %cst_9 = arith.constant dense<0.000000e+00> : vector<142x256xf32>
    %13 = tpu.matmul %10, %12, %cst_9 {dimension_numbers = #tpu.dot_dimension_numbers<[1], [0], [0], [1], [0, 0, 1, 1], [], []>} : vector<142x72xbf16>, vector<72x256xbf16>, vector<142x256xf32> -> vector<142x256xf32>
    %14 = arith.addf %9, %13 : vector<142x256xf32>
    %c0_10 = arith.constant 0 : index
    %c0_11 = arith.constant 0 : index
    %15 = vector.load %arg4[%c0_10, %c0_11] : memref<1x256xf32, #tpu.memory_space<vmem>>, vector<1x256xf32>
    %16 = vector.broadcast %15 : vector<1x256xf32> to vector<142x256xf32>
    %17 = arith.addf %14, %16 : vector<142x256xf32>
    %cst_12 = arith.constant 0.000000e+00 : f32
    %18 = vector.broadcast %cst_12 : f32 to vector<142x256xf32>
    %19 = arith.maximumf %17, %18 : vector<142x256xf32>
    %c0_13 = arith.constant 0 : index
    %c0_14 = arith.constant 0 : index
    %20 = vector.load %arg2[%c0_13, %c0_14] : memref<8x142xbf16, #tpu.memory_space<vmem>>, vector<8x142xbf16>
    %21 = arith.truncf %19 : vector<142x256xf32> to vector<142x256xbf16>
    %cst_15 = arith.constant dense<0.000000e+00> : vector<8x256xf32>
    %22 = tpu.matmul %20, %21, %cst_15 {dimension_numbers = #tpu.dot_dimension_numbers<[1], [0], [0], [1], [0, 0, 1, 1], [], []>} : vector<8x142xbf16>, vector<142x256xbf16>, vector<8x256xf32> -> vector<8x256xf32>
    %23 = arith.truncf %22 : vector<8x256xf32> to vector<8x256xbf16>
    %c0_16 = arith.constant 0 : index
    %c0_17 = arith.constant 0 : index
    %24 = vector.load %arg5[%c0_16, %c0_17] : memref<256x128xbf16, #tpu.memory_space<vmem>>, vector<256x128xbf16>
    %cst_18 = arith.constant dense<0.000000e+00> : vector<8x128xf32>
    %25 = tpu.matmul %23, %24, %cst_18 {dimension_numbers = #tpu.dot_dimension_numbers<[1], [0], [0], [1], [0, 0, 1, 1], [], []>} : vector<8x256xbf16>, vector<256x128xbf16>, vector<8x128xf32> -> vector<8x128xf32>
    %c0_19 = arith.constant 0 : index
    %c0_20 = arith.constant 0 : index
    %26 = vector.load %arg6[%c0_19, %c0_20] : memref<1x128xf32, #tpu.memory_space<vmem>>, vector<1x128xf32>
    %27 = vector.broadcast %26 : vector<1x128xf32> to vector<8x128xf32>
    %28 = arith.addf %25, %27 : vector<8x128xf32>
    %c0_21 = arith.constant 0 : index
    %c0_22 = arith.constant 0 : index
    %29 = vector.load %arg7[%c0_21, %c0_22] : memref<8x128xf32, #tpu.memory_space<vmem>>, vector<8x128xf32>
    tpu.vector_store %arg7[%c0_21, %c0_22], %28 {strides = array<i32>} : memref<8x128xf32, #tpu.memory_space<vmem>>, vector<8x128xf32>,
    return
  }
  func.func @transform_0(%arg0: i32) -> (i32, i32) {
    %c0_i32 = arith.constant 0 : i32
    %c0_i32_0 = arith.constant 0 : i32
    return %arg0, %c0_i32 : i32, i32
  }
  func.func @transform_1(%arg0: i32) -> (i32, i32) {
    %c0_i32 = arith.constant 0 : i32
    %c0_i32_0 = arith.constant 0 : i32
    %c0_i32_1 = arith.constant 0 : i32
    return %c0_i32, %c0_i32_0 : i32, i32
  }
  func.func @transform_2(%arg0: i32) -> (i32, i32, i32) {
    %c0_i32 = arith.constant 0 : i32
    %c0_i32_0 = arith.constant 0 : i32
    %c0_i32_1 = arith.constant 0 : i32
    %c0_i32_2 = arith.constant 0 : i32
    return %c0_i32, %c0_i32_0, %c0_i32_1 : i32, i32, i32
  }
  func.func @transform_3(%arg0: i32) -> (i32, i32) {
    %c0_i32 = arith.constant 0 : i32
    %c0_i32_0 = arith.constant 0 : i32
    %c0_i32_1 = arith.constant 0 : i32
    return %c0_i32, %c0_i32_0 : i32, i32
  }
  func.func @transform_4(%arg0: i32) -> (i32, i32) {
    %c0_i32 = arith.constant 0 : i32
    %c0_i32_0 = arith.constant 0 : i32
    %c0_i32_1 = arith.constant 0 : i32
    return %c0_i32, %c0_i32_0 : i32, i32
  }
  func.func @transform_5(%arg0: i32) -> (i32, i32) {
    %c0_i32 = arith.constant 0 : i32
    %c0_i32_0 = arith.constant 0 : i32
    %c0_i32_1 = arith.constant 0 : i32
    return %c0_i32, %c0_i32_0 : i32, i32
  }
  func.func @transform_6(%arg0: i32) -> (i32, i32) {
    %c0_i32 = arith.constant 0 : i32
    %c0_i32_0 = arith.constant 0 : i32
    return %arg0, %c0_i32 : i32, i32
  }
}

</mosaic_0001>

<llo_original>
// kernel: temporal_cnn_forward.2
$region0: #{temporal_cnn_forward.2}
  #allocation0 [shape = 'u32[]', space=smem, size = 0x4, offset = 0x4, fixed_abs, tag = 'smem constant byte address 0x4 - core index']
  #allocation1 [shape = 'u32[144,128]{1,0:T(1,128)}', space=vmem, size = 0x12000, scoped, tag = 'internal scratch']
  %s0 = inlined_call_operand.vmem [shape: bf16[288,72], index: 0, kind: input, shape index: {}]
  %s1 = inlined_call_operand.vmem [shape: bf16[8,142], index: 1, kind: input, shape index: {}]
  %s2 = inlined_call_operand.vmem [shape: bf16[3,72,256], index: 2, kind: input, shape index: {}]
  %s3 = inlined_call_operand.vmem [shape: f32[1,256], index: 3, kind: input, shape index: {}]
  %s4 = inlined_call_operand.vmem [shape: bf16[256,128], index: 4, kind: input, shape index: {}]
  %s5 = inlined_call_operand.vmem [shape: f32[1,128], index: 5, kind: input, shape index: {}]
  %s6 = inlined_call_operand.vmem [shape: f32[16,128], index: 6, kind: output, shape index: {}]
  %s7 = sld [smem:[#allocation0]]
  $region57: #{temporal_cnn_forward.2} parent=0
    _
  %s9 = ssub.s32 1, %s7
  %s10 = scalar_select 0, %s9, %s7
  loop: start=0, step=1, limit=4
  $region2: #{temporal_cnn_forward.2} parent=0 // loop_pre_header
    _
  $region3: #{temporal_cnn_forward.2} parent=0 // loop_header
    %s12 = sphi 0, %s16
    %p13 = scmp.ge.s32.totalorder %s12, 4
    %s22 = sphi 0, %s24
    %s25 = sphi 0, %s22
    %s26 = sphi 0, %s25
    %s42 = sphi 0, %s26
    %s46 = sphi 0, %s46
    %s48 = sphi 0, %s46
    %s49 = sphi 0, %s48
    %s63 = sphi 0, %s49
    %s67 = sphi 0, %s67
    %s69 = sphi 0, %s67
    %s70 = sphi 0, %s69
    %s84 = sphi 0, %s70
    %s88 = sphi 0, %s88
    %s90 = sphi 0, %s88
    %s91 = sphi 0, %s90
    %s105 = sphi 0, %s91
    %s109 = sphi 0, %s109
    %s111 = sphi 0, %s109
    %s112 = sphi 0, %s111
    %s126 = sphi 0, %s112
    %s130 = sphi 0, %s130
    %s132 = sphi 0, %s130
    %s133 = sphi 0, %s132
    %s147 = sphi 0, %s133
    %s153 = sphi 0, %s155
    %s156 = sphi 0, %s153
    %s157 = sphi 0, %s156
    %s173 = sphi 0, %s157
  $region4: #{temporal_cnn_forward.2} parent=0 // loop_header_branch
    %15 = sbr.rel (%p13) target = $region8
  $region5: #{temporal_cnn_forward.2} parent=0 // loop_body
    %s17 = ssub.s32 %s12, 1
    %s18 = ssub.s32 %s12, 2
    %s19 = sadd.s32 %s12, 1
    %s20 = ssub.s32 %s12, %s19
    %p21 = scmp.eq.s32.totalorder %s20, 0
    %s23 = sadd.s32 %s22, 1
    %s24 = scalar_select %p21, %s22, %s23
    %p27 = pneg %p21
    %p28 = scmp.eq.s32.totalorder %s12, 1
    %p29 = por %p27, %p28
    %p30 = scmp.ne.s32.totalorder %s22, %s25
    %p31 = scmp.eq.s32.totalorder %s12, 0
    %p32 = por %p30, %p31
    %p33 = scmp.ne.s32.totalorder %s22, %s25
    %p34 = scmp.eq.s32.totalorder %s17, 1
    %p35 = por %p33, %p34
    %p36 = scmp.ne.s32.totalorder %s25, %s26
    %p37 = scmp.eq.s32.totalorder %s17, 0
    %p38 = por %p36, %p37
    %p39 = scmp.ne.s32.totalorder %s25, %s26
    %p40 = scmp.eq.s32.totalorder %s18, 1
    %p41 = por %p39, %p40
    %p43 = scmp.ne.s32.totalorder %s26, %s42
    %p44 = scmp.eq.s32.totalorder %s18, 0
    %p45 = por %p43, %p44
    %s47 = sadd.s32 %s46, 1
    %p50 = scmp.eq.s32.totalorder %s12, 1
    %p51 = scmp.ne.s32.totalorder %s46, %s48
    %p52 = scmp.eq.s32.totalorder %s12, 0
    %p53 = por %p51, %p52
    %p54 = scmp.ne.s32.totalorder %s46, %s48
    %p55 = scmp.eq.s32.totalorder %s17, 1
    %p56 = por %p54, %p55
    %p57 = scmp.ne.s32.totalorder %s48, %s49
    %p58 = scmp.eq.s32.totalorder %s17, 0
    %p59 = por %p57, %p58
    %p60 = scmp.ne.s32.totalorder %s48, %s49
    %p61 = scmp.eq.s32.totalorder %s18, 1
    %p62 = por %p60, %p61
    %p64 = scmp.ne.s32.totalorder %s49, %s63
    %p65 = scmp.eq.s32.totalorder %s18, 0
    %p66 = por %p64, %p65
    %s68 = sadd.s32 %s67, 1
    %p71 = scmp.eq.s32.totalorder %s12, 1
    %p72 = scmp.ne.s32.totalorder %s67, %s69
    %p73 = scmp.eq.s32.totalorder %s12, 0
    %p74 = por %p72, %p73
    %p75 = scmp.ne.s32.totalorder %s67, %s69
    %p76 = scmp.eq.s32.totalorder %s17, 1
    %p77 = por %p75, %p76
    %p78 = scmp.ne.s32.totalorder %s69, %s70
    %p79 = scmp.eq.s32.totalorder %s17, 0
    %p80 = por %p78, %p79
    %p81 = scmp.ne.s32.totalorder %s69, %s70
    %p82 = scmp.eq.s32.totalorder %s18, 1
    %p83 = por %p81, %p82
    %p85 = scmp.ne.s32.totalorder %s70, %s84
    %p86 = scmp.eq.s32.totalorder %s18, 0
    %p87 = por %p85, %p86
    %s89 = sadd.s32 %s88, 1
    %p92 = scmp.eq.s32.totalorder %s12, 1
    %p93 = scmp.ne.s32.totalorder %s88, %s90
    %p94 = scmp.eq.s32.totalorder %s12, 0
    %p95 = por %p93, %p94
    %p96 = scmp.ne.s32.totalorder %s88, %s90
    %p97 = scmp.eq.s32.totalorder %s17, 1
    %p98 = por %p96, %p97
    %p99 = scmp.ne.s32.totalorder %s90, %s91
    %p100 = scmp.eq.s32.totalorder %s17, 0
    %p101 = por %p99, %p100
    %p102 = scmp.ne.s32.totalorder %s90, %s91
    %p103 = scmp.eq.s32.totalorder %s18, 1
    %p104 = por %p102, %p103
    %p106 = scmp.ne.s32.totalorder %s91, %s105
    %p107 = scmp.eq.s32.totalorder %s18, 0
    %p108 = por %p106, %p107
    %s110 = sadd.s32 %s109, 1
    %p113 = scmp.eq.s32.totalorder %s12, 1
    %p114 = scmp.ne.s32.totalorder %s109, %s111
    %p115 = scmp.eq.s32.totalorder %s12, 0
    %p116 = por %p114, %p115
    %p117 = scmp.ne.s32.totalorder %s109, %s111
    %p118 = scmp.eq.s32.totalorder %s17, 1
    %p119 = por %p117, %p118
    %p120 = scmp.ne.s32.totalorder %s111, %s112
    %p121 = scmp.eq.s32.totalorder %s17, 0
    %p122 = por %p120, %p121
    %p123 = scmp.ne.s32.totalorder %s111, %s112
    %p124 = scmp.eq.s32.totalorder %s18, 1
    %p125 = por %p123, %p124
    %p127 = scmp.ne.s32.totalorder %s112, %s126
    %p128 = scmp.eq.s32.totalorder %s18, 0
    %p129 = por %p127, %p128
    %s131 = sadd.s32 %s130, 1
    %p134 = scmp.eq.s32.totalorder %s12, 1
    %p135 = scmp.ne.s32.totalorder %s130, %s132
    %p136 = scmp.eq.s32.totalorder %s12, 0
    %p137 = por %p135, %p136
    %p138 = scmp.ne.s32.totalorder %s130, %s132
    %p139 = scmp.eq.s32.totalorder %s17, 1
    %p140 = por %p138, %p139
    %p141 = scmp.ne.s32.totalorder %s132, %s133
    %p142 = scmp.eq.s32.totalorder %s17, 0
    %p143 = por %p141, %p142
    %p144 = scmp.ne.s32.totalorder %s132, %s133
    %p145 = scmp.eq.s32.totalorder %s18, 1
    %p146 = por %p144, %p145
    %p148 = scmp.ne.s32.totalorder %s133, %s147
    %p149 = scmp.eq.s32.totalorder %s18, 0
    %p150 = por %p148, %p149
    %s151 = ssub.s32 %s12, %s19
    %p152 = scmp.eq.s32.totalorder %s151, 0
    %s154 = sadd.s32 %s153, 1
    %s155 = scalar_select %p152, %s153, %s154
    %p158 = pneg %p152
    %p159 = scmp.eq.s32.totalorder %s12, 1
    %p160 = por %p158, %p159
    %p161 = scmp.ne.s32.totalorder %s153, %s156
    %p162 = scmp.eq.s32.totalorder %s12, 0
    %p163 = por %p161, %p162
    %p164 = scmp.ne.s32.totalorder %s153, %s156
    %p165 = scmp.eq.s32.totalorder %s17, 1
    %p166 = por %p164, %p165
    %p167 = scmp.ne.s32.totalorder %s156, %s157
    %p168 = scmp.eq.s32.totalorder %s17, 0
    %p169 = por %p167, %p168
    %p170 = scmp.ne.s32.totalorder %s156, %s157
    %p171 = scmp.eq.s32.totalorder %s18, 1
    %p172 = por %p170, %p171
    %p174 = scmp.ne.s32.totalorder %s157, %s173
    %p175 = scmp.eq.s32.totalorder %s18, 0
    %p176 = por %p174, %p175
    %p177 = scmp.le.s32.totalorder 1, %s12
    %p178 = scmp.lt.s32.totalorder %s12, 3
    %p179 = pnand %p177, %p178
    %p180 = pneg %p179
    // Predicated region
    $region9: #{temporal_cnn_forward.2} parent=5 // pred_check
      _
    $region10: #{temporal_cnn_forward.2} parent=5 // pred_check_branch
      %182 = sbr.rel (%p179) target = $region12
    $region11: #{temporal_cnn_forward.2} parent=5 // pred_region
      %s183 = ssub.s32 %s12, 1
      // Predicated region
      $region13: #{temporal_cnn_forward.2} parent=11 // pred_check
        %p184 = pneg %p59
      $region14: #{temporal_cnn_forward.2} parent=11 // pred_check_branch
        %186 = sbr.rel (%p184) target = $region16
      $region15: #{temporal_cnn_forward.2} parent=11 // pred_region
        _
      $region16: #{temporal_cnn_forward.2} parent=11 // pred_fallthru
        _
      // Predicated region
      $region17: #{temporal_cnn_forward.2} parent=11 // pred_check
        %p187 = pneg %p80
      $region18: #{temporal_cnn_forward.2} parent=11 // pred_check_branch
        %189 = sbr.rel (%p187) target = $region20
      $region19: #{temporal_cnn_forward.2} parent=11 // pred_region
        _
      $region20: #{temporal_cnn_forward.2} parent=11 // pred_fallthru
        _
      // Predicated region
      $region21: #{temporal_cnn_forward.2} parent=11 // pred_check
        %p190 = pneg %p101
      $region22: #{temporal_cnn_forward.2} parent=11 // pred_check_branch
        %192 = sbr.rel (%p190) target = $region24
      $region23: #{temporal_cnn_forward.2} parent=11 // pred_region
        _
      $region24: #{temporal_cnn_forward.2} parent=11 // pred_fallthru
        _
      // Predicated region
      $region25: #{temporal_cnn_forward.2} parent=11 // pred_check
        %p193 = pneg %p122
      $region26: #{temporal_cnn_forward.2} parent=11 // pred_check_branch
        %195 = sbr.rel (%p193) target = $region28
      $region27: #{temporal_cnn_forward.2} parent=11 // pred_region
        _
      $region28: #{temporal_cnn_forward.2} parent=11 // pred_fallthru
        _
      // Predicated region
      $region29: #{temporal_cnn_forward.2} parent=11 // pred_check
        %p196 = pneg %p143
      $region30: #{temporal_cnn_forward.2} parent=11 // pred_check_branch
        %198 = sbr.rel (%p196) target = $region32
      $region31: #{temporal_cnn_forward.2} parent=11 // pred_region
        _
      $region32: #{temporal_cnn_forward.2} parent=11 // pred_fallthru
        _
    $region12: #{temporal_cnn_forward.2} parent=5 // pred_fallthru
      _
    %p199 = scmp.lt.s32.totalorder %s12, 2
    // Predicated region
    $region33: #{temporal_cnn_forward.2} parent=5 // pred_check
      %p200 = pneg %p199
    $region34: #{temporal_cnn_forward.2} parent=5 // pred_check_branch
      %202 = sbr.rel (%p200) target = $region36
    $region35: #{temporal_cnn_forward.2} parent=5 // pred_region
      // Predicated region
      $region37: #{temporal_cnn_forward.2} parent=35 // pred_check
        %p203 = pneg %p32
      $region38: #{temporal_cnn_forward.2} parent=35 // pred_check_branch
        %205 = sbr.rel (%p203) target = $region40
      $region39: #{temporal_cnn_forward.2} parent=35 // pred_region
        %s206 = smul.u32 18, %s12
        %p207 = scmp.lt.s32.totalorder %s206, 35
        %s208 = scalar_select %p207, %s206, 35
        %s209 = smul.addr %s208, 4
        %s210 = scalar_lea.vmem %s0, %s209
        %s211 = smul.u32 18, %s12
      $region40: #{temporal_cnn_forward.2} parent=35 // pred_fallthru
        _
    $region36: #{temporal_cnn_forward.2} parent=5 // pred_fallthru
      _
    %p212 = scmp.le.s32.totalorder 1, %s12
    %p213 = scmp.lt.s32.totalorder %s12, 3
    %p214 = pnand %p212, %p213
    %p215 = pneg %p214
    // Predicated region
    $region41: #{temporal_cnn_forward.2} parent=5 // pred_check
      _
    $region42: #{temporal_cnn_forward.2} parent=5 // pred_check_branch
      %217 = sbr.rel (%p214) target = $region44
    $region43: #{temporal_cnn_forward.2} parent=5 // pred_region
      %s218 = ssub.s32 %s12, 1
      %s219 = smul.u32 18, %s17
      %p220 = scmp.lt.s32.totalorder %s219, 35
      %s221 = scalar_select %p220, %s219, 35
      %s222 = smul.addr %s221, 4
      %s223 = scalar_lea.vmem %s0, %s222
      %p224 = pneg %p38
      %p225 = pneg %p35
      %p226 = pneg %p59
      %p227 = pneg %p56
      %p228 = pneg %p80
      %p229 = pneg %p77
      %p230 = pneg %p101
      %p231 = pneg %p98
      %p232 = pneg %p122
      %p233 = pneg %p119
      %p234 = pneg %p143
      %p235 = pneg %p140
      %p236 = pneg %p169
      %p237 = pneg %p166
      %p238 = scmp.lt.s32.totalorder %s17, 1
      %s239 = scalar_select %p238, %s17, 1
      %s240 = smul.addr %s239, 8
      %s241 = scalar_lea.vmem %s6, %s240
      %s242 = smul.u32 18, %s17
      %p243 = scmp.lt.s32.totalorder %s242, 35
      %s244 = scalar_select %p243, %s242, 35
      %s245 = smul.addr %s244, 4
      %s246 = scalar_lea.vmem %s0, %s245
      %s247 = smul.u32 18, %s17
      %p248 = scmp.lt.s32.totalorder %s17, 1
      %s249 = scalar_select %p248, %s17, 1
      %s250 = smul.addr %s249, 8
      %s251 = scalar_lea.vmem %s6, %s250
      %v253 = vld [vmem:[%s246] sm:$0xf]
      %v254 = vld [vmem:[%s246 + $0x4] sm:$0xf]
      %v255 = vld [vmem:[%s246 + $0x8] sm:$0xf]
      %v256 = vld [vmem:[%s246 + $0xc] sm:$0xf]
      %v257 = vld [vmem:[%s246 + $0x10] sm:$0xf]
      %v258 = vld [vmem:[%s246 + $0x14] sm:$0xf]
      %v259 = vld [vmem:[%s246 + $0x18] sm:$0xf]
      %v260 = vld [vmem:[%s246 + $0x1c] sm:$0xf]
      %v261 = vld [vmem:[%s246 + $0x20] sm:$0xf]
      %v262 = vld [vmem:[%s246 + $0x24] sm:$0xf]
      %v263 = vld [vmem:[%s246 + $0x28] sm:$0xf]
      %v264 = vld [vmem:[%s246 + $0x2c] sm:$0xf]
      %v265 = vld [vmem:[%s246 + $0x30] sm:$0xf]
      %v266 = vld [vmem:[%s246 + $0x34] sm:$0xf]
      %v267 = vld [vmem:[%s246 + $0x38] sm:$0xf]
      %v268 = vld [vmem:[%s246 + $0x3c] sm:$0xf]
      %v269 = vld [vmem:[%s246 + $0x40] sm:$0xf]
      %v270 = vld [vmem:[%s246 + $0x44] sm:$0xf]
      %v271 = vld [vmem:[%s2] sm:$0xff]
      %v272 = vld [vmem:[%s2 + $0x8] sm:$0xff]
      %v273 = vld [vmem:[%s2 + $0x10] sm:$0xff]
      %v274 = vld [vmem:[%s2 + $0x18] sm:$0xff]
      %v275 = vld [vmem:[%s2 + $0x20] sm:$0xff]
      %v276 = vld [vmem:[%s2 + $0x28] sm:$0xff]
      %v277 = vld [vmem:[%s2 + $0x30] sm:$0xff]
      %v278 = vld [vmem:[%s2 + $0x38] sm:$0xff]
      %v279 = vld [vmem:[%s2 + $0x40] sm:$0xff]
      %s280 = scalar_lea.vmem %s2, 72
      %v281 = vld [vmem:[%s280] sm:$0xff]
      %v282 = vld [vmem:[%s280 + $0x8] sm:$0xff]
      %v283 = vld [vmem:[%s280 + $0x10] sm:$0xff]
      %v284 = vld [vmem:[%s280 + $0x18] sm:$0xff]
      %v285 = vld [vmem:[%s280 + $0x20] sm:$0xff]
      %v286 = vld [vmem:[%s280 + $0x28] sm:$0xff]
      %v287 = vld [vmem:[%s280 + $0x30] sm:$0xff]
      %v288 = vld [vmem:[%s280 + $0x38] sm:$0xff]
      %v289 = vld [vmem:[%s280 + $0x40] sm:$0xff]
      %v308 = vunpack.c.l.b16 %v253
      %v309 = vunpack.c.l.b16 %v254
      %v310 = vunpack.c.l.b16 %v255
      %v311 = vunpack.c.l.b16 %v256
      %v312 = vunpack.c.l.b16 %v257
      %v313 = vunpack.c.l.b16 %v258
      %v314 = vunpack.c.l.b16 %v259
      %v315 = vunpack.c.l.b16 %v260
      %v316 = vunpack.c.l.b16 %v261
      %v317 = vunpack.c.l.b16 %v262
      %v318 = vunpack.c.l.b16 %v263
      %v319 = vunpack.c.l.b16 %v264
      %v320 = vunpack.c.l.b16 %v265
      %v321 = vunpack.c.l.b16 %v266
      %v322 = vunpack.c.l.b16 %v267
      %v323 = vunpack.c.l.b16 %v268
      %v324 = vunpack.c.l.b16 %v269
      %v325 = vunpack.c.l.b16 %v270
      %v326 = vpack.c.b16 %v309, %v308
      %v327 = vpack.c.b16 %v311, %v310
      %v328 = vpack.c.b16 %v313, %v312
      %v329 = vpack.c.b16 %v315, %v314
      %v330 = vpack.c.b16 %v317, %v316
      %v331 = vpack.c.b16 %v319, %v318
      %v332 = vpack.c.b16 %v321, %v320
      %v333 = vpack.c.b16 %v323, %v322
      %v334 = vpack.c.b16 %v325, %v324
      %vm335 = vsmask.f32 7424
      %v337 = vshrl.u32 %v326, 16
      %v339 = vshll.u32 %v326, 16
      %v341 = vrot.slane %v339, 1
      %v342 = vor.u32 %v337, %v341
      %v344 = vshll.u32 %v327, 16
      %v346 = vrot.slane %v344, 1
      %v347 = vsel %vm335, %v342, %v346
      %v348 = vshrl.u32 %v327, 16
      %v350 = vor.u32 %v348, %v346
      %v352 = vshll.u32 %v328, 16
      %v354 = vrot.slane %v352, 1
      %v355 = vsel %vm335, %v350, %v354
      %v356 = vshrl.u32 %v328, 16
      %v358 = vor.u32 %v356, %v354
      %v360 = vshll.u32 %v329, 16
      %v362 = vrot.slane %v360, 1
      %v363 = vsel %vm335, %v358, %v362
      %v364 = vshrl.u32 %v329, 16
      %v366 = vor.u32 %v364, %v362
      %v368 = vshll.u32 %v330, 16
      %v370 = vrot.slane %v368, 1
      %v371 = vsel %vm335, %v366, %v370
      %v372 = vshrl.u32 %v330, 16
      %v374 = vor.u32 %v372, %v370
      %v376 = vshll.u32 %v331, 16
      %v378 = vrot.slane %v376, 1
      %v379 = vsel %vm335, %v374, %v378
      %v380 = vshrl.u32 %v331, 16
      %v382 = vor.u32 %v380, %v378
      %v384 = vshll.u32 %v332, 16
      %v386 = vrot.slane %v384, 1
      %v387 = vsel %vm335, %v382, %v386
      %v388 = vshrl.u32 %v332, 16
      %v390 = vor.u32 %v388, %v386
      %v392 = vshll.u32 %v333, 16
      %v394 = vrot.slane %v392, 1
      %v395 = vsel %vm335, %v390, %v394
      %v396 = vshrl.u32 %v333, 16
      %v398 = vor.u32 %v396, %v394
      %v400 = vshll.u32 %v334, 16
      %v402 = vrot.slane %v400, 1
      %v403 = vsel %vm335, %v398, %v402
      %v404 = vshrl.u32 %v334, 16
      %v406 = vor.u32 %v404, %v402
      %v416 = vunpack.c.l.b16 %v281
      %v417 = vunpack.c.h.b16 %v281
      %v418 = vunpack.c.l.b16 %v282
      %v419 = vunpack.c.h.b16 %v282
      %v420 = vunpack.c.l.b16 %v283
      %v421 = vunpack.c.h.b16 %v283
      %v422 = vunpack.c.l.b16 %v284
      %v423 = vunpack.c.h.b16 %v284
      %v424 = vunpack.c.l.b16 %v285
      %v425 = vunpack.c.h.b16 %v285
      %v426 = vunpack.c.l.b16 %v286
      %v427 = vunpack.c.h.b16 %v286
      %v428 = vunpack.c.l.b16 %v287
      %v429 = vunpack.c.h.b16 %v287
      %v430 = vunpack.c.l.b16 %v288
      %v431 = vunpack.c.h.b16 %v288
      %v432 = vunpack.c.l.b16 %v289
      %v433 = vunpack.c.h.b16 %v289
      %v434 = vpack.c.b16 %v418, %v416
      %v435 = vpack.c.b16 %v419, %v417
      %v436 = vpack.c.b16 %v422, %v420
      %v437 = vpack.c.b16 %v423, %v421
      %v438 = vpack.c.b16 %v426, %v424
      %v439 = vpack.c.b16 %v427, %v425
      %v440 = vpack.c.b16 %v430, %v428
      %v441 = vpack.c.b16 %v431, %v429
      %v442 = vpack.c.b16 %v432, %v432
      %v443 = vpack.c.b16 %v433, %v433
      %vm452 = vcmask 588800
      %v454 = vsel %vm452, %v347, 0
      %v457 = vsel %vm452, %v355, 0
      %v460 = vsel %vm452, %v363, 0
      %v463 = vsel %vm452, %v371, 0
      %v466 = vsel %vm452, %v379, 0
      %v469 = vsel %vm452, %v387, 0
      %v472 = vsel %vm452, %v395, 0
      %v475 = vsel %vm452, %v403, 0
      %v478 = vsel %vm452, %v406, 0
      %vm480 = vcmask 1043456
      %v482 = vsel %vm480, %v442, 0
      %v485 = vsel %vm480, %v443, 0
      %487 = vmatprep.subr.bf16.mxu0 %v435
      %488 = vmatpush1.bf16.msra.mxu0 %v434
      %489 = vmatprep.subr.bf16.mxu0 %v437
      %490 = vmatpush1.bf16.msra.mxu0 %v436
      %491 = vmatprep.subr.bf16.mxu0 %v439
      %492 = vmatpush1.bf16.msra.mxu0 %v438
      %493 = vmatprep.subr.bf16.mxu0 %v441
      %494 = vmatpush1.bf16.msra.mxu0 %v440
      %495 = vmatprep.subr.bf16.mxu0 %v485
      %496 = vmatpush1.bf16.msra.mxu0 %v482
      %497 = vmatprep.subr.bf16.mxu0 0
      %498 = vmatpush1.bf16.msra.mxu0 0
      %499 = vmatprep.subr.bf16.mxu0 0
      %500 = vmatpush1.bf16.msra.mxu0 0
      %501 = vmatprep.subr.bf16.mxu0 0
      %502 = vmatpush1.bf16.msra.mxu0 0
      %503 = vmatprep.subr.bf16.mxu0 0
      %504 = vmatpush1.bf16.msra.mxu0 0
      %505 = vmatprep.subr.bf16.mxu0 0
      %506 = vmatpush1.bf16.msra.mxu0 0
      %507 = vmatprep.subr.bf16.mxu0 0
      %508 = vmatpush1.bf16.msra.mxu0 0
      %509 = vmatprep.subr.bf16.mxu0 0
      %510 = vmatpush1.bf16.msra.mxu0 0
      %511 = vmatprep.subr.bf16.mxu0 0
      %512 = vmatpush1.bf16.msra.mxu0 0
      %513 = vmatprep.subr.bf16.mxu0 0
      %514 = vmatpush1.bf16.msra.mxu0 0
      %515 = vmatprep.subr.bf16.mxu0 0
      %516 = vmatpush1.bf16.msra.mxu0 0
      %517 = vmatprep.subr.bf16.mxu0 0
      %518 = vmatpush1.bf16.msra.mxu0 0
      %519 = vmatprep.mubr.bf16.mxu0 0
      %520 = vmatmul.mubr.bf16.gmra.mrb[0].mxu0 %v454
      %v521 = vpop.f32.mrb[0].mxu0
      %v522 = vadd.f32 0.0, %v521
      %v523 = vpop.f32.mrb[0].mxu0
      %v524 = vadd.f32 0.0, %v523
      %v525 = vpop.f32.mrb[0].mxu0
      %v526 = vadd.f32 0.0, %v525
      %v527 = vpop.f32.mrb[0].mxu0
      %v528 = vadd.f32 0.0, %v527
      %529 = vmatprep.mubr.bf16.mxu0 0
      %530 = vmatmul.mubr.bf16.gmra.mrb[0].mxu0 %v457
      %v531 = vpop.f32.mrb[0].mxu0
      %v532 = vadd.f32 0.0, %v531
      %v533 = vpop.f32.mrb[0].mxu0
      %v534 = vadd.f32 0.0, %v533
      %v535 = vpop.f32.mrb[0].mxu0
      %v536 = vadd.f32 0.0, %v535
      %v537 = vpop.f32.mrb[0].mxu0
      %v538 = vadd.f32 0.0, %v537
      %539 = vmatprep.mubr.bf16.mxu0 0
      %540 = vmatmul.mubr.bf16.gmra.mrb[0].mxu0 %v460
      %v541 = vpop.f32.mrb[0].mxu0
      %v542 = vadd.f32 0.0, %v541
      %v543 = vpop.f32.mrb[0].mxu0
      %v544 = vadd.f32 0.0, %v543
      %v545 = vpop.f32.mrb[0].mxu0
      %v546 = vadd.f32 0.0, %v545
      %v547 = vpop.f32.mrb[0].mxu0
      %v548 = vadd.f32 0.0, %v547
      %549 = vmatprep.mubr.bf16.mxu0 0
      %550 = vmatmul.mubr.bf16.gmra.mrb[0].mxu0 %v463
      %v551 = vpop.f32.mrb[0].mxu0
      %v552 = vadd.f32 0.0, %v551
      %v553 = vpop.f32.mrb[0].mxu0
      %v554 = vadd.f32 0.0, %v553
      %v555 = vpop.f32.mrb[0].mxu0
      %v556 = vadd.f32 0.0, %v555
      %v557 = vpop.f32.mrb[0].mxu0
      %v558 = vadd.f32 0.0, %v557
      %559 = vmatprep.mubr.bf16.mxu0 0
      %560 = vmatmul.mubr.bf16.gmra.mrb[0].mxu0 %v466
      %v561 = vpop.f32.mrb[0].mxu0
      %v562 = vadd.f32 0.0, %v561
      %v563 = vpop.f32.mrb[0].mxu0
      %v564 = vadd.f32 0.0, %v563
      %v565 = vpop.f32.mrb[0].mxu0
      %v566 = vadd.f32 0.0, %v565
      %v567 = vpop.f32.mrb[0].mxu0
      %v568 = vadd.f32 0.0, %v567
      %569 = vmatprep.mubr.bf16.mxu0 0
      %570 = vmatmul.mubr.bf16.gmra.mrb[0].mxu0 %v469
      %v571 = vpop.f32.mrb[0].mxu0
      %v572 = vadd.f32 0.0, %v571
      %v573 = vpop.f32.mrb[0].mxu0
      %v574 = vadd.f32 0.0, %v573
      %v575 = vpop.f32.mrb[0].mxu0
      %v576 = vadd.f32 0.0, %v575
      %v577 = vpop.f32.mrb[0].mxu0
      %v578 = vadd.f32 0.0, %v577
      %579 = vmatprep.mubr.bf16.mxu0 0
      %580 = vmatmul.mubr.bf16.gmra.mrb[0].mxu0 %v472
      %v581 = vpop.f32.mrb[0].mxu0
      %v582 = vadd.f32 0.0, %v581
      %v583 = vpop.f32.mrb[0].mxu0
      %v584 = vadd.f32 0.0, %v583
      %v585 = vpop.f32.mrb[0].mxu0
      %v586 = vadd.f32 0.0, %v585
      %v587 = vpop.f32.mrb[0].mxu0
      %v588 = vadd.f32 0.0, %v587
      %589 = vmatprep.mubr.bf16.mxu0 0
      %590 = vmatmul.mubr.bf16.gmra.mrb[0].mxu0 %v475
      %v591 = vpop.f32.mrb[0].mxu0
      %v592 = vadd.f32 0.0, %v591
      %v593 = vpop.f32.mrb[0].mxu0
      %v594 = vadd.f32 0.0, %v593
      %v595 = vpop.f32.mrb[0].mxu0
      %v596 = vadd.f32 0.0, %v595
      %v597 = vpop.f32.mrb[0].mxu0
      %v598 = vadd.f32 0.0, %v597
      %599 = vmatprep.mubr.bf16.mxu0 0
      %600 = vmatmul.mubr.bf16.gmra.mrb[0].mxu0 %v478
      %v601 = vpop.f32.mrb[0].mxu0
      %v602 = vadd.f32 0.0, %v601
      %v603 = vpop.f32.mrb[0].mxu0
      %v604 = vadd.f32 0.0, %v603
      %v605 = vpop.f32.mrb[0].mxu0
      %v606 = vadd.f32 0.0, %v605
      %v607 = vpop.f32.mrb[0].mxu0
      %v608 = vadd.f32 0.0, %v607
      %609 = vdwg.mxu0
      %v619 = vunpack.c.l.b16 %v271
      %v620 = vunpack.c.h.b16 %v271
      %v621 = vunpack.c.l.b16 %v272
      %v622 = vunpack.c.h.b16 %v272
      %v623 = vunpack.c.l.b16 %v273
      %v624 = vunpack.c.h.b16 %v273
      %v625 = vunpack.c.l.b16 %v274
      %v626 = vunpack.c.h.b16 %v274
      %v627 = vunpack.c.l.b16 %v275
      %v628 = vunpack.c.h.b16 %v275
      %v629 = vunpack.c.l.b16 %v276
      %v630 = vunpack.c.h.b16 %v276
      %v631 = vunpack.c.l.b16 %v277
      %v632 = vunpack.c.h.b16 %v277
      %v633 = vunpack.c.l.b16 %v278
      %v634 = vunpack.c.h.b16 %v278
      %v635 = vunpack.c.l.b16 %v279
      %v636 = vunpack.c.h.b16 %v279
      %v637 = vpack.c.b16 %v621, %v619
      %v638 = vpack.c.b16 %v622, %v620
      %v639 = vpack.c.b16 %v625, %v623
      %v640 = vpack.c.b16 %v626, %v624
      %v641 = vpack.c.b16 %v629, %v627
      %v642 = vpack.c.b16 %v630, %v628
      %v643 = vpack.c.b16 %v633, %v631
      %v644 = vpack.c.b16 %v634, %v632
      %v645 = vpack.c.b16 %v635, %v635
      %v646 = vpack.c.b16 %v636, %v636
      %v655 = vsel %vm452, %v326, 0
      %v657 = vsel %vm452, %v327, 0
      %v659 = vsel %vm452, %v328, 0
      %v661 = vsel %vm452, %v329, 0
      %v663 = vsel %vm452, %v330, 0
      %v665 = vsel %vm452, %v331, 0
      %v667 = vsel %vm452, %v332, 0
      %v669 = vsel %vm452, %v333, 0
      %v671 = vsel %vm452, %v334, 0
      %v674 = vsel %vm480, %v645, 0
      %v677 = vsel %vm480, %v646, 0
      %679 = vmatprep.subr.bf16.mxu0 %v638
      %680 = vmatpush1.bf16.msra.mxu0 %v637
      %681 = vmatprep.subr.bf16.mxu0 %v640
      %682 = vmatpush1.bf16.msra.mxu0 %v639
      %683 = vmatprep.subr.bf16.mxu0 %v642
      %684 = vmatpush1.bf16.msra.mxu0 %v641
      %685 = vmatprep.subr.bf16.mxu0 %v644
      %686 = vmatpush1.bf16.msra.mxu0 %v643
      %687 = vmatprep.subr.bf16.mxu0 %v677
      %688 = vmatpush1.bf16.msra.mxu0 %v674
      %689 = vmatprep.subr.bf16.mxu0 0
      %690 = vmatpush1.bf16.msra.mxu0 0
      %691 = vmatprep.subr.bf16.mxu0 0
      %692 = vmatpush1.bf16.msra.mxu0 0
      %693 = vmatprep.subr.bf16.mxu0 0
      %694 = vmatpush1.bf16.msra.mxu0 0
      %695 = vmatprep.subr.bf16.mxu0 0
      %696 = vmatpush1.bf16.msra.mxu0 0
      %697 = vmatprep.subr.bf16.mxu0 0
      %698 = vmatpush1.bf16.msra.mxu0 0
      %699 = vmatprep.subr.bf16.mxu0 0
      %700 = vmatpush1.bf16.msra.mxu0 0
      %701 = vmatprep.subr.bf16.mxu0 0
      %702 = vmatpush1.bf16.msra.mxu0 0
      %703 = vmatprep.subr.bf16.mxu0 0
      %704 = vmatpush1.bf16.msra.mxu0 0
      %705 = vmatprep.subr.bf16.mxu0 0
      %706 = vmatpush1.bf16.msra.mxu0 0
      %707 = vmatprep.subr.bf16.mxu0 0
      %708 = vmatpush1.bf16.msra.mxu0 0
      %709 = vmatprep.subr.bf16.mxu0 0
      %710 = vmatpush1.bf16.msra.mxu0 0
      %711 = vmatprep.mubr.bf16.mxu0 0
      %712 = vmatmul.mubr.bf16.gmra.mrb[0].mxu0 %v655
      %v713 = vpop.f32.mrb[0].mxu0
      %v714 = vadd.f32 %v522, %v713
      %v715 = vpop.f32.mrb[0].mxu0
      %v716 = vadd.f32 %v524, %v715
      %v717 = vpop.f32.mrb[0].mxu0
      %v718 = vadd.f32 %v526, %v717
      %v719 = vpop.f32.mrb[0].mxu0
      %v720 = vadd.f32 %v528, %v719
      %721 = vmatprep.mubr.bf16.mxu0 0
      %722 = vmatmul.mubr.bf16.gmra.mrb[0].mxu0 %v657
      %v723 = vpop.f32.mrb[0].mxu0
      %v724 = vadd.f32 %v532, %v723
      %v725 = vpop.f32.mrb[0].mxu0
      %v726 = vadd.f32 %v534, %v725
      %v727 = vpop.f32.mrb[0].mxu0
      %v728 = vadd.f32 %v536, %v727
      %v729 = vpop.f32.mrb[0].mxu0
      %v730 = vadd.f32 %v538, %v729
      %731 = vmatprep.mubr.bf16.mxu0 0
      %732 = vmatmul.mubr.bf16.gmra.mrb[0].mxu0 %v659
      %v733 = vpop.f32.mrb[0].mxu0
      %v734 = vadd.f32 %v542, %v733
      %v735 = vpop.f32.mrb[0].mxu0
      %v736 = vadd.f32 %v544, %v735
      %v737 = vpop.f32.mrb[0].mxu0
      %v738 = vadd.f32 %v546, %v737
      %v739 = vpop.f32.mrb[0].mxu0
      %v740 = vadd.f32 %v548, %v739
      %741 = vmatprep.mubr.bf16.mxu0 0
      %742 = vmatmul.mubr.bf16.gmra.mrb[0].mxu0 %v661
      %v743 = vpop.f32.mrb[0].mxu0
      %v744 = vadd.f32 %v552, %v743
      %v745 = vpop.f32.mrb[0].mxu0
      %v746 = vadd.f32 %v554, %v745
      %v747 = vpop.f32.mrb[0].mxu0
      %v748 = vadd.f32 %v556, %v747
      %v749 = vpop.f32.mrb[0].mxu0
      %v750 = vadd.f32 %v558, %v749
      %751 = vmatprep.mubr.bf16.mxu0 0
      %752 = vmatmul.mubr.bf16.gmra.mrb[0].mxu0 %v663
      %v753 = vpop.f32.mrb[0].mxu0
      %v754 = vadd.f32 %v562, %v753
      %v755 = vpop.f32.mrb[0].mxu0
      %v756 = vadd.f32 %v564, %v755
      %v757 = vpop.f32.mrb[0].mxu0
      %v758 = vadd.f32 %v566, %v757
      %v759 = vpop.f32.mrb[0].mxu0
      %v760 = vadd.f32 %v568, %v759
      %761 = vmatprep.mubr.bf16.mxu0 0
      %762 = vmatmul.mubr.bf16.gmra.mrb[0].mxu0 %v665
      %v763 = vpop.f32.mrb[0].mxu0
      %v764 = vadd.f32 %v572, %v763
      %v765 = vpop.f32.mrb[0].mxu0
      %v766 = vadd.f32 %v574, %v765
      %v767 = vpop.f32.mrb[0].mxu0
      %v768 = vadd.f32 %v576, %v767
      %v769 = vpop.f32.mrb[0].mxu0
      %v770 = vadd.f32 %v578, %v769
      %771 = vmatprep.mubr.bf16.mxu0 0
      %772 = vmatmul.mubr.bf16.gmra.mrb[0].mxu0 %v667
      %v773 = vpop.f32.mrb[0].mxu0
      %v774 = vadd.f32 %v582, %v773
      %v775 = vpop.f32.mrb[0].mxu0
      %v776 = vadd.f32 %v584, %v775
      %v777 = vpop.f32.mrb[0].mxu0
      %v778 = vadd.f32 %v586, %v777
      %v779 = vpop.f32.mrb[0].mxu0
      %v780 = vadd.f32 %v588, %v779
      %781 = vmatprep.mubr.bf16.mxu0 0
      %782 = vmatmul.mubr.bf16.gmra.mrb[0].mxu0 %v669
      %v783 = vpop.f32.mrb[0].mxu0
      %v784 = vadd.f32 %v592, %v783
      %v785 = vpop.f32.mrb[0].mxu0
      %v786 = vadd.f32 %v594, %v785
      %v787 = vpop.f32.mrb[0].mxu0
      %v788 = vadd.f32 %v596, %v787
      %v789 = vpop.f32.mrb[0].mxu0
      %v790 = vadd.f32 %v598, %v789
      %791 = vmatprep.mubr.bf16.mxu0 0
      %792 = vmatmul.mubr.bf16.gmra.mrb[0].mxu0 %v671
      %v793 = vpop.f32.mrb[0].mxu0
      %v794 = vadd.f32 %v602, %v793
      %v795 = vpop.f32.mrb[0].mxu0
      %v796 = vadd.f32 %v604, %v795
      %v797 = vpop.f32.mrb[0].mxu0
      %v798 = vadd.f32 %v606, %v797
      %v799 = vpop.f32.mrb[0].mxu0
      %v800 = vadd.f32 %v608, %v799
      %801 = vdwg.mxu0
      %s802 = scalar_lea.vmem %s2, 144
      %v803 = vld [vmem:[%s802] sm:$0xff]
      %v804 = vld [vmem:[%s802 + $0x8] sm:$0xff]
      %v805 = vld [vmem:[%s802 + $0x10] sm:$0xff]
      %v806 = vld [vmem:[%s802 + $0x18] sm:$0xff]
      %v807 = vld [vmem:[%s802 + $0x20] sm:$0xff]
      %v808 = vld [vmem:[%s802 + $0x28] sm:$0xff]
      %v809 = vld [vmem:[%s802 + $0x30] sm:$0xff]
      %v810 = vld [vmem:[%s802 + $0x38] sm:$0xff]
      %v811 = vld [vmem:[%s802 + $0x40] sm:$0xff]
      %vm812 = vcmask 1046528
      %v813 = vrot.slane %v326, 1
      %v814 = vrot.slane %v327, 1
      %v815 = vsel %vm812, %v813, %v814
      %v816 = vrot.slane %v328, 1
      %v817 = vsel %vm812, %v814, %v816
      %v818 = vrot.slane %v329, 1
      %v819 = vsel %vm812, %v816, %v818
      %v820 = vrot.slane %v330, 1
      %v821 = vsel %vm812, %v818, %v820
      %v822 = vrot.slane %v331, 1
      %v823 = vsel %vm812, %v820, %v822
      %v824 = vrot.slane %v332, 1
      %v825 = vsel %vm812, %v822, %v824
      %v826 = vrot.slane %v333, 1
      %v827 = vsel %vm812, %v824, %v826
      %v828 = vrot.slane %v334, 1
      %v829 = vsel %vm812, %v826, %v828
      %v839 = vunpack.c.l.b16 %v803
      %v840 = vunpack.c.h.b16 %v803
      %v841 = vunpack.c.l.b16 %v804
      %v842 = vunpack.c.h.b16 %v804
      %v843 = vunpack.c.l.b16 %v805
      %v844 = vunpack.c.h.b16 %v805
      %v845 = vunpack.c.l.b16 %v806
      %v846 = vunpack.c.h.b16 %v806
      %v847 = vunpack.c.l.b16 %v807
      %v848 = vunpack.c.h.b16 %v807
      %v849 = vunpack.c.l.b16 %v808
      %v850 = vunpack.c.h.b16 %v808
      %v851 = vunpack.c.l.b16 %v809
      %v852 = vunpack.c.h.b16 %v809
      %v853 = vunpack.c.l.b16 %v810
      %v854 = vunpack.c.h.b16 %v810
      %v855 = vunpack.c.l.b16 %v811
      %v856 = vunpack.c.h.b16 %v811
      %v857 = vpack.c.b16 %v841, %v839
      %v858 = vpack.c.b16 %v842, %v840
      %v859 = vpack.c.b16 %v845, %v843
      %v860 = vpack.c.b16 %v846, %v844
      %v861 = vpack.c.b16 %v849, %v847
      %v862 = vpack.c.b16 %v850, %v848
      %v863 = vpack.c.b16 %v853, %v851
      %v864 = vpack.c.b16 %v854, %v852
      %v865 = vpack.c.b16 %v855, %v855
      %v866 = vpack.c.b16 %v856, %v856
      %v876 = vsel %vm452, %v815, 0
      %v879 = vsel %vm452, %v817, 0
      %v882 = vsel %vm452, %v819, 0
      %v885 = vsel %vm452, %v821, 0
      %v888 = vsel %vm452, %v823, 0
      %v891 = vsel %vm452, %v825, 0
      %v894 = vsel %vm452, %v827, 0
      %v897 = vsel %vm452, %v829, 0
      %v900 = vsel %vm452, %v828, 0
      %v903 = vsel %vm480, %v865, 0
      %v906 = vsel %vm480, %v866, 0
      %908 = vmatprep.subr.bf16.mxu0 %v858
      %909 = vmatpush1.bf16.msra.mxu0 %v857
      %910 = vmatprep.subr.bf16.mxu0 %v860
      %911 = vmatpush1.bf16.msra.mxu0 %v859
      %912 = vmatprep.subr.bf16.mxu0 %v862
      %913 = vmatpush1.bf16.msra.mxu0 %v861
      %914 = vmatprep.subr.bf16.mxu0 %v864
      %915 = vmatpush1.bf16.msra.mxu0 %v863
      %916 = vmatprep.subr.bf16.mxu0 %v906
      %917 = vmatpush1.bf16.msra.mxu0 %v903
      %918 = vmatprep.subr.bf16.mxu0 0
      %919 = vmatpush1.bf16.msra.mxu0 0
      %920 = vmatprep.subr.bf16.mxu0 0
      %921 = vmatpush1.bf16.msra.mxu0 0
      %922 = vmatprep.subr.bf16.mxu0 0
      %923 = vmatpush1.bf16.msra.mxu0 0
      %924 = vmatprep.subr.bf16.mxu0 0
      %925 = vmatpush1.bf16.msra.mxu0 0
      %926 = vmatprep.subr.bf16.mxu0 0
      %927 = vmatpush1.bf16.msra.mxu0 0
      %928 = vmatprep.subr.bf16.mxu0 0
      %929 = vmatpush1.bf16.msra.mxu0 0
      %930 = vmatprep.subr.bf16.mxu0 0
      %931 = vmatpush1.bf16.msra.mxu0 0
      %932 = vmatprep.subr.bf16.mxu0 0
      %933 = vmatpush1.bf16.msra.mxu0 0
      %934 = vmatprep.subr.bf16.mxu0 0
      %935 = vmatpush1.bf16.msra.mxu0 0
      %936 = vmatprep.subr.bf16.mxu0 0
      %937 = vmatpush1.bf16.msra.mxu0 0
      %938 = vmatprep.subr.bf16.mxu0 0
      %939 = vmatpush1.bf16.msra.mxu0 0
      %940 = vmatprep.mubr.bf16.mxu0 0
      %941 = vmatmul.mubr.bf16.gmra.mrb[0].mxu0 %v876
      %v942 = vpop.f32.mrb[0].mxu0
      %v943 = vadd.f32 0.0, %v942
      %v944 = vpop.f32.mrb[0].mxu0
      %v945 = vadd.f32 0.0, %v944
      %v946 = vpop.f32.mrb[0].mxu0
      %v947 = vadd.f32 0.0, %v946
      %v948 = vpop.f32.mrb[0].mxu0
      %v949 = vadd.f32 0.0, %v948
      %950 = vmatprep.mubr.bf16.mxu0 0
      %951 = vmatmul.mubr.bf16.gmra.mrb[0].mxu0 %v879
      %v952 = vpop.f32.mrb[0].mxu0
      %v953 = vadd.f32 0.0, %v952
      %v954 = vpop.f32.mrb[0].mxu0
      %v955 = vadd.f32 0.0, %v954
      %v956 = vpop.f32.mrb[0].mxu0
      %v957 = vadd.f32 0.0, %v956
      %v958 = vpop.f32.mrb[0].mxu0
      %v959 = vadd.f32 0.0, %v958
      %960 = vmatprep.mubr.bf16.mxu0 0
      %961 = vmatmul.mubr.bf16.gmra.mrb[0].mxu0 %v882
      %v962 = vpop.f32.mrb[0].mxu0
      %v963 = vadd.f32 0.0, %v962
      %v964 = vpop.f32.mrb[0].mxu0
      %v965 = vadd.f32 0.0, %v964
      %v966 = vpop.f32.mrb[0].mxu0
      %v967 = vadd.f32 0.0, %v966
      %v968 = vpop.f32.mrb[0].mxu0
      %v969 = vadd.f32 0.0, %v968
      %970 = vmatprep.mubr.bf16.mxu0 0
      %971 = vmatmul.mubr.bf16.gmra.mrb[0].mxu0 %v885
      %v972 = vpop.f32.mrb[0].mxu0
      %v973 = vadd.f32 0.0, %v972
      %v974 = vpop.f32.mrb[0].mxu0
      %v975 = vadd.f32 0.0, %v974
      %v976 = vpop.f32.mrb[0].mxu0
      %v977 = vadd.f32 0.0, %v976
      %v978 = vpop.f32.mrb[0].mxu0
      %v979 = vadd.f32 0.0, %v978
      %980 = vmatprep.mubr.bf16.mxu0 0
      %981 = vmatmul.mubr.bf16.gmra.mrb[0].mxu0 %v888
      %v982 = vpop.f32.mrb[0].mxu0
      %v983 = vadd.f32 0.0, %v982
      %v984 = vpop.f32.mrb[0].mxu0
      %v985 = vadd.f32 0.0, %v984
      %v986 = vpop.f32.mrb[0].mxu0
      %v987 = vadd.f32 0.0, %v986
      %v988 = vpop.f32.mrb[0].mxu0
      %v989 = vadd.f32 0.0, %v988
      %990 = vmatprep.mubr.bf16.mxu0 0
      %991 = vmatmul.mubr.bf16.gmra.mrb[0].mxu0 %v891
      %v992 = vpop.f32.mrb[0].mxu0
      %v993 = vadd.f32 0.0, %v992
      %v994 = vpop.f32.mrb[0].mxu0
      %v995 = vadd.f32 0.0, %v994
      %v996 = vpop.f32.mrb[0].mxu0
      %v997 = vadd.f32 0.0, %v996
      %v998 = vpop.f32.mrb[0].mxu0
      %v999 = vadd.f32 0.0, %v998
      %1000 = vmatprep.mubr.bf16.mxu0 0
      %1001 = vmatmul.mubr.bf16.gmra.mrb[0].mxu0 %v894
      %v1002 = vpop.f32.mrb[0].mxu0
      %v1003 = vadd.f32 0.0, %v1002
      %v1004 = vpop.f32.mrb[0].mxu0
      %v1005 = vadd.f32 0.0, %v1004
      %v1006 = vpop.f32.mrb[0].mxu0
      %v1007 = vadd.f32 0.0, %v1006
      %v1008 = vpop.f32.mrb[0].mxu0
      %v1009 = vadd.f32 0.0, %v1008
      %1010 = vmatprep.mubr.bf16.mxu0 0
      %1011 = vmatmul.mubr.bf16.gmra.mrb[0].mxu0 %v897
      %v1012 = vpop.f32.mrb[0].mxu0
      %v1013 = vadd.f32 0.0, %v1012
      %v1014 = vpop.f32.mrb[0].mxu0
      %v1015 = vadd.f32 0.0, %v1014
      %v1016 = vpop.f32.mrb[0].mxu0
      %v1017 = vadd.f32 0.0, %v1016
      %v1018 = vpop.f32.mrb[0].mxu0
      %v1019 = vadd.f32 0.0, %v1018
      %1020 = vmatprep.mubr.bf16.mxu0 0
      %1021 = vmatmul.mubr.bf16.gmra.mrb[0].mxu0 %v900
      %v1022 = vpop.f32.mrb[0].mxu0
      %v1023 = vadd.f32 0.0, %v1022
      %v1024 = vpop.f32.mrb[0].mxu0
      %v1025 = vadd.f32 0.0, %v1024
      %v1026 = vpop.f32.mrb[0].mxu0
      %v1027 = vadd.f32 0.0, %v1026
      %v1028 = vpop.f32.mrb[0].mxu0
      %v1029 = vadd.f32 0.0, %v1028
      %1030 = vdwg.mxu0
      %v1031 = vadd.f32 %v714, %v943
      %v1032 = vadd.f32 %v716, %v945
      %v1033 = vadd.f32 %v718, %v947
      %v1034 = vadd.f32 %v720, %v949
      %v1035 = vadd.f32 %v724, %v953
      %v1036 = vadd.f32 %v726, %v955
      %v1037 = vadd.f32 %v728, %v957
      %v1038 = vadd.f32 %v730, %v959
      %v1039 = vadd.f32 %v734, %v963
      %v1040 = vadd.f32 %v736, %v965
      %v1041 = vadd.f32 %v738, %v967
      %v1042 = vadd.f32 %v740, %v969
      %v1043 = vadd.f32 %v744, %v973
      %v1044 = vadd.f32 %v746, %v975
      %v1045 = vadd.f32 %v748, %v977
      %v1046 = vadd.f32 %v750, %v979
      %v1047 = vadd.f32 %v754, %v983
      %v1048 = vadd.f32 %v756, %v985
      %v1049 = vadd.f32 %v758, %v987
      %v1050 = vadd.f32 %v760, %v989
      %v1051 = vadd.f32 %v764, %v993
      %v1052 = vadd.f32 %v766, %v995
      %v1053 = vadd.f32 %v768, %v997
      %v1054 = vadd.f32 %v770, %v999
      %v1055 = vadd.f32 %v774, %v1003
      %v1056 = vadd.f32 %v776, %v1005
      %v1057 = vadd.f32 %v778, %v1007
      %v1058 = vadd.f32 %v780, %v1009
      %v1059 = vadd.f32 %v784, %v1013
      %v1060 = vadd.f32 %v786, %v1015
      %v1061 = vadd.f32 %v788, %v1017
      %v1062 = vadd.f32 %v790, %v1019
      %v1063 = vadd.f32 %v794, %v1023
      %v1064 = vadd.f32 %v796, %v1025
      %v1065 = vadd.f32 %v798, %v1027
      %v1066 = vadd.f32 %v800, %v1029
      %v1067 = vld [vmem:[%s3] sm:$0x3]
      %v1069 = vlaneseq
      %v1070 = vshrl.u32 %v1069, 7
      %v1071 = vsub.s32 0, %v1070
      %v1072 = vrot.slane %v1067, %v1071
      %v1073 = vlaneseq
      %v1074 = vshrl.u32 %v1073, 7
      %v1075 = vsub.s32 1, %v1074
      %v1076 = vrot.slane %v1067, %v1075
      %v1079 = vadd.f32 %v1031, %v1072
      %v1080 = vadd.f32 %v1032, %v1076
      %v1081 = vadd.f32 %v1033, %v1072
      %v1082 = vadd.f32 %v1034, %v1076
      %v1083 = vadd.f32 %v1035, %v1072
      %v1084 = vadd.f32 %v1036, %v1076
      %v1085 = vadd.f32 %v1037, %v1072
      %v1086 = vadd.f32 %v1038, %v1076
      %v1087 = vadd.f32 %v1039, %v1072
      %v1088 = vadd.f32 %v1040, %v1076
      %v1089 = vadd.f32 %v1041, %v1072
      %v1090 = vadd.f32 %v1042, %v1076
      %v1091 = vadd.f32 %v1043, %v1072
      %v1092 = vadd.f32 %v1044, %v1076
      %v1093 = vadd.f32 %v1045, %v1072
      %v1094 = vadd.f32 %v1046, %v1076
      %v1095 = vadd.f32 %v1047, %v1072
      %v1096 = vadd.f32 %v1048, %v1076
      %v1097 = vadd.f32 %v1049, %v1072
      %v1098 = vadd.f32 %v1050, %v1076
      %v1099 = vadd.f32 %v1051, %v1072
      %v1100 = vadd.f32 %v1052, %v1076
      %v1101 = vadd.f32 %v1053, %v1072
      %v1102 = vadd.f32 %v1054, %v1076
      %v1103 = vadd.f32 %v1055, %v1072
      %v1104 = vadd.f32 %v1056, %v1076
      %v1105 = vadd.f32 %v1057, %v1072
      %v1106 = vadd.f32 %v1058, %v1076
      %v1107 = vadd.f32 %v1059, %v1072
      %v1108 = vadd.f32 %v1060, %v1076
      %v1109 = vadd.f32 %v1061, %v1072
      %v1110 = vadd.f32 %v1062, %v1076
      %v1111 = vadd.f32 %v1063, %v1072
      %v1112 = vadd.f32 %v1064, %v1076
      %v1113 = vadd.f32 %v1065, %v1072
      %v1114 = vadd.f32 %v1066, %v1076
      %v1115 = vmax.f32 %v1079, 0.0
      %v1116 = vmax.f32 %v1080, 0.0
      %v1117 = vmax.f32 %v1081, 0.0
      %v1118 = vmax.f32 %v1082, 0.0
      %v1119 = vmax.f32 %v1083, 0.0
      %v1120 = vmax.f32 %v1084, 0.0
      %v1121 = vmax.f32 %v1085, 0.0
      %v1122 = vmax.f32 %v1086, 0.0
      %v1123 = vmax.f32 %v1087, 0.0
      %v1124 = vmax.f32 %v1088, 0.0
      %v1125 = vmax.f32 %v1089, 0.0
      %v1126 = vmax.f32 %v1090, 0.0
      %v1127 = vmax.f32 %v1091, 0.0
      %v1128 = vmax.f32 %v1092, 0.0
      %v1129 = vmax.f32 %v1093, 0.0
      %v1130 = vmax.f32 %v1094, 0.0
      %v1131 = vmax.f32 %v1095, 0.0
      %v1132 = vmax.f32 %v1096, 0.0
      %v1133 = vmax.f32 %v1097, 0.0
      %v1134 = vmax.f32 %v1098, 0.0
      %v1135 = vmax.f32 %v1099, 0.0
      %v1136 = vmax.f32 %v1100, 0.0
      %v1137 = vmax.f32 %v1101, 0.0
      %v1138 = vmax.f32 %v1102, 0.0
      %v1139 = vmax.f32 %v1103, 0.0
      %v1140 = vmax.f32 %v1104, 0.0
      %v1141 = vmax.f32 %v1105, 0.0
      %v1142 = vmax.f32 %v1106, 0.0
      %v1143 = vmax.f32 %v1107, 0.0
      %v1144 = vmax.f32 %v1108, 0.0
      %v1145 = vmax.f32 %v1109, 0.0
      %v1146 = vmax.f32 %v1110, 0.0
      %v1147 = vmax.f32 %v1111, 0.0
      %v1148 = vmax.f32 %v1112, 0.0
      %v1149 = vmax.f32 %v1113, 0.0
      %v1150 = vmax.f32 %v1114, 0.0
      %v1151 = vld [vmem:[%s1] sm:$0xff]
      %v1152 = vpack.c.bf16 %v1117, %v1115
      %v1153 = vpack.c.bf16 %v1118, %v1116
      %v1154 = vpack.c.bf16 %v1121, %v1119
      %v1155 = vpack.c.bf16 %v1122, %v1120
      %v1156 = vpack.c.bf16 %v1125, %v1123
      %v1157 = vpack.c.bf16 %v1126, %v1124
      %v1158 = vpack.c.bf16 %v1129, %v1127
      %v1159 = vpack.c.bf16 %v1130, %v1128
      %v1160 = vpack.c.bf16 %v1133, %v1131
      %v1161 = vpack.c.bf16 %v1134, %v1132
      %v1162 = vpack.c.bf16 %v1137, %v1135
      %v1163 = vpack.c.bf16 %v1138, %v1136
      %v1164 = vpack.c.bf16 %v1141, %v1139
      %v1165 = vpack.c.bf16 %v1142, %v1140
      %v1166 = vpack.c.bf16 %v1145, %v1143
      %v1167 = vpack.c.bf16 %v1146, %v1144
      %v1168 = vpack.c.bf16 %v1149, %v1147
      %v1169 = vpack.c.bf16 %v1150, %v1148
      %v1171 = vunpack.c.l.b16 %v1151
      %v1172 = vunpack.c.h.b16 %v1151
      %v1173 = vpack.c.b16 %v1171, %v1171
      %v1174 = vpack.c.b16 %v1172, %v1172
      %vm1176 = vcmask 113664
      %v1178 = vsel %vm1176, %v1174, 0
      %vm1180 = vcmask 1046528
      %v1182 = vsel %vm1180, %v1168, 0
      %v1185 = vsel %vm1180, %v1169, 0
      %1187 = vmatprep.subr.bf16.mxu0 %v1153
      %1188 = vmatpush1.bf16.msra.mxu0 %v1152
      %1189 = vmatprep.subr.bf16.mxu0 %v1155
      %1190 = vmatpush1.bf16.msra.mxu0 %v1154
      %1191 = vmatprep.subr.bf16.mxu0 %v1157
      %1192 = vmatpush1.bf16.msra.mxu0 %v1156
      %1193 = vmatprep.subr.bf16.mxu0 %v1159
      %1194 = vmatpush1.bf16.msra.mxu0 %v1158
      %1195 = vmatprep.subr.bf16.mxu0 %v1161
      %1196 = vmatpush1.bf16.msra.mxu0 %v1160
      %1197 = vmatprep.subr.bf16.mxu0 %v1163
      %1198 = vmatpush1.bf16.msra.mxu0 %v1162
      %1199 = vmatprep.subr.bf16.mxu0 %v1165
      %1200 = vmatpush1.bf16.msra.mxu0 %v1164
      %1201 = vmatprep.subr.bf16.mxu0 %v1167
      %1202 = vmatpush1.bf16.msra.mxu0 %v1166
      %1203 = vmatprep.subr.bf16.mxu0 %v1185
      %1204 = vmatpush1.bf16.msra.mxu0 %v1182
      %1205 = vmatprep.subr.bf16.mxu0 0
      %1206 = vmatpush1.bf16.msra.mxu0 0
      %1207 = vmatprep.subr.bf16.mxu0 0
      %1208 = vmatpush1.bf16.msra.mxu0 0
      %1209 = vmatprep.subr.bf16.mxu0 0
      %1210 = vmatpush1.bf16.msra.mxu0 0
      %1211 = vmatprep.subr.bf16.mxu0 0
      %1212 = vmatpush1.bf16.msra.mxu0 0
      %1213 = vmatprep.subr.bf16.mxu0 0
      %1214 = vmatpush1.bf16.msra.mxu0 0
      %1215 = vmatprep.subr.bf16.mxu0 0
      %1216 = vmatpush1.bf16.msra.mxu0 0
      %1217 = vmatprep.subr.bf16.mxu0 0
      %1218 = vmatpush1.bf16.msra.mxu0 0
      %1219 = vmatprep.mubr.bf16.mxu0 %v1178
      %1220 = vmatmul.mubr.bf16.gmra.mrb[0].mxu0 %v1173
      %v1221 = vpop.f32.mrb[0].mxu0
      %v1222 = vadd.f32 0.0, %v1221
      %v1223 = vpop.f32.mrb[0].mxu0
      %v1224 = vadd.f32 0.0, %v1223
      %v1225 = vpop.f32.mrb[0].mxu0
      %v1226 = vpop.f32.mrb[0].mxu0
      %1227 = vdwg.mxu0
      %v1228 = vpack.c.bf16 %v1222, %v1222
      %v1229 = vpack.c.bf16 %v1224, %v1224
      %v1230 = vld [vmem:[%s4] sm:$0xf]
      %v1231 = vld [vmem:[%s4 + $0x4] sm:$0xf]
      %v1232 = vld [vmem:[%s4 + $0x8] sm:$0xf]
      %v1233 = vld [vmem:[%s4 + $0xc] sm:$0xf]
      %v1234 = vld [vmem:[%s4 + $0x10] sm:$0xf]
      %v1235 = vld [vmem:[%s4 + $0x14] sm:$0xf]
      %v1236 = vld [vmem:[%s4 + $0x18] sm:$0xf]
      %v1237 = vld [vmem:[%s4 + $0x1c] sm:$0xf]
      %v1238 = vld [vmem:[%s4 + $0x20] sm:$0xf]
      %v1239 = vld [vmem:[%s4 + $0x24] sm:$0xf]
      %v1240 = vld [vmem:[%s4 + $0x28] sm:$0xf]
      %v1241 = vld [vmem:[%s4 + $0x2c] sm:$0xf]
      %v1242 = vld [vmem:[%s4 + $0x30] sm:$0xf]
      %v1243 = vld [vmem:[%s4 + $0x34] sm:$0xf]
      %v1244 = vld [vmem:[%s4 + $0x38] sm:$0xf]
      %v1245 = vld [vmem:[%s4 + $0x3c] sm:$0xf]
      %v1246 = vld [vmem:[%s4 + $0x40] sm:$0xf]
      %v1247 = vld [vmem:[%s4 + $0x44] sm:$0xf]
      %v1248 = vld [vmem:[%s4 + $0x48] sm:$0xf]
      %v1249 = vld [vmem:[%s4 + $0x4c] sm:$0xf]
      %v1250 = vld [vmem:[%s4 + $0x50] sm:$0xf]
      %v1251 = vld [vmem:[%s4 + $0x54] sm:$0xf]
      %v1252 = vld [vmem:[%s4 + $0x58] sm:$0xf]
      %v1253 = vld [vmem:[%s4 + $0x5c] sm:$0xf]
      %v1254 = vld [vmem:[%s4 + $0x60] sm:$0xf]
      %v1255 = vld [vmem:[%s4 + $0x64] sm:$0xf]
      %v1256 = vld [vmem:[%s4 + $0x68] sm:$0xf]
      %v1257 = vld [vmem:[%s4 + $0x6c] sm:$0xf]
      %v1258 = vld [vmem:[%s4 + $0x70] sm:$0xf]
      %v1259 = vld [vmem:[%s4 + $0x74] sm:$0xf]
      %v1260 = vld [vmem:[%s4 + $0x78] sm:$0xf]
      %v1261 = vld [vmem:[%s4 + $0x7c] sm:$0xf]
      %v1262 = vld [vmem:[%s5] sm:$0x1]
      %v1264 = vlaneseq
      %v1265 = vshrl.u32 %v1264, 7
      %v1266 = vsub.s32 0, %v1265
      %v1267 = vrot.slane %v1262, %v1266
      %v1301 = vunpack.c.l.b16 %v1230
      %v1302 = vunpack.c.l.b16 %v1231
      %v1303 = vunpack.c.l.b16 %v1232
      %v1304 = vunpack.c.l.b16 %v1233
      %v1305 = vunpack.c.l.b16 %v1234
      %v1306 = vunpack.c.l.b16 %v1235
      %v1307 = vunpack.c.l.b16 %v1236
      %v1308 = vunpack.c.l.b16 %v1237
      %v1309 = vunpack.c.l.b16 %v1238
      %v1310 = vunpack.c.l.b16 %v1239
      %v1311 = vunpack.c.l.b16 %v1240
      %v1312 = vunpack.c.l.b16 %v1241
      %v1313 = vunpack.c.l.b16 %v1242
      %v1314 = vunpack.c.l.b16 %v1243
      %v1315 = vunpack.c.l.b16 %v1244
      %v1316 = vunpack.c.l.b16 %v1245
      %v1317 = vunpack.c.l.b16 %v1246
      %v1318 = vunpack.c.l.b16 %v1247
      %v1319 = vunpack.c.l.b16 %v1248
      %v1320 = vunpack.c.l.b16 %v1249
      %v1321 = vunpack.c.l.b16 %v1250
      %v1322 = vunpack.c.l.b16 %v1251
      %v1323 = vunpack.c.l.b16 %v1252
      %v1324 = vunpack.c.l.b16 %v1253
      %v1325 = vunpack.c.l.b16 %v1254
      %v1326 = vunpack.c.l.b16 %v1255
      %v1327 = vunpack.c.l.b16 %v1256
      %v1328 = vunpack.c.l.b16 %v1257
      %v1329 = vunpack.c.l.b16 %v1258
      %v1330 = vunpack.c.l.b16 %v1259
      %v1331 = vunpack.c.l.b16 %v1260
      %v1332 = vunpack.c.l.b16 %v1261
      %v1333 = vpack.c.b16 %v1302, %v1301
      %v1334 = vpack.c.b16 %v1304, %v1303
      %v1335 = vpack.c.b16 %v1306, %v1305
      %v1336 = vpack.c.b16 %v1308, %v1307
      %v1337 = vpack.c.b16 %v1310, %v1309
      %v1338 = vpack.c.b16 %v1312, %v1311
      %v1339 = vpack.c.b16 %v1314, %v1313
      %v1340 = vpack.c.b16 %v1316, %v1315
      %v1341 = vpack.c.b16 %v1318, %v1317
      %v1342 = vpack.c.b16 %v1320, %v1319
      %v1343 = vpack.c.b16 %v1322, %v1321
      %v1344 = vpack.c.b16 %v1324, %v1323
      %v1345 = vpack.c.b16 %v1326, %v1325
      %v1346 = vpack.c.b16 %v1328, %v1327
      %v1347 = vpack.c.b16 %v1330, %v1329
      %v1348 = vpack.c.b16 %v1332, %v1331
      %1365 = vmatprep.subr.bf16.mxu0 0
      %1366 = vmatpush1.bf16.msra.mxu0 %v1333
      %1367 = vmatprep.subr.bf16.mxu0 0
      %1368 = vmatpush1.bf16.msra.mxu0 %v1334
      %1369 = vmatprep.subr.bf16.mxu0 0
      %1370 = vmatpush1.bf16.msra.mxu0 %v1335
      %1371 = vmatprep.subr.bf16.mxu0 0
      %1372 = vmatpush1.bf16.msra.mxu0 %v1336
      %1373 = vmatprep.subr.bf16.mxu0 0
      %1374 = vmatpush1.bf16.msra.mxu0 %v1337
      %1375 = vmatprep.subr.bf16.mxu0 0
      %1376 = vmatpush1.bf16.msra.mxu0 %v1338
      %1377 = vmatprep.subr.bf16.mxu0 0
      %1378 = vmatpush1.bf16.msra.mxu0 %v1339
      %1379 = vmatprep.subr.bf16.mxu0 0
      %1380 = vmatpush1.bf16.msra.mxu0 %v1340
      %1381 = vmatprep.subr.bf16.mxu0 0
      %1382 = vmatpush1.bf16.msra.mxu0 %v1341
      %1383 = vmatprep.subr.bf16.mxu0 0
      %1384 = vmatpush1.bf16.msra.mxu0 %v1342
      %1385 = vmatprep.subr.bf16.mxu0 0
      %1386 = vmatpush1.bf16.msra.mxu0 %v1343
      %1387 = vmatprep.subr.bf16.mxu0 0
      %1388 = vmatpush1.bf16.msra.mxu0 %v1344
      %1389 = vmatprep.subr.bf16.mxu0 0
      %1390 = vmatpush1.bf16.msra.mxu0 %v1345
      %1391 = vmatprep.subr.bf16.mxu0 0
      %1392 = vmatpush1.bf16.msra.mxu0 %v1346
      %1393 = vmatprep.subr.bf16.mxu0 0
      %1394 = vmatpush1.bf16.msra.mxu0 %v1347
      %1395 = vmatprep.subr.bf16.mxu0 0
      %1396 = vmatpush1.bf16.msra.mxu0 %v1348
      %1397 = vmatprep.mubr.bf16.mxu0 %v1229
      %1398 = vmatmul.mubr.bf16.gmra.mrb[0].mxu0 %v1228
      %v1399 = vpop.f32.mrb[0].mxu0
      %v1400 = vadd.f32 %v1267, %v1399
      %v1401 = vpop.f32.mrb[0].mxu0
      %v1402 = vpop.f32.mrb[0].mxu0
      %v1403 = vpop.f32.mrb[0].mxu0
      %1404 = vdwg.mxu0
      %1405 = vst [vmem:[%s251] sm:$0xff] %v1400
      %p1406 = scmp.lt.s32.totalorder %s17, 1
      %s1407 = scalar_select %p1406, %s17, 1
      %s1408 = smul.addr %s1407, 8
      %s1409 = scalar_lea.vmem %s6, %s1408
      // Predicated region
      $region45: #{temporal_cnn_forward.2} parent=43 // pred_check
        %p1410 = pneg %p166
      $region46: #{temporal_cnn_forward.2} parent=43 // pred_check_branch
        %1412 = sbr.rel (%p1410) target = $region48
      $region47: #{temporal_cnn_forward.2} parent=43 // pred_region
        _
      $region48: #{temporal_cnn_forward.2} parent=43 // pred_fallthru
        _
    $region44: #{temporal_cnn_forward.2} parent=5 // pred_fallthru
      _
    %p1413 = scmp.le.s32.totalorder 2, %s12
    // Predicated region
    $region49: #{temporal_cnn_forward.2} parent=5 // pred_check
      %p1414 = pneg %p1413
    $region50: #{temporal_cnn_forward.2} parent=5 // pred_check_branch
      %1416 = sbr.rel (%p1414) target = $region52
    $region51: #{temporal_cnn_forward.2} parent=5 // pred_region
      %s1417 = ssub.s32 %s12, 2
      // Predicated region
      $region53: #{temporal_cnn_forward.2} parent=51 // pred_check
        %p1418 = pneg %p172
      $region54: #{temporal_cnn_forward.2} parent=51 // pred_check_branch
        %1420 = sbr.rel (%p1418) target = $region56
      $region55: #{temporal_cnn_forward.2} parent=51 // pred_region
        %p1421 = scmp.lt.s32.totalorder %s18, 1
        %s1422 = scalar_select %p1421, %s18, 1
        %s1423 = smul.addr %s1422, 8
        %s1424 = scalar_lea.vmem %s6, %s1423
      $region56: #{temporal_cnn_forward.2} parent=51 // pred_fallthru
        _
    $region52: #{temporal_cnn_forward.2} parent=5 // pred_fallthru
      _
  $region6: #{temporal_cnn_forward.2} parent=0 // loop_footer
    %s16 = sadd.s32 1, %s12
  $region7: #{temporal_cnn_forward.2} parent=0 // loop_footer_branch
    %11 = sbr.rel target = $region3
  $region8: #{temporal_cnn_forward.2} parent=0 // loop_exit
    _

// kernel: temporal_cnn_forward.3
$region0: #{temporal_cnn_forward.3}
  #allocation0 [shape = 'u32[]', space=smem, size = 0x4, offset = 0x4, fixed_abs, tag = 'smem constant byte address 0x4 - core index']
  #allocation1 [shape = 'u32[144,128]{1,0:T(1,128)}', space=vmem, size = 0x12000, scoped, tag = 'internal scratch']
  %s0 = inlined_call_operand.vmem [shape: bf16[16,128], index: 0, kind: input, shape index: {}]
  %s1 = inlined_call_operand.vmem [shape: bf16[128,1024], index: 1, kind: input, shape index: {}]
  %s2 = inlined_call_operand.vmem [shape: bf16[256,1024], index: 2, kind: input, shape index: {}]
  %s3 = inlined_call_operand.vmem [shape: f32[1,1024], index: 3, kind: input, shape index: {}]
  %s4 = inlined_call_operand.vmem [shape: bf16[256,128], index: 4, kind: input, shape index: {}]
  %s5 = inlined_call_operand.vmem [shape: f32[1,128], index: 5, kind: input, shape index: {}]
  %s6 = inlined_call_operand.vmem [shape: f32[16,128], index: 6, kind: output, shape index: {}]
  %s7 = sld [smem:[#allocation0]]
  $region34: #{temporal_cnn_forward.3} parent=0
    _
  %s9 = ssub.s32 1, %s7
  %s10 = scalar_select 0, %s9, %s7
  // Predicated region
  $region2: #{temporal_cnn_forward.3} parent=0 // pred_check
    _
  $region3: #{temporal_cnn_forward.3} parent=0 // pred_check_branch
    %12 = sbr.rel (0) target = $region5
  $region4: #{temporal_cnn_forward.3} parent=0 // pred_region
    _
  $region5: #{temporal_cnn_forward.3} parent=0 // pred_fallthru
    _
  // Predicated region
  $region6: #{temporal_cnn_forward.3} parent=0 // pred_check
    _
  $region7: #{temporal_cnn_forward.3} parent=0 // pred_check_branch
    %14 = sbr.rel (0) target = $region9
  $region8: #{temporal_cnn_forward.3} parent=0 // pred_region
    _
  $region9: #{temporal_cnn_forward.3} parent=0 // pred_fallthru
    _
  // Predicated region
  $region10: #{temporal_cnn_forward.3} parent=0 // pred_check
    _
  $region11: #{temporal_cnn_forward.3} parent=0 // pred_check_branch
    %16 = sbr.rel (0) target = $region13
  $region12: #{temporal_cnn_forward.3} parent=0 // pred_region
    _
  $region13: #{temporal_cnn_forward.3} parent=0 // pred_fallthru
    _
  // Predicated region
  $region14: #{temporal_cnn_forward.3} parent=0 // pred_check
    _
  $region15: #{temporal_cnn_forward.3} parent=0 // pred_check_branch
    %18 = sbr.rel (0) target = $region17
  $region16: #{temporal_cnn_forward.3} parent=0 // pred_region
    _
  $region17: #{temporal_cnn_forward.3} parent=0 // pred_fallthru
    _
  // Predicated region
  $region18: #{temporal_cnn_forward.3} parent=0 // pred_check
    _
  $region19: #{temporal_cnn_forward.3} parent=0 // pred_check_branch
    %20 = sbr.rel (0) target = $region21
  $region20: #{temporal_cnn_forward.3} parent=0 // pred_region
    _
  $region21: #{temporal_cnn_forward.3} parent=0 // pred_fallthru
    _
  // Predicated region
  $region22: #{temporal_cnn_forward.3} parent=0 // pred_check
    _
  $region23: #{temporal_cnn_forward.3} parent=0 // pred_check_branch
    %22 = sbr.rel (0) target = $region25
  $region24: #{temporal_cnn_forward.3} parent=0 // pred_region
    _
  $region25: #{temporal_cnn_forward.3} parent=0 // pred_fallthru
    _
  %v24 = vld [vmem:[%s0] sm:$0xf]
  %v25 = vld [vmem:[%s0 + $0x4] sm:$0xf]
  %v26 = vld [vmem:[%s1] sm:$0xff]
  %v27 = vld [vmem:[%s1 + $0x8] sm:$0xff]
  %v28 = vld [vmem:[%s1 + $0x10] sm:$0xff]
  %v29 = vld [vmem:[%s1 + $0x18] sm:$0xff]
  %v30 = vld [vmem:[%s1 + $0x20] sm:$0xff]
  %v31 = vld [vmem:[%s1 + $0x28] sm:$0xff]
  %v32 = vld [vmem:[%s1 + $0x30] sm:$0xff]
  %v33 = vld [vmem:[%s1 + $0x38] sm:$0xff]
  %v34 = vld [vmem:[%s1 + $0x40] sm:$0xff]
  %v35 = vld [vmem:[%s1 + $0x48] sm:$0xff]
  %v36 = vld [vmem:[%s1 + $0x50] sm:$0xff]
  %v37 = vld [vmem:[%s1 + $0x58] sm:$0xff]
  %v38 = vld [vmem:[%s1 + $0x60] sm:$0xff]
  %v39 = vld [vmem:[%s1 + $0x68] sm:$0xff]
  %v40 = vld [vmem:[%s1 + $0x70] sm:$0xff]
  %v41 = vld [vmem:[%s1 + $0x78] sm:$0xff]
  %v42 = vld [vmem:[%s1 + $0x80] sm:$0xff]
  %v43 = vld [vmem:[%s1 + $0x88] sm:$0xff]
  %v44 = vld [vmem:[%s1 + $0x90] sm:$0xff]
  %v45 = vld [vmem:[%s1 + $0x98] sm:$0xff]
  %v46 = vld [vmem:[%s1 + $0xa0] sm:$0xff]
  %v47 = vld [vmem:[%s1 + $0xa8] sm:$0xff]
  %v48 = vld [vmem:[%s1 + $0xb0] sm:$0xff]
  %v49 = vld [vmem:[%s1 + $0xb8] sm:$0xff]
  %v50 = vld [vmem:[%s1 + $0xc0] sm:$0xff]
  %v51 = vld [vmem:[%s1 + $0xc8] sm:$0xff]
  %v52 = vld [vmem:[%s1 + $0xd0] sm:$0xff]
  %v53 = vld [vmem:[%s1 + $0xd8] sm:$0xff]
  %v54 = vld [vmem:[%s1 + $0xe0] sm:$0xff]
  %v55 = vld [vmem:[%s1 + $0xe8] sm:$0xff]
  %v56 = vld [vmem:[%s1 + $0xf0] sm:$0xff]
  %v57 = vld [vmem:[%s1 + $0xf8] sm:$0xff]
  %v58 = vld [vmem:[%s1 + $0x100] sm:$0xff]
  %v59 = vld [vmem:[%s1 + $0x108] sm:$0xff]
  %v60 = vld [vmem:[%s1 + $0x110] sm:$0xff]
  %v61 = vld [vmem:[%s1 + $0x118] sm:$0xff]
  %v62 = vld [vmem:[%s1 + $0x120] sm:$0xff]
  %v63 = vld [vmem:[%s1 + $0x128] sm:$0xff]
  %v64 = vld [vmem:[%s1 + $0x130] sm:$0xff]
  %v65 = vld [vmem:[%s1 + $0x138] sm:$0xff]
  %v66 = vld [vmem:[%s1 + $0x140] sm:$0xff]
  %v67 = vld [vmem:[%s1 + $0x148] sm:$0xff]
  %v68 = vld [vmem:[%s1 + $0x150] sm:$0xff]
  %v69 = vld [vmem:[%s1 + $0x158] sm:$0xff]
  %v70 = vld [vmem:[%s1 + $0x160] sm:$0xff]
  %v71 = vld [vmem:[%s1 + $0x168] sm:$0xff]
  %v72 = vld [vmem:[%s1 + $0x170] sm:$0xff]
  %v73 = vld [vmem:[%s1 + $0x178] sm:$0xff]
  %v74 = vld [vmem:[%s1 + $0x180] sm:$0xff]
  %v75 = vld [vmem:[%s1 + $0x188] sm:$0xff]
  %v76 = vld [vmem:[%s1 + $0x190] sm:$0xff]
  %v77 = vld [vmem:[%s1 + $0x198] sm:$0xff]
  %v78 = vld [vmem:[%s1 + $0x1a0] sm:$0xff]
  %v79 = vld [vmem:[%s1 + $0x1a8] sm:$0xff]
  %v80 = vld [vmem:[%s1 + $0x1b0] sm:$0xff]
  %v81 = vld [vmem:[%s1 + $0x1b8] sm:$0xff]
  %v82 = vld [vmem:[%s1 + $0x1c0] sm:$0xff]
  %v83 = vld [vmem:[%s1 + $0x1c8] sm:$0xff]
  %v84 = vld [vmem:[%s1 + $0x1d0] sm:$0xff]
  %v85 = vld [vmem:[%s1 + $0x1d8] sm:$0xff]
  %v86 = vld [vmem:[%s1 + $0x1e0] sm:$0xff]
  %v87 = vld [vmem:[%s1 + $0x1e8] sm:$0xff]
  %v88 = vld [vmem:[%s1 + $0x1f0] sm:$0xff]
  %v89 = vld [vmem:[%s1 + $0x1f8] sm:$0xff]
  %v90 = vld [vmem:[%s3] sm:$0xff]
  %v92 = vlaneseq
  %v93 = vshrl.u32 %v92, 7
  %v94 = vsub.s32 0, %v93
  %v95 = vrot.slane %v90, %v94
  %v96 = vlaneseq
  %v97 = vshrl.u32 %v96, 7
  %v98 = vsub.s32 1, %v97
  %v99 = vrot.slane %v90, %v98
  %v100 = vlaneseq
  %v101 = vshrl.u32 %v100, 7
  %v102 = vsub.s32 2, %v101
  %v103 = vrot.slane %v90, %v102
  %v104 = vlaneseq
  %v105 = vshrl.u32 %v104, 7
  %v106 = vsub.s32 3, %v105
  %v107 = vrot.slane %v90, %v106
  %v108 = vlaneseq
  %v109 = vshrl.u32 %v108, 7
  %v110 = vsub.s32 4, %v109
  %v111 = vrot.slane %v90, %v110
  %v112 = vlaneseq
  %v113 = vshrl.u32 %v112, 7
  %v114 = vsub.s32 5, %v113
  %v115 = vrot.slane %v90, %v114
  %v116 = vlaneseq
  %v117 = vshrl.u32 %v116, 7
  %v118 = vsub.s32 6, %v117
  %v119 = vrot.slane %v90, %v118
  %v120 = vlaneseq
  %v121 = vshrl.u32 %v120, 7
  %v122 = vsub.s32 7, %v121
  %v123 = vrot.slane %v90, %v122
  %v134 = vunpack.c.l.b16 %v24
  %v135 = vunpack.c.l.b16 %v25
  %v136 = vpack.c.b16 %v135, %v134
  %v202 = vunpack.c.l.b16 %v26
  %v203 = vunpack.c.h.b16 %v26
  %v204 = vunpack.c.l.b16 %v27
  %v205 = vunpack.c.h.b16 %v27
  %v206 = vunpack.c.l.b16 %v28
  %v207 = vunpack.c.h.b16 %v28
  %v208 = vunpack.c.l.b16 %v29
  %v209 = vunpack.c.h.b16 %v29
  %v210 = vunpack.c.l.b16 %v30
  %v211 = vunpack.c.h.b16 %v30
  %v212 = vunpack.c.l.b16 %v31
  %v213 = vunpack.c.h.b16 %v31
  %v214 = vunpack.c.l.b16 %v32
  %v215 = vunpack.c.h.b16 %v32
  %v216 = vunpack.c.l.b16 %v33
  %v217 = vunpack.c.h.b16 %v33
  %v218 = vunpack.c.l.b16 %v34
  %v219 = vunpack.c.h.b16 %v34
  %v220 = vunpack.c.l.b16 %v35
  %v221 = vunpack.c.h.b16 %v35
  %v222 = vunpack.c.l.b16 %v36
  %v223 = vunpack.c.h.b16 %v36
  %v224 = vunpack.c.l.b16 %v37
  %v225 = vunpack.c.h.b16 %v37
  %v226 = vunpack.c.l.b16 %v38
  %v227 = vunpack.c.h.b16 %v38
  %v228 = vunpack.c.l.b16 %v39
  %v229 = vunpack.c.h.b16 %v39
  %v230 = vunpack.c.l.b16 %v40
  %v231 = vunpack.c.h.b16 %v40
  %v232 = vunpack.c.l.b16 %v41
  %v233 = vunpack.c.h.b16 %v41
  %v234 = vunpack.c.l.b16 %v42
  %v235 = vunpack.c.h.b16 %v42
  %v236 = vunpack.c.l.b16 %v43
  %v237 = vunpack.c.h.b16 %v43
  %v238 = vunpack.c.l.b16 %v44
  %v239 = vunpack.c.h.b16 %v44
  %v240 = vunpack.c.l.b16 %v45
  %v241 = vunpack.c.h.b16 %v45
  %v242 = vunpack.c.l.b16 %v46
  %v243 = vunpack.c.h.b16 %v46
  %v244 = vunpack.c.l.b16 %v47
  %v245 = vunpack.c.h.b16 %v47
  %v246 = vunpack.c.l.b16 %v48
  %v247 = vunpack.c.h.b16 %v48
  %v248 = vunpack.c.l.b16 %v49
  %v249 = vunpack.c.h.b16 %v49
  %v250 = vunpack.c.l.b16 %v50
  %v251 = vunpack.c.h.b16 %v50
  %v252 = vunpack.c.l.b16 %v51
  %v253 = vunpack.c.h.b16 %v51
  %v254 = vunpack.c.l.b16 %v52
  %v255 = vunpack.c.h.b16 %v52
  %v256 = vunpack.c.l.b16 %v53
  %v257 = vunpack.c.h.b16 %v53
  %v258 = vunpack.c.l.b16 %v54
  %v259 = vunpack.c.h.b16 %v54
  %v260 = vunpack.c.l.b16 %v55
  %v261 = vunpack.c.h.b16 %v55
  %v262 = vunpack.c.l.b16 %v56
  %v263 = vunpack.c.h.b16 %v56
  %v264 = vunpack.c.l.b16 %v57
  %v265 = vunpack.c.h.b16 %v57
  %v266 = vunpack.c.l.b16 %v58
  %v267 = vunpack.c.h.b16 %v58
  %v268 = vunpack.c.l.b16 %v59
  %v269 = vunpack.c.h.b16 %v59
  %v270 = vunpack.c.l.b16 %v60
  %v271 = vunpack.c.h.b16 %v60
  %v272 = vunpack.c.l.b16 %v61
  %v273 = vunpack.c.h.b16 %v61
  %v274 = vunpack.c.l.b16 %v62
  %v275 = vunpack.c.h.b16 %v62
  %v276 = vunpack.c.l.b16 %v63
  %v277 = vunpack.c.h.b16 %v63
  %v278 = vunpack.c.l.b16 %v64
  %v279 = vunpack.c.h.b16 %v64
  %v280 = vunpack.c.l.b16 %v65
  %v281 = vunpack.c.h.b16 %v65
  %v282 = vunpack.c.l.b16 %v66
  %v283 = vunpack.c.h.b16 %v66
  %v284 = vunpack.c.l.b16 %v67
  %v285 = vunpack.c.h.b16 %v67
  %v286 = vunpack.c.l.b16 %v68
  %v287 = vunpack.c.h.b16 %v68
  %v288 = vunpack.c.l.b16 %v69
  %v289 = vunpack.c.h.b16 %v69
  %v290 = vunpack.c.l.b16 %v70
  %v291 = vunpack.c.h.b16 %v70
  %v292 = vunpack.c.l.b16 %v71
  %v293 = vunpack.c.h.b16 %v71
  %v294 = vunpack.c.l.b16 %v72
  %v295 = vunpack.c.h.b16 %v72
  %v296 = vunpack.c.l.b16 %v73
  %v297 = vunpack.c.h.b16 %v73
  %v298 = vunpack.c.l.b16 %v74
  %v299 = vunpack.c.h.b16 %v74
  %v300 = vunpack.c.l.b16 %v75
  %v301 = vunpack.c.h.b16 %v75
  %v302 = vunpack.c.l.b16 %v76
  %v303 = vunpack.c.h.b16 %v76
  %v304 = vunpack.c.l.b16 %v77
  %v305 = vunpack.c.h.b16 %v77
  %v306 = vunpack.c.l.b16 %v78
  %v307 = vunpack.c.h.b16 %v78
  %v308 = vunpack.c.l.b16 %v79
  %v309 = vunpack.c.h.b16 %v79
  %v310 = vunpack.c.l.b16 %v80
  %v311 = vunpack.c.h.b16 %v80
  %v312 = vunpack.c.l.b16 %v81
  %v313 = vunpack.c.h.b16 %v81
  %v314 = vunpack.c.l.b16 %v82
  %v315 = vunpack.c.h.b16 %v82
  %v316 = vunpack.c.l.b16 %v83
  %v317 = vunpack.c.h.b16 %v83
  %v318 = vunpack.c.l.b16 %v84
  %v319 = vunpack.c.h.b16 %v84
  %v320 = vunpack.c.l.b16 %v85
  %v321 = vunpack.c.h.b16 %v85
  %v322 = vunpack.c.l.b16 %v86
  %v323 = vunpack.c.h.b16 %v86
  %v324 = vunpack.c.l.b16 %v87
  %v325 = vunpack.c.h.b16 %v87
  %v326 = vunpack.c.l.b16 %v88
  %v327 = vunpack.c.h.b16 %v88
  %v328 = vunpack.c.l.b16 %v89
  %v329 = vunpack.c.h.b16 %v89
  %v330 = vpack.c.b16 %v210, %v202
  %v331 = vpack.c.b16 %v211, %v203
  %v332 = vpack.c.b16 %v212, %v204
  %v333 = vpack.c.b16 %v213, %v205
  %v334 = vpack.c.b16 %v214, %v206
  %v335 = vpack.c.b16 %v215, %v207
  %v336 = vpack.c.b16 %v216, %v208
  %v337 = vpack.c.b16 %v217, %v209
  %v338 = vpack.c.b16 %v226, %v218
  %v339 = vpack.c.b16 %v227, %v219
  %v340 = vpack.c.b16 %v228, %v220
  %v341 = vpack.c.b16 %v229, %v221
  %v342 = vpack.c.b16 %v230, %v222
  %v343 = vpack.c.b16 %v231, %v223
  %v344 = vpack.c.b16 %v232, %v224
  %v345 = vpack.c.b16 %v233, %v225
  %v346 = vpack.c.b16 %v242, %v234
  %v347 = vpack.c.b16 %v243, %v235
  %v348 = vpack.c.b16 %v244, %v236
  %v349 = vpack.c.b16 %v245, %v237
  %v350 = vpack.c.b16 %v246, %v238
  %v351 = vpack.c.b16 %v247, %v239
  %v352 = vpack.c.b16 %v248, %v240
  %v353 = vpack.c.b16 %v249, %v241
  %v354 = vpack.c.b16 %v258, %v250
  %v355 = vpack.c.b16 %v259, %v251
  %v356 = vpack.c.b16 %v260, %v252
  %v357 = vpack.c.b16 %v261, %v253
  %v358 = vpack.c.b16 %v262, %v254
  %v359 = vpack.c.b16 %v263, %v255
  %v360 = vpack.c.b16 %v264, %v256
  %v361 = vpack.c.b16 %v265, %v257
  %v362 = vpack.c.b16 %v274, %v266
  %v363 = vpack.c.b16 %v275, %v267
  %v364 = vpack.c.b16 %v276, %v268
  %v365 = vpack.c.b16 %v277, %v269
  %v366 = vpack.c.b16 %v278, %v270
  %v367 = vpack.c.b16 %v279, %v271
  %v368 = vpack.c.b16 %v280, %v272
  %v369 = vpack.c.b16 %v281, %v273
  %v370 = vpack.c.b16 %v290, %v282
  %v371 = vpack.c.b16 %v291, %v283
  %v372 = vpack.c.b16 %v292, %v284
  %v373 = vpack.c.b16 %v293, %v285
  %v374 = vpack.c.b16 %v294, %v286
  %v375 = vpack.c.b16 %v295, %v287
  %v376 = vpack.c.b16 %v296, %v288
  %v377 = vpack.c.b16 %v297, %v289
  %v378 = vpack.c.b16 %v306, %v298
  %v379 = vpack.c.b16 %v307, %v299
  %v380 = vpack.c.b16 %v308, %v300
  %v381 = vpack.c.b16 %v309, %v301
  %v382 = vpack.c.b16 %v310, %v302
  %v383 = vpack.c.b16 %v311, %v303
  %v384 = vpack.c.b16 %v312, %v304
  %v385 = vpack.c.b16 %v313, %v305
  %v386 = vpack.c.b16 %v322, %v314
  %v387 = vpack.c.b16 %v323, %v315
  %v388 = vpack.c.b16 %v324, %v316
  %v389 = vpack.c.b16 %v325, %v317
  %v390 = vpack.c.b16 %v326, %v318
  %v391 = vpack.c.b16 %v327, %v319
  %v392 = vpack.c.b16 %v328, %v320
  %v393 = vpack.c.b16 %v329, %v321
  %458 = vmatprep.subr.bf16.mxu0 %v331
  %459 = vmatpush1.bf16.msra.mxu0 %v330
  %460 = vmatprep.subr.bf16.mxu0 %v339
  %461 = vmatpush1.bf16.msra.mxu0 %v338
  %462 = vmatprep.subr.bf16.mxu0 %v347
  %463 = vmatpush1.bf16.msra.mxu0 %v346
  %464 = vmatprep.subr.bf16.mxu0 %v355
  %465 = vmatpush1.bf16.msra.mxu0 %v354
  %466 = vmatprep.subr.bf16.mxu0 %v363
  %467 = vmatpush1.bf16.msra.mxu0 %v362
  %468 = vmatprep.subr.bf16.mxu0 %v371
  %469 = vmatpush1.bf16.msra.mxu0 %v370
  %470 = vmatprep.subr.bf16.mxu0 %v379
  %471 = vmatpush1.bf16.msra.mxu0 %v378
  %472 = vmatprep.subr.bf16.mxu0 %v387
  %473 = vmatpush1.bf16.msra.mxu0 %v386
  %474 = vmatprep.subr.bf16.mxu0 0
  %475 = vmatpush1.bf16.msra.mxu0 0
  %476 = vmatprep.subr.bf16.mxu0 0
  %477 = vmatpush1.bf16.msra.mxu0 0
  %478 = vmatprep.subr.bf16.mxu0 0
  %479 = vmatpush1.bf16.msra.mxu0 0
  %480 = vmatprep.subr.bf16.mxu0 0
  %481 = vmatpush1.bf16.msra.mxu0 0
  %482 = vmatprep.subr.bf16.mxu0 0
  %483 = vmatpush1.bf16.msra.mxu0 0
  %484 = vmatprep.subr.bf16.mxu0 0
  %485 = vmatpush1.bf16.msra.mxu0 0
  %486 = vmatprep.subr.bf16.mxu0 0
  %487 = vmatpush1.bf16.msra.mxu0 0
  %488 = vmatprep.subr.bf16.mxu0 0
  %489 = vmatpush1.bf16.msra.mxu0 0
  %490 = vmatprep.mubr.bf16.mxu0 0
  %491 = vmatmul.mubr.bf16.gmra.mrb[0].mxu0 %v136
  %v492 = vpop.f32.mrb[0].mxu0
  %v493 = vadd.f32 %v95, %v492
  %v494 = vpop.f32.mrb[0].mxu0
  %v495 = vadd.f32 %v99, %v494
  %v496 = vpop.f32.mrb[0].mxu0
  %v497 = vadd.f32 %v95, %v496
  %v498 = vpop.f32.mrb[0].mxu0
  %v499 = vadd.f32 %v99, %v498
  %500 = vdwg.mxu0
  %501 = vmatprep.subr.bf16.mxu0 %v333
  %502 = vmatpush1.bf16.msra.mxu0 %v332
  %503 = vmatprep.subr.bf16.mxu0 %v341
  %504 = vmatpush1.bf16.msra.mxu0 %v340
  %505 = vmatprep.subr.bf16.mxu0 %v349
  %506 = vmatpush1.bf16.msra.mxu0 %v348
  %507 = vmatprep.subr.bf16.mxu0 %v357
  %508 = vmatpush1.bf16.msra.mxu0 %v356
  %509 = vmatprep.subr.bf16.mxu0 %v365
  %510 = vmatpush1.bf16.msra.mxu0 %v364
  %511 = vmatprep.subr.bf16.mxu0 %v373
  %512 = vmatpush1.bf16.msra.mxu0 %v372
  %513 = vmatprep.subr.bf16.mxu0 %v381
  %514 = vmatpush1.bf16.msra.mxu0 %v380
  %515 = vmatprep.subr.bf16.mxu0 %v389
  %516 = vmatpush1.bf16.msra.mxu0 %v388
  %517 = vmatprep.subr.bf16.mxu0 0
  %518 = vmatpush1.bf16.msra.mxu0 0
  %519 = vmatprep.subr.bf16.mxu0 0
  %520 = vmatpush1.bf16.msra.mxu0 0
  %521 = vmatprep.subr.bf16.mxu0 0
  %522 = vmatpush1.bf16.msra.mxu0 0
  %523 = vmatprep.subr.bf16.mxu0 0
  %524 = vmatpush1.bf16.msra.mxu0 0
  %525 = vmatprep.subr.bf16.mxu0 0
  %526 = vmatpush1.bf16.msra.mxu0 0
  %527 = vmatprep.subr.bf16.mxu0 0
  %528 = vmatpush1.bf16.msra.mxu0 0
  %529 = vmatprep.subr.bf16.mxu0 0
  %530 = vmatpush1.bf16.msra.mxu0 0
  %531 = vmatprep.subr.bf16.mxu0 0
  %532 = vmatpush1.bf16.msra.mxu0 0
  %533 = vmatprep.mubr.bf16.mxu0 0
  %534 = vmatmul.mubr.bf16.gmra.mrb[0].mxu0 %v136
  %v535 = vpop.f32.mrb[0].mxu0
  %v536 = vadd.f32 %v103, %v535
  %v537 = vpop.f32.mrb[0].mxu0
  %v538 = vadd.f32 %v107, %v537
  %v539 = vpop.f32.mrb[0].mxu0
  %v540 = vadd.f32 %v103, %v539
  %v541 = vpop.f32.mrb[0].mxu0
  %v542 = vadd.f32 %v107, %v541
  %543 = vdwg.mxu0
  %544 = vmatprep.subr.bf16.mxu0 %v335
  %545 = vmatpush1.bf16.msra.mxu0 %v334
  %546 = vmatprep.subr.bf16.mxu0 %v343
  %547 = vmatpush1.bf16.msra.mxu0 %v342
  %548 = vmatprep.subr.bf16.mxu0 %v351
  %549 = vmatpush1.bf16.msra.mxu0 %v350
  %550 = vmatprep.subr.bf16.mxu0 %v359
  %551 = vmatpush1.bf16.msra.mxu0 %v358
  %552 = vmatprep.subr.bf16.mxu0 %v367
  %553 = vmatpush1.bf16.msra.mxu0 %v366
  %554 = vmatprep.subr.bf16.mxu0 %v375
  %555 = vmatpush1.bf16.msra.mxu0 %v374
  %556 = vmatprep.subr.bf16.mxu0 %v383
  %557 = vmatpush1.bf16.msra.mxu0 %v382
  %558 = vmatprep.subr.bf16.mxu0 %v391
  %559 = vmatpush1.bf16.msra.mxu0 %v390
  %560 = vmatprep.subr.bf16.mxu0 0
  %561 = vmatpush1.bf16.msra.mxu0 0
  %562 = vmatprep.subr.bf16.mxu0 0
  %563 = vmatpush1.bf16.msra.mxu0 0
  %564 = vmatprep.subr.bf16.mxu0 0
  %565 = vmatpush1.bf16.msra.mxu0 0
  %566 = vmatprep.subr.bf16.mxu0 0
  %567 = vmatpush1.bf16.msra.mxu0 0
  %568 = vmatprep.subr.bf16.mxu0 0
  %569 = vmatpush1.bf16.msra.mxu0 0
  %570 = vmatprep.subr.bf16.mxu0 0
  %571 = vmatpush1.bf16.msra.mxu0 0
  %572 = vmatprep.subr.bf16.mxu0 0
  %573 = vmatpush1.bf16.msra.mxu0 0
  %574 = vmatprep.subr.bf16.mxu0 0
  %575 = vmatpush1.bf16.msra.mxu0 0
  %576 = vmatprep.mubr.bf16.mxu0 0
  %577 = vmatmul.mubr.bf16.gmra.mrb[0].mxu0 %v136
  %v578 = vpop.f32.mrb[0].mxu0
  %v579 = vadd.f32 %v111, %v578
  %v580 = vpop.f32.mrb[0].mxu0
  %v581 = vadd.f32 %v115, %v580
  %v582 = vpop.f32.mrb[0].mxu0
  %v583 = vadd.f32 %v111, %v582
  %v584 = vpop.f32.mrb[0].mxu0
  %v585 = vadd.f32 %v115, %v584
  %586 = vdwg.mxu0
  %587 = vmatprep.subr.bf16.mxu0 %v337
  %588 = vmatpush1.bf16.msra.mxu0 %v336
  %589 = vmatprep.subr.bf16.mxu0 %v345
  %590 = vmatpush1.bf16.msra.mxu0 %v344
  %591 = vmatprep.subr.bf16.mxu0 %v353
  %592 = vmatpush1.bf16.msra.mxu0 %v352
  %593 = vmatprep.subr.bf16.mxu0 %v361
  %594 = vmatpush1.bf16.msra.mxu0 %v360
  %595 = vmatprep.subr.bf16.mxu0 %v369
  %596 = vmatpush1.bf16.msra.mxu0 %v368
  %597 = vmatprep.subr.bf16.mxu0 %v377
  %598 = vmatpush1.bf16.msra.mxu0 %v376
  %599 = vmatprep.subr.bf16.mxu0 %v385
  %600 = vmatpush1.bf16.msra.mxu0 %v384
  %601 = vmatprep.subr.bf16.mxu0 %v393
  %602 = vmatpush1.bf16.msra.mxu0 %v392
  %603 = vmatprep.subr.bf16.mxu0 0
  %604 = vmatpush1.bf16.msra.mxu0 0
  %605 = vmatprep.subr.bf16.mxu0 0
  %606 = vmatpush1.bf16.msra.mxu0 0
  %607 = vmatprep.subr.bf16.mxu0 0
  %608 = vmatpush1.bf16.msra.mxu0 0
  %609 = vmatprep.subr.bf16.mxu0 0
  %610 = vmatpush1.bf16.msra.mxu0 0
  %611 = vmatprep.subr.bf16.mxu0 0
  %612 = vmatpush1.bf16.msra.mxu0 0
  %613 = vmatprep.subr.bf16.mxu0 0
  %614 = vmatpush1.bf16.msra.mxu0 0
  %615 = vmatprep.subr.bf16.mxu0 0
  %616 = vmatpush1.bf16.msra.mxu0 0
  %617 = vmatprep.subr.bf16.mxu0 0
  %618 = vmatpush1.bf16.msra.mxu0 0
  %619 = vmatprep.mubr.bf16.mxu0 0
  %620 = vmatmul.mubr.bf16.gmra.mrb[0].mxu0 %v136
  %v621 = vpop.f32.mrb[0].mxu0
  %v622 = vadd.f32 %v119, %v621
  %v623 = vpop.f32.mrb[0].mxu0
  %v624 = vadd.f32 %v123, %v623
  %v625 = vpop.f32.mrb[0].mxu0
  %v626 = vadd.f32 %v119, %v625
  %v627 = vpop.f32.mrb[0].mxu0
  %v628 = vadd.f32 %v123, %v627
  %629 = vdwg.mxu0
  %v630 = vld [vmem:[%s2] sm:$0xff]
  %v631 = vld [vmem:[%s2 + $0x8] sm:$0xff]
  %v632 = vld [vmem:[%s2 + $0x10] sm:$0xff]
  %v633 = vld [vmem:[%s2 + $0x18] sm:$0xff]
  %v634 = vld [vmem:[%s2 + $0x20] sm:$0xff]
  %v635 = vld [vmem:[%s2 + $0x28] sm:$0xff]
  %v636 = vld [vmem:[%s2 + $0x30] sm:$0xff]
  %v637 = vld [vmem:[%s2 + $0x38] sm:$0xff]
  %v638 = vld [vmem:[%s2 + $0x40] sm:$0xff]
  %v639 = vld [vmem:[%s2 + $0x48] sm:$0xff]
  %v640 = vld [vmem:[%s2 + $0x50] sm:$0xff]
  %v641 = vld [vmem:[%s2 + $0x58] sm:$0xff]
  %v642 = vld [vmem:[%s2 + $0x60] sm:$0xff]
  %v643 = vld [vmem:[%s2 + $0x68] sm:$0xff]
  %v644 = vld [vmem:[%s2 + $0x70] sm:$0xff]
  %v645 = vld [vmem:[%s2 + $0x78] sm:$0xff]
  %v646 = vld [vmem:[%s2 + $0x80] sm:$0xff]
  %v647 = vld [vmem:[%s2 + $0x88] sm:$0xff]
  %v648 = vld [vmem:[%s2 + $0x90] sm:$0xff]
  %v649 = vld [vmem:[%s2 + $0x98] sm:$0xff]
  %v650 = vld [vmem:[%s2 + $0xa0] sm:$0xff]
  %v651 = vld [vmem:[%s2 + $0xa8] sm:$0xff]
  %v652 = vld [vmem:[%s2 + $0xb0] sm:$0xff]
  %v653 = vld [vmem:[%s2 + $0xb8] sm:$0xff]
  %v654 = vld [vmem:[%s2 + $0xc0] sm:$0xff]
  %v655 = vld [vmem:[%s2 + $0xc8] sm:$0xff]
  %v656 = vld [vmem:[%s2 + $0xd0] sm:$0xff]
  %v657 = vld [vmem:[%s2 + $0xd8] sm:$0xff]
  %v658 = vld [vmem:[%s2 + $0xe0] sm:$0xff]
  %v659 = vld [vmem:[%s2 + $0xe8] sm:$0xff]
  %v660 = vld [vmem:[%s2 + $0xf0] sm:$0xff]
  %v661 = vld [vmem:[%s2 + $0xf8] sm:$0xff]
  %v662 = vld [vmem:[%s2 + $0x100] sm:$0xff]
  %v663 = vld [vmem:[%s2 + $0x108] sm:$0xff]
  %v664 = vld [vmem:[%s2 + $0x110] sm:$0xff]
  %v665 = vld [vmem:[%s2 + $0x118] sm:$0xff]
  %v666 = vld [vmem:[%s2 + $0x120] sm:$0xff]
  %v667 = vld [vmem:[%s2 + $0x128] sm:$0xff]
  %v668 = vld [vmem:[%s2 + $0x130] sm:$0xff]
  %v669 = vld [vmem:[%s2 + $0x138] sm:$0xff]
  %v670 = vld [vmem:[%s2 + $0x140] sm:$0xff]
  %v671 = vld [vmem:[%s2 + $0x148] sm:$0xff]
  %v672 = vld [vmem:[%s2 + $0x150] sm:$0xff]
  %v673 = vld [vmem:[%s2 + $0x158] sm:$0xff]
  %v674 = vld [vmem:[%s2 + $0x160] sm:$0xff]
  %v675 = vld [vmem:[%s2 + $0x168] sm:$0xff]
  %v676 = vld [vmem:[%s2 + $0x170] sm:$0xff]
  %v677 = vld [vmem:[%s2 + $0x178] sm:$0xff]
  %v678 = vld [vmem:[%s2 + $0x180] sm:$0xff]
  %v679 = vld [vmem:[%s2 + $0x188] sm:$0xff]
  %v680 = vld [vmem:[%s2 + $0x190] sm:$0xff]
  %v681 = vld [vmem:[%s2 + $0x198] sm:$0xff]
  %v682 = vld [vmem:[%s2 + $0x1a0] sm:$0xff]
  %v683 = vld [vmem:[%s2 + $0x1a8] sm:$0xff]
  %v684 = vld [vmem:[%s2 + $0x1b0] sm:$0xff]
  %v685 = vld [vmem:[%s2 + $0x1b8] sm:$0xff]
  %v686 = vld [vmem:[%s2 + $0x1c0] sm:$0xff]
  %v687 = vld [vmem:[%s2 + $0x1c8] sm:$0xff]
  %v688 = vld [vmem:[%s2 + $0x1d0] sm:$0xff]
  %v689 = vld [vmem:[%s2 + $0x1d8] sm:$0xff]
  %v690 = vld [vmem:[%s2 + $0x1e0] sm:$0xff]
  %v691 = vld [vmem:[%s2 + $0x1e8] sm:$0xff]
  %v692 = vld [vmem:[%s2 + $0x1f0] sm:$0xff]
  %v693 = vld [vmem:[%s2 + $0x1f8] sm:$0xff]
  %v694 = vld [vmem:[%s2 + $0x200] sm:$0xff]
  %v695 = vld [vmem:[%s2 + $0x208] sm:$0xff]
  %v696 = vld [vmem:[%s2 + $0x210] sm:$0xff]
  %v697 = vld [vmem:[%s2 + $0x218] sm:$0xff]
  %v698 = vld [vmem:[%s2 + $0x220] sm:$0xff]
  %v699 = vld [vmem:[%s2 + $0x228] sm:$0xff]
  %v700 = vld [vmem:[%s2 + $0x230] sm:$0xff]
  %v701 = vld [vmem:[%s2 + $0x238] sm:$0xff]
  %v702 = vld [vmem:[%s2 + $0x240] sm:$0xff]
  %v703 = vld [vmem:[%s2 + $0x248] sm:$0xff]
  %v704 = vld [vmem:[%s2 + $0x250] sm:$0xff]
  %v705 = vld [vmem:[%s2 + $0x258] sm:$0xff]
  %v706 = vld [vmem:[%s2 + $0x260] sm:$0xff]
  %v707 = vld [vmem:[%s2 + $0x268] sm:$0xff]
  %v708 = vld [vmem:[%s2 + $0x270] sm:$0xff]
  %v709 = vld [vmem:[%s2 + $0x278] sm:$0xff]
  %v710 = vld [vmem:[%s2 + $0x280] sm:$0xff]
  %v711 = vld [vmem:[%s2 + $0x288] sm:$0xff]
  %v712 = vld [vmem:[%s2 + $0x290] sm:$0xff]
  %v713 = vld [vmem:[%s2 + $0x298] sm:$0xff]
  %v714 = vld [vmem:[%s2 + $0x2a0] sm:$0xff]
  %v715 = vld [vmem:[%s2 + $0x2a8] sm:$0xff]
  %v716 = vld [vmem:[%s2 + $0x2b0] sm:$0xff]
  %v717 = vld [vmem:[%s2 + $0x2b8] sm:$0xff]
  %v718 = vld [vmem:[%s2 + $0x2c0] sm:$0xff]
  %v719 = vld [vmem:[%s2 + $0x2c8] sm:$0xff]
  %v720 = vld [vmem:[%s2 + $0x2d0] sm:$0xff]
  %v721 = vld [vmem:[%s2 + $0x2d8] sm:$0xff]
  %v722 = vld [vmem:[%s2 + $0x2e0] sm:$0xff]
  %v723 = vld [vmem:[%s2 + $0x2e8] sm:$0xff]
  %v724 = vld [vmem:[%s2 + $0x2f0] sm:$0xff]
  %v725 = vld [vmem:[%s2 + $0x2f8] sm:$0xff]
  %v726 = vld [vmem:[%s2 + $0x300] sm:$0xff]
  %v727 = vld [vmem:[%s2 + $0x308] sm:$0xff]
  %v728 = vld [vmem:[%s2 + $0x310] sm:$0xff]
  %v729 = vld [vmem:[%s2 + $0x318] sm:$0xff]
  %v730 = vld [vmem:[%s2 + $0x320] sm:$0xff]
  %v731 = vld [vmem:[%s2 + $0x328] sm:$0xff]
  %v732 = vld [vmem:[%s2 + $0x330] sm:$0xff]
  %v733 = vld [vmem:[%s2 + $0x338] sm:$0xff]
  %v734 = vld [vmem:[%s2 + $0x340] sm:$0xff]
  %v735 = vld [vmem:[%s2 + $0x348] sm:$0xff]
  %v736 = vld [vmem:[%s2 + $0x350] sm:$0xff]
  %v737 = vld [vmem:[%s2 + $0x358] sm:$0xff]
  %v738 = vld [vmem:[%s2 + $0x360] sm:$0xff]
  %v739 = vld [vmem:[%s2 + $0x368] sm:$0xff]
  %v740 = vld [vmem:[%s2 + $0x370] sm:$0xff]
  %v741 = vld [vmem:[%s2 + $0x378] sm:$0xff]
  %v742 = vld [vmem:[%s2 + $0x380] sm:$0xff]
  %v743 = vld [vmem:[%s2 + $0x388] sm:$0xff]
  %v744 = vld [vmem:[%s2 + $0x390] sm:$0xff]
  %v745 = vld [vmem:[%s2 + $0x398] sm:$0xff]
  %v746 = vld [vmem:[%s2 + $0x3a0] sm:$0xff]
  %v747 = vld [vmem:[%s2 + $0x3a8] sm:$0xff]
  %v748 = vld [vmem:[%s2 + $0x3b0] sm:$0xff]
  %v749 = vld [vmem:[%s2 + $0x3b8] sm:$0xff]
  %v750 = vld [vmem:[%s2 + $0x3c0] sm:$0xff]
  %v751 = vld [vmem:[%s2 + $0x3c8] sm:$0xff]
  %v752 = vld [vmem:[%s2 + $0x3d0] sm:$0xff]
  %v753 = vld [vmem:[%s2 + $0x3d8] sm:$0xff]
  %v754 = vld [vmem:[%s2 + $0x3e0] sm:$0xff]
  %v755 = vld [vmem:[%s2 + $0x3e8] sm:$0xff]
  %v756 = vld [vmem:[%s2 + $0x3f0] sm:$0xff]
  %v757 = vld [vmem:[%s2 + $0x3f8] sm:$0xff]
  %v886 = vunpack.c.l.b16 %v630
  %v887 = vunpack.c.h.b16 %v630
  %v888 = vunpack.c.l.b16 %v631
  %v889 = vunpack.c.h.b16 %v631
  %v890 = vunpack.c.l.b16 %v632
  %v891 = vunpack.c.h.b16 %v632
  %v892 = vunpack.c.l.b16 %v633
  %v893 = vunpack.c.h.b16 %v633
  %v894 = vunpack.c.l.b16 %v634
  %v895 = vunpack.c.h.b16 %v634
  %v896 = vunpack.c.l.b16 %v635
  %v897 = vunpack.c.h.b16 %v635
  %v898 = vunpack.c.l.b16 %v636
  %v899 = vunpack.c.h.b16 %v636
  %v900 = vunpack.c.l.b16 %v637
  %v901 = vunpack.c.h.b16 %v637
  %v902 = vunpack.c.l.b16 %v638
  %v903 = vunpack.c.h.b16 %v638
  %v904 = vunpack.c.l.b16 %v639
  %v905 = vunpack.c.h.b16 %v639
  %v906 = vunpack.c.l.b16 %v640
  %v907 = vunpack.c.h.b16 %v640
  %v908 = vunpack.c.l.b16 %v641
  %v909 = vunpack.c.h.b16 %v641
  %v910 = vunpack.c.l.b16 %v642
  %v911 = vunpack.c.h.b16 %v642
  %v912 = vunpack.c.l.b16 %v643
  %v913 = vunpack.c.h.b16 %v643
  %v914 = vunpack.c.l.b16 %v644
  %v915 = vunpack.c.h.b16 %v644
  %v916 = vunpack.c.l.b16 %v645
  %v917 = vunpack.c.h.b16 %v645
  %v918 = vunpack.c.l.b16 %v646
  %v919 = vunpack.c.h.b16 %v646
  %v920 = vunpack.c.l.b16 %v647
  %v921 = vunpack.c.h.b16 %v647
  %v922 = vunpack.c.l.b16 %v648
  %v923 = vunpack.c.h.b16 %v648
  %v924 = vunpack.c.l.b16 %v649
  %v925 = vunpack.c.h.b16 %v649
  %v926 = vunpack.c.l.b16 %v650
  %v927 = vunpack.c.h.b16 %v650
  %v928 = vunpack.c.l.b16 %v651
  %v929 = vunpack.c.h.b16 %v651
  %v930 = vunpack.c.l.b16 %v652
  %v931 = vunpack.c.h.b16 %v652
  %v932 = vunpack.c.l.b16 %v653
  %v933 = vunpack.c.h.b16 %v653
  %v934 = vunpack.c.l.b16 %v654
  %v935 = vunpack.c.h.b16 %v654
  %v936 = vunpack.c.l.b16 %v655
  %v937 = vunpack.c.h.b16 %v655
  %v938 = vunpack.c.l.b16 %v656
  %v939 = vunpack.c.h.b16 %v656
  %v940 = vunpack.c.l.b16 %v657
  %v941 = vunpack.c.h.b16 %v657
  %v942 = vunpack.c.l.b16 %v658
  %v943 = vunpack.c.h.b16 %v658
  %v944 = vunpack.c.l.b16 %v659
  %v945 = vunpack.c.h.b16 %v659
  %v946 = vunpack.c.l.b16 %v660
  %v947 = vunpack.c.h.b16 %v660
  %v948 = vunpack.c.l.b16 %v661
  %v949 = vunpack.c.h.b16 %v661
  %v950 = vunpack.c.l.b16 %v662
  %v951 = vunpack.c.h.b16 %v662
  %v952 = vunpack.c.l.b16 %v663
  %v953 = vunpack.c.h.b16 %v663
  %v954 = vunpack.c.l.b16 %v664
  %v955 = vunpack.c.h.b16 %v664
  %v956 = vunpack.c.l.b16 %v665
  %v957 = vunpack.c.h.b16 %v665
  %v958 = vunpack.c.l.b16 %v666
  %v959 = vunpack.c.h.b16 %v666
  %v960 = vunpack.c.l.b16 %v667
  %v961 = vunpack.c.h.b16 %v667
  %v962 = vunpack.c.l.b16 %v668
  %v963 = vunpack.c.h.b16 %v668
  %v964 = vunpack.c.l.b16 %v669
  %v965 = vunpack.c.h.b16 %v669
  %v966 = vunpack.c.l.b16 %v670
  %v967 = vunpack.c.h.b16 %v670
  %v968 = vunpack.c.l.b16 %v671
  %v969 = vunpack.c.h.b16 %v671
  %v970 = vunpack.c.l.b16 %v672
  %v971 = vunpack.c.h.b16 %v672
  %v972 = vunpack.c.l.b16 %v673
  %v973 = vunpack.c.h.b16 %v673
  %v974 = vunpack.c.l.b16 %v674
  %v975 = vunpack.c.h.b16 %v674
  %v976 = vunpack.c.l.b16 %v675
  %v977 = vunpack.c.h.b16 %v675
  %v978 = vunpack.c.l.b16 %v676
  %v979 = vunpack.c.h.b16 %v676
  %v980 = vunpack.c.l.b16 %v677
  %v981 = vunpack.c.h.b16 %v677
  %v982 = vunpack.c.l.b16 %v678
  %v983 = vunpack.c.h.b16 %v678
  %v984 = vunpack.c.l.b16 %v679
  %v985 = vunpack.c.h.b16 %v679
  %v986 = vunpack.c.l.b16 %v680
  %v987 = vunpack.c.h.b16 %v680
  %v988 = vunpack.c.l.b16 %v681
  %v989 = vunpack.c.h.b16 %v681
  %v990 = vunpack.c.l.b16 %v682
  %v991 = vunpack.c.h.b16 %v682
  %v992 = vunpack.c.l.b16 %v683
  %v993 = vunpack.c.h.b16 %v683
  %v994 = vunpack.c.l.b16 %v684
  %v995 = vunpack.c.h.b16 %v684
  %v996 = vunpack.c.l.b16 %v685
  %v997 = vunpack.c.h.b16 %v685
  %v998 = vunpack.c.l.b16 %v686
  %v999 = vunpack.c.h.b16 %v686
  %v1000 = vunpack.c.l.b16 %v687
  %v1001 = vunpack.c.h.b16 %v687
  %v1002 = vunpack.c.l.b16 %v688
  %v1003 = vunpack.c.h.b16 %v688
  %v1004 = vunpack.c.l.b16 %v689
  %v1005 = vunpack.c.h.b16 %v689
  %v1006 = vunpack.c.l.b16 %v690
  %v1007 = vunpack.c.h.b16 %v690
  %v1008 = vunpack.c.l.b16 %v691
  %v1009 = vunpack.c.h.b16 %v691
  %v1010 = vunpack.c.l.b16 %v692
  %v1011 = vunpack.c.h.b16 %v692
  %v1012 = vunpack.c.l.b16 %v693
  %v1013 = vunpack.c.h.b16 %v693
  %v1014 = vunpack.c.l.b16 %v694
  %v1015 = vunpack.c.h.b16 %v694
  %v1016 = vunpack.c.l.b16 %v695
  %v1017 = vunpack.c.h.b16 %v695
  %v1018 = vunpack.c.l.b16 %v696
  %v1019 = vunpack.c.h.b16 %v696
  %v1020 = vunpack.c.l.b16 %v697
  %v1021 = vunpack.c.h.b16 %v697
  %v1022 = vunpack.c.l.b16 %v698
  %v1023 = vunpack.c.h.b16 %v698
  %v1024 = vunpack.c.l.b16 %v699
  %v1025 = vunpack.c.h.b16 %v699
  %v1026 = vunpack.c.l.b16 %v700
  %v1027 = vunpack.c.h.b16 %v700
  %v1028 = vunpack.c.l.b16 %v701
  %v1029 = vunpack.c.h.b16 %v701
  %v1030 = vunpack.c.l.b16 %v702
  %v1031 = vunpack.c.h.b16 %v702
  %v1032 = vunpack.c.l.b16 %v703
  %v1033 = vunpack.c.h.b16 %v703
  %v1034 = vunpack.c.l.b16 %v704
  %v1035 = vunpack.c.h.b16 %v704
  %v1036 = vunpack.c.l.b16 %v705
  %v1037 = vunpack.c.h.b16 %v705
  %v1038 = vunpack.c.l.b16 %v706
  %v1039 = vunpack.c.h.b16 %v706
  %v1040 = vunpack.c.l.b16 %v707
  %v1041 = vunpack.c.h.b16 %v707
  %v1042 = vunpack.c.l.b16 %v708
  %v1043 = vunpack.c.h.b16 %v708
  %v1044 = vunpack.c.l.b16 %v709
  %v1045 = vunpack.c.h.b16 %v709
  %v1046 = vunpack.c.l.b16 %v710
  %v1047 = vunpack.c.h.b16 %v710
  %v1048 = vunpack.c.l.b16 %v711
  %v1049 = vunpack.c.h.b16 %v711
  %v1050 = vunpack.c.l.b16 %v712
  %v1051 = vunpack.c.h.b16 %v712
  %v1052 = vunpack.c.l.b16 %v713
  %v1053 = vunpack.c.h.b16 %v713
  %v1054 = vunpack.c.l.b16 %v714
  %v1055 = vunpack.c.h.b16 %v714
  %v1056 = vunpack.c.l.b16 %v715
  %v1057 = vunpack.c.h.b16 %v715
  %v1058 = vunpack.c.l.b16 %v716
  %v1059 = vunpack.c.h.b16 %v716
  %v1060 = vunpack.c.l.b16 %v717
  %v1061 = vunpack.c.h.b16 %v717
  %v1062 = vunpack.c.l.b16 %v718
  %v1063 = vunpack.c.h.b16 %v718
  %v1064 = vunpack.c.l.b16 %v719
  %v1065 = vunpack.c.h.b16 %v719
  %v1066 = vunpack.c.l.b16 %v720
  %v1067 = vunpack.c.h.b16 %v720
  %v1068 = vunpack.c.l.b16 %v721
  %v1069 = vunpack.c.h.b16 %v721
  %v1070 = vunpack.c.l.b16 %v722
  %v1071 = vunpack.c.h.b16 %v722
  %v1072 = vunpack.c.l.b16 %v723
  %v1073 = vunpack.c.h.b16 %v723
  %v1074 = vunpack.c.l.b16 %v724
  %v1075 = vunpack.c.h.b16 %v724
  %v1076 = vunpack.c.l.b16 %v725
  %v1077 = vunpack.c.h.b16 %v725
  %v1078 = vunpack.c.l.b16 %v726
  %v1079 = vunpack.c.h.b16 %v726
  %v1080 = vunpack.c.l.b16 %v727
  %v1081 = vunpack.c.h.b16 %v727
  %v1082 = vunpack.c.l.b16 %v728
  %v1083 = vunpack.c.h.b16 %v728
  %v1084 = vunpack.c.l.b16 %v729
  %v1085 = vunpack.c.h.b16 %v729
  %v1086 = vunpack.c.l.b16 %v730
  %v1087 = vunpack.c.h.b16 %v730
  %v1088 = vunpack.c.l.b16 %v731
  %v1089 = vunpack.c.h.b16 %v731
  %v1090 = vunpack.c.l.b16 %v732
  %v1091 = vunpack.c.h.b16 %v732
  %v1092 = vunpack.c.l.b16 %v733
  %v1093 = vunpack.c.h.b16 %v733
  %v1094 = vunpack.c.l.b16 %v734
  %v1095 = vunpack.c.h.b16 %v734
  %v1096 = vunpack.c.l.b16 %v735
  %v1097 = vunpack.c.h.b16 %v735
  %v1098 = vunpack.c.l.b16 %v736
  %v1099 = vunpack.c.h.b16 %v736
  %v1100 = vunpack.c.l.b16 %v737
  %v1101 = vunpack.c.h.b16 %v737
  %v1102 = vunpack.c.l.b16 %v738
  %v1103 = vunpack.c.h.b16 %v738
  %v1104 = vunpack.c.l.b16 %v739
  %v1105 = vunpack.c.h.b16 %v739
  %v1106 = vunpack.c.l.b16 %v740
  %v1107 = vunpack.c.h.b16 %v740
  %v1108 = vunpack.c.l.b16 %v741
  %v1109 = vunpack.c.h.b16 %v741
  %v1110 = vunpack.c.l.b16 %v742
  %v1111 = vunpack.c.h.b16 %v742
  %v1112 = vunpack.c.l.b16 %v743
  %v1113 = vunpack.c.h.b16 %v743
  %v1114 = vunpack.c.l.b16 %v744
  %v1115 = vunpack.c.h.b16 %v744
  %v1116 = vunpack.c.l.b16 %v745
  %v1117 = vunpack.c.h.b16 %v745
  %v1118 = vunpack.c.l.b16 %v746
  %v1119 = vunpack.c.h.b16 %v746
  %v1120 = vunpack.c.l.b16 %v747
  %v1121 = vunpack.c.h.b16 %v747
  %v1122 = vunpack.c.l.b16 %v748
  %v1123 = vunpack.c.h.b16 %v748
  %v1124 = vunpack.c.l.b16 %v749
  %v1125 = vunpack.c.h.b16 %v749
  %v1126 = vunpack.c.l.b16 %v750
  %v1127 = vunpack.c.h.b16 %v750
  %v1128 = vunpack.c.l.b16 %v751
  %v1129 = vunpack.c.h.b16 %v751
  %v1130 = vunpack.c.l.b16 %v752
  %v1131 = vunpack.c.h.b16 %v752
  %v1132 = vunpack.c.l.b16 %v753
  %v1133 = vunpack.c.h.b16 %v753
  %v1134 = vunpack.c.l.b16 %v754
  %v1135 = vunpack.c.h.b16 %v754
  %v1136 = vunpack.c.l.b16 %v755
  %v1137 = vunpack.c.h.b16 %v755
  %v1138 = vunpack.c.l.b16 %v756
  %v1139 = vunpack.c.h.b16 %v756
  %v1140 = vunpack.c.l.b16 %v757
  %v1141 = vunpack.c.h.b16 %v757
  %v1142 = vpack.c.b16 %v894, %v886
  %v1143 = vpack.c.b16 %v895, %v887
  %v1144 = vpack.c.b16 %v896, %v888
  %v1145 = vpack.c.b16 %v897, %v889
  %v1146 = vpack.c.b16 %v898, %v890
  %v1147 = vpack.c.b16 %v899, %v891
  %v1148 = vpack.c.b16 %v900, %v892
  %v1149 = vpack.c.b16 %v901, %v893
  %v1150 = vpack.c.b16 %v910, %v902
  %v1151 = vpack.c.b16 %v911, %v903
  %v1152 = vpack.c.b16 %v912, %v904
  %v1153 = vpack.c.b16 %v913, %v905
  %v1154 = vpack.c.b16 %v914, %v906
  %v1155 = vpack.c.b16 %v915, %v907
  %v1156 = vpack.c.b16 %v916, %v908
  %v1157 = vpack.c.b16 %v917, %v909
  %v1158 = vpack.c.b16 %v926, %v918
  %v1159 = vpack.c.b16 %v927, %v919
  %v1160 = vpack.c.b16 %v928, %v920
  %v1161 = vpack.c.b16 %v929, %v921
  %v1162 = vpack.c.b16 %v930, %v922
  %v1163 = vpack.c.b16 %v931, %v923
  %v1164 = vpack.c.b16 %v932, %v924
  %v1165 = vpack.c.b16 %v933, %v925
  %v1166 = vpack.c.b16 %v942, %v934
  %v1167 = vpack.c.b16 %v943, %v935
  %v1168 = vpack.c.b16 %v944, %v936
  %v1169 = vpack.c.b16 %v945, %v937
  %v1170 = vpack.c.b16 %v946, %v938
  %v1171 = vpack.c.b16 %v947, %v939
  %v1172 = vpack.c.b16 %v948, %v940
  %v1173 = vpack.c.b16 %v949, %v941
  %v1174 = vpack.c.b16 %v958, %v950
  %v1175 = vpack.c.b16 %v959, %v951
  %v1176 = vpack.c.b16 %v960, %v952
  %v1177 = vpack.c.b16 %v961, %v953
  %v1178 = vpack.c.b16 %v962, %v954
  %v1179 = vpack.c.b16 %v963, %v955
  %v1180 = vpack.c.b16 %v964, %v956
  %v1181 = vpack.c.b16 %v965, %v957
  %v1182 = vpack.c.b16 %v974, %v966
  %v1183 = vpack.c.b16 %v975, %v967
  %v1184 = vpack.c.b16 %v976, %v968
  %v1185 = vpack.c.b16 %v977, %v969
  %v1186 = vpack.c.b16 %v978, %v970
  %v1187 = vpack.c.b16 %v979, %v971
  %v1188 = vpack.c.b16 %v980, %v972
  %v1189 = vpack.c.b16 %v981, %v973
  %v1190 = vpack.c.b16 %v990, %v982
  %v1191 = vpack.c.b16 %v991, %v983
  %v1192 = vpack.c.b16 %v992, %v984
  %v1193 = vpack.c.b16 %v993, %v985
  %v1194 = vpack.c.b16 %v994, %v986
  %v1195 = vpack.c.b16 %v995, %v987
  %v1196 = vpack.c.b16 %v996, %v988
  %v1197 = vpack.c.b16 %v997, %v989
  %v1198 = vpack.c.b16 %v1006, %v998
  %v1199 = vpack.c.b16 %v1007, %v999
  %v1200 = vpack.c.b16 %v1008, %v1000
  %v1201 = vpack.c.b16 %v1009, %v1001
  %v1202 = vpack.c.b16 %v1010, %v1002
  %v1203 = vpack.c.b16 %v1011, %v1003
  %v1204 = vpack.c.b16 %v1012, %v1004
  %v1205 = vpack.c.b16 %v1013, %v1005
  %v1206 = vpack.c.b16 %v1022, %v1014
  %v1207 = vpack.c.b16 %v1023, %v1015
  %v1208 = vpack.c.b16 %v1024, %v1016
  %v1209 = vpack.c.b16 %v1025, %v1017
  %v1210 = vpack.c.b16 %v1026, %v1018
  %v1211 = vpack.c.b16 %v1027, %v1019
  %v1212 = vpack.c.b16 %v1028, %v1020
  %v1213 = vpack.c.b16 %v1029, %v1021
  %v1214 = vpack.c.b16 %v1038, %v1030
  %v1215 = vpack.c.b16 %v1039, %v1031
  %v1216 = vpack.c.b16 %v1040, %v1032
  %v1217 = vpack.c.b16 %v1041, %v1033
  %v1218 = vpack.c.b16 %v1042, %v1034
  %v1219 = vpack.c.b16 %v1043, %v1035
  %v1220 = vpack.c.b16 %v1044, %v1036
  %v1221 = vpack.c.b16 %v1045, %v1037
  %v1222 = vpack.c.b16 %v1054, %v1046
  %v1223 = vpack.c.b16 %v1055, %v1047
  %v1224 = vpack.c.b16 %v1056, %v1048
  %v1225 = vpack.c.b16 %v1057, %v1049
  %v1226 = vpack.c.b16 %v1058, %v1050
  %v1227 = vpack.c.b16 %v1059, %v1051
  %v1228 = vpack.c.b16 %v1060, %v1052
  %v1229 = vpack.c.b16 %v1061, %v1053
  %v1230 = vpack.c.b16 %v1070, %v1062
  %v1231 = vpack.c.b16 %v1071, %v1063
  %v1232 = vpack.c.b16 %v1072, %v1064
  %v1233 = vpack.c.b16 %v1073, %v1065
  %v1234 = vpack.c.b16 %v1074, %v1066
  %v1235 = vpack.c.b16 %v1075, %v1067
  %v1236 = vpack.c.b16 %v1076, %v1068
  %v1237 = vpack.c.b16 %v1077, %v1069
  %v1238 = vpack.c.b16 %v1086, %v1078
  %v1239 = vpack.c.b16 %v1087, %v1079
  %v1240 = vpack.c.b16 %v1088, %v1080
  %v1241 = vpack.c.b16 %v1089, %v1081
  %v1242 = vpack.c.b16 %v1090, %v1082
  %v1243 = vpack.c.b16 %v1091, %v1083
  %v1244 = vpack.c.b16 %v1092, %v1084
  %v1245 = vpack.c.b16 %v1093, %v1085
  %v1246 = vpack.c.b16 %v1102, %v1094
  %v1247 = vpack.c.b16 %v1103, %v1095
  %v1248 = vpack.c.b16 %v1104, %v1096
  %v1249 = vpack.c.b16 %v1105, %v1097
  %v1250 = vpack.c.b16 %v1106, %v1098
  %v1251 = vpack.c.b16 %v1107, %v1099
  %v1252 = vpack.c.b16 %v1108, %v1100
  %v1253 = vpack.c.b16 %v1109, %v1101
  %v1254 = vpack.c.b16 %v1118, %v1110
  %v1255 = vpack.c.b16 %v1119, %v1111
  %v1256 = vpack.c.b16 %v1120, %v1112
  %v1257 = vpack.c.b16 %v1121, %v1113
  %v1258 = vpack.c.b16 %v1122, %v1114
  %v1259 = vpack.c.b16 %v1123, %v1115
  %v1260 = vpack.c.b16 %v1124, %v1116
  %v1261 = vpack.c.b16 %v1125, %v1117
  %v1262 = vpack.c.b16 %v1134, %v1126
  %v1263 = vpack.c.b16 %v1135, %v1127
  %v1264 = vpack.c.b16 %v1136, %v1128
  %v1265 = vpack.c.b16 %v1137, %v1129
  %v1266 = vpack.c.b16 %v1138, %v1130
  %v1267 = vpack.c.b16 %v1139, %v1131
  %v1268 = vpack.c.b16 %v1140, %v1132
  %v1269 = vpack.c.b16 %v1141, %v1133
  %1398 = vmatprep.subr.bf16.mxu0 %v1143
  %1399 = vmatpush1.bf16.msra.mxu0 %v1142
  %1400 = vmatprep.subr.bf16.mxu0 %v1151
  %1401 = vmatpush1.bf16.msra.mxu0 %v1150
  %1402 = vmatprep.subr.bf16.mxu0 %v1159
  %1403 = vmatpush1.bf16.msra.mxu0 %v1158
  %1404 = vmatprep.subr.bf16.mxu0 %v1167
  %1405 = vmatpush1.bf16.msra.mxu0 %v1166
  %1406 = vmatprep.subr.bf16.mxu0 %v1175
  %1407 = vmatpush1.bf16.msra.mxu0 %v1174
  %1408 = vmatprep.subr.bf16.mxu0 %v1183
  %1409 = vmatpush1.bf16.msra.mxu0 %v1182
  %1410 = vmatprep.subr.bf16.mxu0 %v1191
  %1411 = vmatpush1.bf16.msra.mxu0 %v1190
  %1412 = vmatprep.subr.bf16.mxu0 %v1199
  %1413 = vmatpush1.bf16.msra.mxu0 %v1198
  %1414 = vmatprep.subr.bf16.mxu0 %v1207
  %1415 = vmatpush1.bf16.msra.mxu0 %v1206
  %1416 = vmatprep.subr.bf16.mxu0 %v1215
  %1417 = vmatpush1.bf16.msra.mxu0 %v1214
  %1418 = vmatprep.subr.bf16.mxu0 %v1223
  %1419 = vmatpush1.bf16.msra.mxu0 %v1222
  %1420 = vmatprep.subr.bf16.mxu0 %v1231
  %1421 = vmatpush1.bf16.msra.mxu0 %v1230
  %1422 = vmatprep.subr.bf16.mxu0 %v1239
  %1423 = vmatpush1.bf16.msra.mxu0 %v1238
  %1424 = vmatprep.subr.bf16.mxu0 %v1247
  %1425 = vmatpush1.bf16.msra.mxu0 %v1246
  %1426 = vmatprep.subr.bf16.mxu0 %v1255
  %1427 = vmatpush1.bf16.msra.mxu0 %v1254
  %1428 = vmatprep.subr.bf16.mxu0 %v1263
  %1429 = vmatpush1.bf16.msra.mxu0 %v1262
  %1430 = vmatprep.mubr.bf16.mxu0 0
  %1431 = vmatmul.mubr.bf16.gmra.mrb[0].mxu0 0
  %v1432 = vpop.f32.mrb[0].mxu0
  %v1433 = vadd.f32 0.0, %v1432
  %v1434 = vpop.f32.mrb[0].mxu0
  %v1435 = vadd.f32 0.0, %v1434
  %v1436 = vpop.f32.mrb[0].mxu0
  %v1437 = vpop.f32.mrb[0].mxu0
  %1438 = vdwg.mxu0
  %1439 = vmatprep.subr.bf16.mxu0 %v1145
  %1440 = vmatpush1.bf16.msra.mxu0 %v1144
  %1441 = vmatprep.subr.bf16.mxu0 %v1153
  %1442 = vmatpush1.bf16.msra.mxu0 %v1152
  %1443 = vmatprep.subr.bf16.mxu0 %v1161
  %1444 = vmatpush1.bf16.msra.mxu0 %v1160
  %1445 = vmatprep.subr.bf16.mxu0 %v1169
  %1446 = vmatpush1.bf16.msra.mxu0 %v1168
  %1447 = vmatprep.subr.bf16.mxu0 %v1177
  %1448 = vmatpush1.bf16.msra.mxu0 %v1176
  %1449 = vmatprep.subr.bf16.mxu0 %v1185
  %1450 = vmatpush1.bf16.msra.mxu0 %v1184
  %1451 = vmatprep.subr.bf16.mxu0 %v1193
  %1452 = vmatpush1.bf16.msra.mxu0 %v1192
  %1453 = vmatprep.subr.bf16.mxu0 %v1201
  %1454 = vmatpush1.bf16.msra.mxu0 %v1200
  %1455 = vmatprep.subr.bf16.mxu0 %v1209
  %1456 = vmatpush1.bf16.msra.mxu0 %v1208
  %1457 = vmatprep.subr.bf16.mxu0 %v1217
  %1458 = vmatpush1.bf16.msra.mxu0 %v1216
  %1459 = vmatprep.subr.bf16.mxu0 %v1225
  %1460 = vmatpush1.bf16.msra.mxu0 %v1224
  %1461 = vmatprep.subr.bf16.mxu0 %v1233
  %1462 = vmatpush1.bf16.msra.mxu0 %v1232
  %1463 = vmatprep.subr.bf16.mxu0 %v1241
  %1464 = vmatpush1.bf16.msra.mxu0 %v1240
  %1465 = vmatprep.subr.bf16.mxu0 %v1249
  %1466 = vmatpush1.bf16.msra.mxu0 %v1248
  %1467 = vmatprep.subr.bf16.mxu0 %v1257
  %1468 = vmatpush1.bf16.msra.mxu0 %v1256
  %1469 = vmatprep.subr.bf16.mxu0 %v1265
  %1470 = vmatpush1.bf16.msra.mxu0 %v1264
  %1471 = vmatprep.mubr.bf16.mxu0 0
  %1472 = vmatmul.mubr.bf16.gmra.mrb[0].mxu0 0
  %v1473 = vpop.f32.mrb[0].mxu0
  %v1474 = vadd.f32 0.0, %v1473
  %v1475 = vpop.f32.mrb[0].mxu0
  %v1476 = vadd.f32 0.0, %v1475
  %v1477 = vpop.f32.mrb[0].mxu0
  %v1478 = vpop.f32.mrb[0].mxu0
  %1479 = vdwg.mxu0
  %1480 = vmatprep.subr.bf16.mxu0 %v1147
  %1481 = vmatpush1.bf16.msra.mxu0 %v1146
  %1482 = vmatprep.subr.bf16.mxu0 %v1155
  %1483 = vmatpush1.bf16.msra.mxu0 %v1154
  %1484 = vmatprep.subr.bf16.mxu0 %v1163
  %1485 = vmatpush1.bf16.msra.mxu0 %v1162
  %1486 = vmatprep.subr.bf16.mxu0 %v1171
  %1487 = vmatpush1.bf16.msra.mxu0 %v1170
  %1488 = vmatprep.subr.bf16.mxu0 %v1179
  %1489 = vmatpush1.bf16.msra.mxu0 %v1178
  %1490 = vmatprep.subr.bf16.mxu0 %v1187
  %1491 = vmatpush1.bf16.msra.mxu0 %v1186
  %1492 = vmatprep.subr.bf16.mxu0 %v1195
  %1493 = vmatpush1.bf16.msra.mxu0 %v1194
  %1494 = vmatprep.subr.bf16.mxu0 %v1203
  %1495 = vmatpush1.bf16.msra.mxu0 %v1202
  %1496 = vmatprep.subr.bf16.mxu0 %v1211
  %1497 = vmatpush1.bf16.msra.mxu0 %v1210
  %1498 = vmatprep.subr.bf16.mxu0 %v1219
  %1499 = vmatpush1.bf16.msra.mxu0 %v1218
  %1500 = vmatprep.subr.bf16.mxu0 %v1227
  %1501 = vmatpush1.bf16.msra.mxu0 %v1226
  %1502 = vmatprep.subr.bf16.mxu0 %v1235
  %1503 = vmatpush1.bf16.msra.mxu0 %v1234
  %1504 = vmatprep.subr.bf16.mxu0 %v1243
  %1505 = vmatpush1.bf16.msra.mxu0 %v1242
  %1506 = vmatprep.subr.bf16.mxu0 %v1251
  %1507 = vmatpush1.bf16.msra.mxu0 %v1250
  %1508 = vmatprep.subr.bf16.mxu0 %v1259
  %1509 = vmatpush1.bf16.msra.mxu0 %v1258
  %1510 = vmatprep.subr.bf16.mxu0 %v1267
  %1511 = vmatpush1.bf16.msra.mxu0 %v1266
  %1512 = vmatprep.mubr.bf16.mxu0 0
  %1513 = vmatmul.mubr.bf16.gmra.mrb[0].mxu0 0
  %v1514 = vpop.f32.mrb[0].mxu0
  %v1515 = vadd.f32 0.0, %v1514
  %v1516 = vpop.f32.mrb[0].mxu0
  %v1517 = vadd.f32 0.0, %v1516
  %v1518 = vpop.f32.mrb[0].mxu0
  %v1519 = vpop.f32.mrb[0].mxu0
  %1520 = vdwg.mxu0
  %1521 = vmatprep.subr.bf16.mxu0 %v1149
  %1522 = vmatpush1.bf16.msra.mxu0 %v1148
  %1523 = vmatprep.subr.bf16.mxu0 %v1157
  %1524 = vmatpush1.bf16.msra.mxu0 %v1156
  %1525 = vmatprep.subr.bf16.mxu0 %v1165
  %1526 = vmatpush1.bf16.msra.mxu0 %v1164
  %1527 = vmatprep.subr.bf16.mxu0 %v1173
  %1528 = vmatpush1.bf16.msra.mxu0 %v1172
  %1529 = vmatprep.subr.bf16.mxu0 %v1181
  %1530 = vmatpush1.bf16.msra.mxu0 %v1180
  %1531 = vmatprep.subr.bf16.mxu0 %v1189
  %1532 = vmatpush1.bf16.msra.mxu0 %v1188
  %1533 = vmatprep.subr.bf16.mxu0 %v1197
  %1534 = vmatpush1.bf16.msra.mxu0 %v1196
  %1535 = vmatprep.subr.bf16.mxu0 %v1205
  %1536 = vmatpush1.bf16.msra.mxu0 %v1204
  %1537 = vmatprep.subr.bf16.mxu0 %v1213
  %1538 = vmatpush1.bf16.msra.mxu0 %v1212
  %1539 = vmatprep.subr.bf16.mxu0 %v1221
  %1540 = vmatpush1.bf16.msra.mxu0 %v1220
  %1541 = vmatprep.subr.bf16.mxu0 %v1229
  %1542 = vmatpush1.bf16.msra.mxu0 %v1228
  %1543 = vmatprep.subr.bf16.mxu0 %v1237
  %1544 = vmatpush1.bf16.msra.mxu0 %v1236
  %1545 = vmatprep.subr.bf16.mxu0 %v1245
  %1546 = vmatpush1.bf16.msra.mxu0 %v1244
  %1547 = vmatprep.subr.bf16.mxu0 %v1253
  %1548 = vmatpush1.bf16.msra.mxu0 %v1252
  %1549 = vmatprep.subr.bf16.mxu0 %v1261
  %1550 = vmatpush1.bf16.msra.mxu0 %v1260
  %1551 = vmatprep.subr.bf16.mxu0 %v1269
  %1552 = vmatpush1.bf16.msra.mxu0 %v1268
  %1553 = vmatprep.mubr.bf16.mxu0 0
  %1554 = vmatmul.mubr.bf16.gmra.mrb[0].mxu0 0
  %v1555 = vpop.f32.mrb[0].mxu0
  %v1556 = vadd.f32 0.0, %v1555
  %v1557 = vpop.f32.mrb[0].mxu0
  %v1558 = vadd.f32 0.0, %v1557
  %v1559 = vpop.f32.mrb[0].mxu0
  %v1560 = vpop.f32.mrb[0].mxu0
  %1561 = vdwg.mxu0
  %v1562 = vadd.f32 %v493, %v1433
  %v1563 = vadd.f32 %v495, %v1435
  %v1564 = vadd.f32 %v536, %v1474
  %v1565 = vadd.f32 %v538, %v1476
  %v1566 = vadd.f32 %v579, %v1515
  %v1567 = vadd.f32 %v581, %v1517
  %v1568 = vadd.f32 %v622, %v1556
  %v1569 = vadd.f32 %v624, %v1558
  %v1570 = vxor.u32 %v1562, 2147483648
  %v1571 = vxor.u32 %v1563, 2147483648
  %v1572 = vmul.f32 %v1570, 1.442695
  %v1573 = vpow.pop %v1572
  %v1574 = vmul.f32 %v1571, 1.442695
  %v1575 = vpow.pop %v1574
  %v1576 = vadd.f32 %v1573, 1.0
  %v1577 = vadd.f32 %v1575, 1.0
  %v1578 = vrcp.pop %v1576
  %v1579 = vmul.f32 1.0, %v1578
  %v1580 = vrcp.pop %v1577
  %v1581 = vmul.f32 1.0, %v1580
  %v1582 = vxor.u32 %v1564, 2147483648
  %v1583 = vxor.u32 %v1565, 2147483648
  %v1584 = vmul.f32 %v1582, 1.442695
  %v1585 = vpow.pop %v1584
  %v1586 = vmul.f32 %v1583, 1.442695
  %v1587 = vpow.pop %v1586
  %v1588 = vadd.f32 %v1585, 1.0
  %v1589 = vadd.f32 %v1587, 1.0
  %v1590 = vrcp.pop %v1588
  %v1591 = vmul.f32 1.0, %v1590
  %v1592 = vrcp.pop %v1589
  %v1593 = vmul.f32 1.0, %v1592
  %v1594 = vtanh.pop %v1566
  %v1595 = vtanh.pop %v1567
  %v1596 = vxor.u32 %v1568, 2147483648
  %v1597 = vxor.u32 %v1569, 2147483648
  %v1598 = vmul.f32 %v1596, 1.442695
  %v1599 = vpow.pop %v1598
  %v1600 = vmul.f32 %v1597, 1.442695
  %v1601 = vpow.pop %v1600
  %v1602 = vadd.f32 %v1599, 1.0
  %v1603 = vadd.f32 %v1601, 1.0
  %v1604 = vrcp.pop %v1602
  %v1605 = vmul.f32 1.0, %v1604
  %v1606 = vrcp.pop %v1603
  %v1607 = vmul.f32 1.0, %v1606
  %v1608 = vmul.f32 %v1591, 0.0
  %v1609 = vmul.f32 %v1593, 0.0
  %v1610 = vmul.f32 %v1579, %v1594
  %v1611 = vmul.f32 %v1581, %v1595
  %v1612 = vadd.f32 %v1608, %v1610
  %v1613 = vadd.f32 %v1609, %v1611
  %v1614 = vtanh.pop %v1612
  %v1615 = vtanh.pop %v1613
  %v1616 = vmul.f32 %v1605, %v1614
  %v1617 = vmul.f32 %v1607, %v1615
  %v1618 = vpack.c.bf16 %v1616, %v1616
  %v1619 = vpack.c.bf16 %v1617, %v1617
  %1620 = vmatprep.subr.bf16.mxu0 %v1143
  %1621 = vmatpush1.bf16.msra.mxu0 %v1142
  %1622 = vmatprep.subr.bf16.mxu0 %v1151
  %1623 = vmatpush1.bf16.msra.mxu0 %v1150
  %1624 = vmatprep.subr.bf16.mxu0 %v1159
  %1625 = vmatpush1.bf16.msra.mxu0 %v1158
  %1626 = vmatprep.subr.bf16.mxu0 %v1167
  %1627 = vmatpush1.bf16.msra.mxu0 %v1166
  %1628 = vmatprep.subr.bf16.mxu0 %v1175
  %1629 = vmatpush1.bf16.msra.mxu0 %v1174
  %1630 = vmatprep.subr.bf16.mxu0 %v1183
  %1631 = vmatpush1.bf16.msra.mxu0 %v1182
  %1632 = vmatprep.subr.bf16.mxu0 %v1191
  %1633 = vmatpush1.bf16.msra.mxu0 %v1190
  %1634 = vmatprep.subr.bf16.mxu0 %v1199
  %1635 = vmatpush1.bf16.msra.mxu0 %v1198
  %1636 = vmatprep.subr.bf16.mxu0 %v1207
  %1637 = vmatpush1.bf16.msra.mxu0 %v1206
  %1638 = vmatprep.subr.bf16.mxu0 %v1215
  %1639 = vmatpush1.bf16.msra.mxu0 %v1214
  %1640 = vmatprep.subr.bf16.mxu0 %v1223
  %1641 = vmatpush1.bf16.msra.mxu0 %v1222
  %1642 = vmatprep.subr.bf16.mxu0 %v1231
  %1643 = vmatpush1.bf16.msra.mxu0 %v1230
  %1644 = vmatprep.subr.bf16.mxu0 %v1239
  %1645 = vmatpush1.bf16.msra.mxu0 %v1238
  %1646 = vmatprep.subr.bf16.mxu0 %v1247
  %1647 = vmatpush1.bf16.msra.mxu0 %v1246
  %1648 = vmatprep.subr.bf16.mxu0 %v1255
  %1649 = vmatpush1.bf16.msra.mxu0 %v1254
  %1650 = vmatprep.subr.bf16.mxu0 %v1263
  %1651 = vmatpush1.bf16.msra.mxu0 %v1262
  %1652 = vmatprep.mubr.bf16.mxu0 %v1619
  %1653 = vmatmul.mubr.bf16.gmra.mrb[0].mxu0 %v1618
  %v1654 = vpop.f32.mrb[0].mxu0
  %v1655 = vadd.f32 0.0, %v1654
  %v1656 = vpop.f32.mrb[0].mxu0
  %v1657 = vadd.f32 0.0, %v1656
  %v1658 = vpop.f32.mrb[0].mxu0
  %v1659 = vpop.f32.mrb[0].mxu0
  %1660 = vdwg.mxu0
  %1661 = vmatprep.subr.bf16.mxu0 %v1145
  %1662 = vmatpush1.bf16.msra.mxu0 %v1144
  %1663 = vmatprep.subr.bf16.mxu0 %v1153
  %1664 = vmatpush1.bf16.msra.mxu0 %v1152
  %1665 = vmatprep.subr.bf16.mxu0 %v1161
  %1666 = vmatpush1.bf16.msra.mxu0 %v1160
  %1667 = vmatprep.subr.bf16.mxu0 %v1169
  %1668 = vmatpush1.bf16.msra.mxu0 %v1168
  %1669 = vmatprep.subr.bf16.mxu0 %v1177
  %1670 = vmatpush1.bf16.msra.mxu0 %v1176
  %1671 = vmatprep.subr.bf16.mxu0 %v1185
  %1672 = vmatpush1.bf16.msra.mxu0 %v1184
  %1673 = vmatprep.subr.bf16.mxu0 %v1193
  %1674 = vmatpush1.bf16.msra.mxu0 %v1192
  %1675 = vmatprep.subr.bf16.mxu0 %v1201
  %1676 = vmatpush1.bf16.msra.mxu0 %v1200
  %1677 = vmatprep.subr.bf16.mxu0 %v1209
  %1678 = vmatpush1.bf16.msra.mxu0 %v1208
  %1679 = vmatprep.subr.bf16.mxu0 %v1217
  %1680 = vmatpush1.bf16.msra.mxu0 %v1216
  %1681 = vmatprep.subr.bf16.mxu0 %v1225
  %1682 = vmatpush1.bf16.msra.mxu0 %v1224
  %1683 = vmatprep.subr.bf16.mxu0 %v1233
  %1684 = vmatpush1.bf16.msra.mxu0 %v1232
  %1685 = vmatprep.subr.bf16.mxu0 %v1241
  %1686 = vmatpush1.bf16.msra.mxu0 %v1240
  %1687 = vmatprep.subr.bf16.mxu0 %v1249
  %1688 = vmatpush1.bf16.msra.mxu0 %v1248
  %1689 = vmatprep.subr.bf16.mxu0 %v1257
  %1690 = vmatpush1.bf16.msra.mxu0 %v1256
  %1691 = vmatprep.subr.bf16.mxu0 %v1265
  %1692 = vmatpush1.bf16.msra.mxu0 %v1264
  %1693 = vmatprep.mubr.bf16.mxu0 %v1619
  %1694 = vmatmul.mubr.bf16.gmra.mrb[0].mxu0 %v1618
  %v1695 = vpop.f32.mrb[0].mxu0
  %v1696 = vadd.f32 0.0, %v1695
  %v1697 = vpop.f32.mrb[0].mxu0
  %v1698 = vadd.f32 0.0, %v1697
  %v1699 = vpop.f32.mrb[0].mxu0
  %v1700 = vpop.f32.mrb[0].mxu0
  %1701 = vdwg.mxu0
  %1702 = vmatprep.subr.bf16.mxu0 %v1147
  %1703 = vmatpush1.bf16.msra.mxu0 %v1146
  %1704 = vmatprep.subr.bf16.mxu0 %v1155
  %1705 = vmatpush1.bf16.msra.mxu0 %v1154
  %1706 = vmatprep.subr.bf16.mxu0 %v1163
  %1707 = vmatpush1.bf16.msra.mxu0 %v1162
  %1708 = vmatprep.subr.bf16.mxu0 %v1171
  %1709 = vmatpush1.bf16.msra.mxu0 %v1170
  %1710 = vmatprep.subr.bf16.mxu0 %v1179
  %1711 = vmatpush1.bf16.msra.mxu0 %v1178
  %1712 = vmatprep.subr.bf16.mxu0 %v1187
  %1713 = vmatpush1.bf16.msra.mxu0 %v1186
  %1714 = vmatprep.subr.bf16.mxu0 %v1195
  %1715 = vmatpush1.bf16.msra.mxu0 %v1194
  %1716 = vmatprep.subr.bf16.mxu0 %v1203
  %1717 = vmatpush1.bf16.msra.mxu0 %v1202
  %1718 = vmatprep.subr.bf16.mxu0 %v1211
  %1719 = vmatpush1.bf16.msra.mxu0 %v1210
  %1720 = vmatprep.subr.bf16.mxu0 %v1219
  %1721 = vmatpush1.bf16.msra.mxu0 %v1218
  %1722 = vmatprep.subr.bf16.mxu0 %v1227
  %1723 = vmatpush1.bf16.msra.mxu0 %v1226
  %1724 = vmatprep.subr.bf16.mxu0 %v1235
  %1725 = vmatpush1.bf16.msra.mxu0 %v1234
  %1726 = vmatprep.subr.bf16.mxu0 %v1243
  %1727 = vmatpush1.bf16.msra.mxu0 %v1242
  %1728 = vmatprep.subr.bf16.mxu0 %v1251
  %1729 = vmatpush1.bf16.msra.mxu0 %v1250
  %1730 = vmatprep.subr.bf16.mxu0 %v1259
  %1731 = vmatpush1.bf16.msra.mxu0 %v1258
  %1732 = vmatprep.subr.bf16.mxu0 %v1267
  %1733 = vmatpush1.bf16.msra.mxu0 %v1266
  %1734 = vmatprep.mubr.bf16.mxu0 %v1619
  %1735 = vmatmul.mubr.bf16.gmra.mrb[0].mxu0 %v1618
  %v1736 = vpop.f32.mrb[0].mxu0
  %v1737 = vadd.f32 0.0, %v1736
  %v1738 = vpop.f32.mrb[0].mxu0
  %v1739 = vadd.f32 0.0, %v1738
  %v1740 = vpop.f32.mrb[0].mxu0
  %v1741 = vpop.f32.mrb[0].mxu0
  %1742 = vdwg.mxu0
  %1743 = vmatprep.subr.bf16.mxu0 %v1149
  %1744 = vmatpush1.bf16.msra.mxu0 %v1148
  %1745 = vmatprep.subr.bf16.mxu0 %v1157
  %1746 = vmatpush1.bf16.msra.mxu0 %v1156
  %1747 = vmatprep.subr.bf16.mxu0 %v1165
  %1748 = vmatpush1.bf16.msra.mxu0 %v1164
  %1749 = vmatprep.subr.bf16.mxu0 %v1173
  %1750 = vmatpush1.bf16.msra.mxu0 %v1172
  %1751 = vmatprep.subr.bf16.mxu0 %v1181
  %1752 = vmatpush1.bf16.msra.mxu0 %v1180
  %1753 = vmatprep.subr.bf16.mxu0 %v1189
  %1754 = vmatpush1.bf16.msra.mxu0 %v1188
  %1755 = vmatprep.subr.bf16.mxu0 %v1197
  %1756 = vmatpush1.bf16.msra.mxu0 %v1196
  %1757 = vmatprep.subr.bf16.mxu0 %v1205
  %1758 = vmatpush1.bf16.msra.mxu0 %v1204
  %1759 = vmatprep.subr.bf16.mxu0 %v1213
  %1760 = vmatpush1.bf16.msra.mxu0 %v1212
  %1761 = vmatprep.subr.bf16.mxu0 %v1221
  %1762 = vmatpush1.bf16.msra.mxu0 %v1220
  %1763 = vmatprep.subr.bf16.mxu0 %v1229
  %1764 = vmatpush1.bf16.msra.mxu0 %v1228
  %1765 = vmatprep.subr.bf16.mxu0 %v1237
  %1766 = vmatpush1.bf16.msra.mxu0 %v1236
  %1767 = vmatprep.subr.bf16.mxu0 %v1245
  %1768 = vmatpush1.bf16.msra.mxu0 %v1244
  %1769 = vmatprep.subr.bf16.mxu0 %v1253
  %1770 = vmatpush1.bf16.msra.mxu0 %v1252
  %1771 = vmatprep.subr.bf16.mxu0 %v1261
  %1772 = vmatpush1.bf16.msra.mxu0 %v1260
  %1773 = vmatprep.subr.bf16.mxu0 %v1269
  %1774 = vmatpush1.bf16.msra.mxu0 %v1268
  %1775 = vmatprep.mubr.bf16.mxu0 %v1619
  %1776 = vmatmul.mubr.bf16.gmra.mrb[0].mxu0 %v1618
  %v1777 = vpop.f32.mrb[0].mxu0
  %v1778 = vadd.f32 0.0, %v1777
  %v1779 = vpop.f32.mrb[0].mxu0
  %v1780 = vadd.f32 0.0, %v1779
  %v1781 = vpop.f32.mrb[0].mxu0
  %v1782 = vpop.f32.mrb[0].mxu0
  %1783 = vdwg.mxu0
  %v1792 = vrot.slane %v1655, 6
  %v1793 = vrot.slane %v1657, 6
  %v1794 = vrot.slane %v1696, 6
  %v1795 = vrot.slane %v1698, 6
  %v1796 = vrot.slane %v1737, 6
  %v1797 = vrot.slane %v1739, 6
  %v1798 = vrot.slane %v1778, 6
  %v1799 = vrot.slane %v1780, 6
  %v1808 = vadd.f32 %v493, %v1792
  %v1809 = vadd.f32 %v495, %v1793
  %v1810 = vadd.f32 %v536, %v1794
  %v1811 = vadd.f32 %v538, %v1795
  %v1812 = vadd.f32 %v579, %v1796
  %v1813 = vadd.f32 %v581, %v1797
  %v1814 = vadd.f32 %v622, %v1798
  %v1815 = vadd.f32 %v624, %v1799
  %v1816 = vxor.u32 %v1808, 2147483648
  %v1817 = vxor.u32 %v1809, 2147483648
  %v1818 = vmul.f32 %v1816, 1.442695
  %v1819 = vpow.pop %v1818
  %v1820 = vmul.f32 %v1817, 1.442695
  %v1821 = vpow.pop %v1820
  %v1822 = vadd.f32 %v1819, 1.0
  %v1823 = vadd.f32 %v1821, 1.0
  %v1824 = vrcp.pop %v1822
  %v1825 = vmul.f32 1.0, %v1824
  %v1826 = vrcp.pop %v1823
  %v1827 = vmul.f32 1.0, %v1826
  %v1828 = vxor.u32 %v1810, 2147483648
  %v1829 = vxor.u32 %v1811, 2147483648
  %v1830 = vmul.f32 %v1828, 1.442695
  %v1831 = vpow.pop %v1830
  %v1832 = vmul.f32 %v1829, 1.442695
  %v1833 = vpow.pop %v1832
  %v1834 = vadd.f32 %v1831, 1.0
  %v1835 = vadd.f32 %v1833, 1.0
  %v1836 = vrcp.pop %v1834
  %v1837 = vmul.f32 1.0, %v1836
  %v1838 = vrcp.pop %v1835
  %v1839 = vmul.f32 1.0, %v1838
  %v1840 = vtanh.pop %v1812
  %v1841 = vtanh.pop %v1813
  %v1842 = vxor.u32 %v1814, 2147483648
  %v1843 = vxor.u32 %v1815, 2147483648
  %v1844 = vmul.f32 %v1842, 1.442695
  %v1845 = vpow.pop %v1844
  %v1846 = vmul.f32 %v1843, 1.442695
  %v1847 = vpow.pop %v1846
  %v1848 = vadd.f32 %v1845, 1.0
  %v1849 = vadd.f32 %v1847, 1.0
  %v1850 = vrcp.pop %v1848
  %v1851 = vmul.f32 1.0, %v1850
  %v1852 = vrcp.pop %v1849
  %v1853 = vmul.f32 1.0, %v1852
  %v1856 = vrot.slane %v1612, 6
  %v1857 = vrot.slane %v1613, 6
  %v1860 = vmul.f32 %v1837, %v1856
  %v1861 = vmul.f32 %v1839, %v1857
  %v1862 = vmul.f32 %v1825, %v1840
  %v1863 = vmul.f32 %v1827, %v1841
  %v1864 = vadd.f32 %v1860, %v1862
  %v1865 = vadd.f32 %v1861, %v1863
  %v1866 = vtanh.pop %v1864
  %v1867 = vtanh.pop %v1865
  %v1868 = vmul.f32 %v1851, %v1866
  %v1869 = vmul.f32 %v1853, %v1867
  %v1870 = vpack.c.bf16 %v1868, %v1868
  %v1871 = vpack.c.bf16 %v1869, %v1869
  %v1874 = vrot.slane %v1870, 1
  %v1875 = vrot.slane %v1871, 1
  %1878 = vmatprep.subr.bf16.mxu0 %v1143
  %1879 = vmatpush1.bf16.msra.mxu0 %v1142
  %1880 = vmatprep.subr.bf16.mxu0 %v1151
  %1881 = vmatpush1.bf16.msra.mxu0 %v1150
  %1882 = vmatprep.subr.bf16.mxu0 %v1159
  %1883 = vmatpush1.bf16.msra.mxu0 %v1158
  %1884 = vmatprep.subr.bf16.mxu0 %v1167
  %1885 = vmatpush1.bf16.msra.mxu0 %v1166
  %1886 = vmatprep.subr.bf16.mxu0 %v1175
  %1887 = vmatpush1.bf16.msra.mxu0 %v1174
  %1888 = vmatprep.subr.bf16.mxu0 %v1183
  %1889 = vmatpush1.bf16.msra.mxu0 %v1182
  %1890 = vmatprep.subr.bf16.mxu0 %v1191
  %1891 = vmatpush1.bf16.msra.mxu0 %v1190
  %1892 = vmatprep.subr.bf16.mxu0 %v1199
  %1893 = vmatpush1.bf16.msra.mxu0 %v1198
  %1894 = vmatprep.subr.bf16.mxu0 %v1207
  %1895 = vmatpush1.bf16.msra.mxu0 %v1206
  %1896 = vmatprep.subr.bf16.mxu0 %v1215
  %1897 = vmatpush1.bf16.msra.mxu0 %v1214
  %1898 = vmatprep.subr.bf16.mxu0 %v1223
  %1899 = vmatpush1.bf16.msra.mxu0 %v1222
  %1900 = vmatprep.subr.bf16.mxu0 %v1231
  %1901 = vmatpush1.bf16.msra.mxu0 %v1230
  %1902 = vmatprep.subr.bf16.mxu0 %v1239
  %1903 = vmatpush1.bf16.msra.mxu0 %v1238
  %1904 = vmatprep.subr.bf16.mxu0 %v1247
  %1905 = vmatpush1.bf16.msra.mxu0 %v1246
  %1906 = vmatprep.subr.bf16.mxu0 %v1255
  %1907 = vmatpush1.bf16.msra.mxu0 %v1254
  %1908 = vmatprep.subr.bf16.mxu0 %v1263
  %1909 = vmatpush1.bf16.msra.mxu0 %v1262
  %1910 = vmatprep.mubr.bf16.mxu0 %v1875
  %1911 = vmatmul.mubr.bf16.gmra.mrb[0].mxu0 %v1874
  %v1912 = vpop.f32.mrb[0].mxu0
  %v1913 = vadd.f32 0.0, %v1912
  %v1914 = vpop.f32.mrb[0].mxu0
  %v1915 = vadd.f32 0.0, %v1914
  %v1916 = vpop.f32.mrb[0].mxu0
  %v1917 = vpop.f32.mrb[0].mxu0
  %1918 = vdwg.mxu0
  %1919 = vmatprep.subr.bf16.mxu0 %v1145
  %1920 = vmatpush1.bf16.msra.mxu0 %v1144
  %1921 = vmatprep.subr.bf16.mxu0 %v1153
  %1922 = vmatpush1.bf16.msra.mxu0 %v1152
  %1923 = vmatprep.subr.bf16.mxu0 %v1161
  %1924 = vmatpush1.bf16.msra.mxu0 %v1160
  %1925 = vmatprep.subr.bf16.mxu0 %v1169
  %1926 = vmatpush1.bf16.msra.mxu0 %v1168
  %1927 = vmatprep.subr.bf16.mxu0 %v1177
  %1928 = vmatpush1.bf16.msra.mxu0 %v1176
  %1929 = vmatprep.subr.bf16.mxu0 %v1185
  %1930 = vmatpush1.bf16.msra.mxu0 %v1184
  %1931 = vmatprep.subr.bf16.mxu0 %v1193
  %1932 = vmatpush1.bf16.msra.mxu0 %v1192
  %1933 = vmatprep.subr.bf16.mxu0 %v1201
  %1934 = vmatpush1.bf16.msra.mxu0 %v1200
  %1935 = vmatprep.subr.bf16.mxu0 %v1209
  %1936 = vmatpush1.bf16.msra.mxu0 %v1208
  %1937 = vmatprep.subr.bf16.mxu0 %v1217
  %1938 = vmatpush1.bf16.msra.mxu0 %v1216
  %1939 = vmatprep.subr.bf16.mxu0 %v1225
  %1940 = vmatpush1.bf16.msra.mxu0 %v1224
  %1941 = vmatprep.subr.bf16.mxu0 %v1233
  %1942 = vmatpush1.bf16.msra.mxu0 %v1232
  %1943 = vmatprep.subr.bf16.mxu0 %v1241
  %1944 = vmatpush1.bf16.msra.mxu0 %v1240
  %1945 = vmatprep.subr.bf16.mxu0 %v1249
  %1946 = vmatpush1.bf16.msra.mxu0 %v1248
  %1947 = vmatprep.subr.bf16.mxu0 %v1257
  %1948 = vmatpush1.bf16.msra.mxu0 %v1256
  %1949 = vmatprep.subr.bf16.mxu0 %v1265
  %1950 = vmatpush1.bf16.msra.mxu0 %v1264
  %1951 = vmatprep.mubr.bf16.mxu0 %v1875
  %1952 = vmatmul.mubr.bf16.gmra.mrb[0].mxu0 %v1874
  %v1953 = vpop.f32.mrb[0].mxu0
  %v1954 = vadd.f32 0.0, %v1953
  %v1955 = vpop.f32.mrb[0].mxu0
  %v1956 = vadd.f32 0.0, %v1955
  %v1957 = vpop.f32.mrb[0].mxu0
  %v1958 = vpop.f32.mrb[0].mxu0
  %1959 = vdwg.mxu0
  %1960 = vmatprep.subr.bf16.mxu0 %v1147
  %1961 = vmatpush1.bf16.msra.mxu0 %v1146
  %1962 = vmatprep.subr.bf16.mxu0 %v1155
  %1963 = vmatpush1.bf16.msra.mxu0 %v1154
  %1964 = vmatprep.subr.bf16.mxu0 %v1163
  %1965 = vmatpush1.bf16.msra.mxu0 %v1162
  %1966 = vmatprep.subr.bf16.mxu0 %v1171
  %1967 = vmatpush1.bf16.msra.mxu0 %v1170
  %1968 = vmatprep.subr.bf16.mxu0 %v1179
  %1969 = vmatpush1.bf16.msra.mxu0 %v1178
  %1970 = vmatprep.subr.bf16.mxu0 %v1187
  %1971 = vmatpush1.bf16.msra.mxu0 %v1186
  %1972 = vmatprep.subr.bf16.mxu0 %v1195
  %1973 = vmatpush1.bf16.msra.mxu0 %v1194
  %1974 = vmatprep.subr.bf16.mxu0 %v1203
  %1975 = vmatpush1.bf16.msra.mxu0 %v1202
  %1976 = vmatprep.subr.bf16.mxu0 %v1211
  %1977 = vmatpush1.bf16.msra.mxu0 %v1210
  %1978 = vmatprep.subr.bf16.mxu0 %v1219
  %1979 = vmatpush1.bf16.msra.mxu0 %v1218
  %1980 = vmatprep.subr.bf16.mxu0 %v1227
  %1981 = vmatpush1.bf16.msra.mxu0 %v1226
  %1982 = vmatprep.subr.bf16.mxu0 %v1235
  %1983 = vmatpush1.bf16.msra.mxu0 %v1234
  %1984 = vmatprep.subr.bf16.mxu0 %v1243
  %1985 = vmatpush1.bf16.msra.mxu0 %v1242
  %1986 = vmatprep.subr.bf16.mxu0 %v1251
  %1987 = vmatpush1.bf16.msra.mxu0 %v1250
  %1988 = vmatprep.subr.bf16.mxu0 %v1259
  %1989 = vmatpush1.bf16.msra.mxu0 %v1258
  %1990 = vmatprep.subr.bf16.mxu0 %v1267
  %1991 = vmatpush1.bf16.msra.mxu0 %v1266
  %1992 = vmatprep.mubr.bf16.mxu0 %v1875
  %1993 = vmatmul.mubr.bf16.gmra.mrb[0].mxu0 %v1874
  %v1994 = vpop.f32.mrb[0].mxu0
  %v1995 = vadd.f32 0.0, %v1994
  %v1996 = vpop.f32.mrb[0].mxu0
  %v1997 = vadd.f32 0.0, %v1996
  %v1998 = vpop.f32.mrb[0].mxu0
  %v1999 = vpop.f32.mrb[0].mxu0
  %2000 = vdwg.mxu0
  %2001 = vmatprep.subr.bf16.mxu0 %v1149
  %2002 = vmatpush1.bf16.msra.mxu0 %v1148
  %2003 = vmatprep.subr.bf16.mxu0 %v1157
  %2004 = vmatpush1.bf16.msra.mxu0 %v1156
  %2005 = vmatprep.subr.bf16.mxu0 %v1165
  %2006 = vmatpush1.bf16.msra.mxu0 %v1164
  %2007 = vmatprep.subr.bf16.mxu0 %v1173
  %2008 = vmatpush1.bf16.msra.mxu0 %v1172
  %2009 = vmatprep.subr.bf16.mxu0 %v1181
  %2010 = vmatpush1.bf16.msra.mxu0 %v1180
  %2011 = vmatprep.subr.bf16.mxu0 %v1189
  %2012 = vmatpush1.bf16.msra.mxu0 %v1188
  %2013 = vmatprep.subr.bf16.mxu0 %v1197
  %2014 = vmatpush1.bf16.msra.mxu0 %v1196
  %2015 = vmatprep.subr.bf16.mxu0 %v1205
  %2016 = vmatpush1.bf16.msra.mxu0 %v1204
  %2017 = vmatprep.subr.bf16.mxu0 %v1213
  %2018 = vmatpush1.bf16.msra.mxu0 %v1212
  %2019 = vmatprep.subr.bf16.mxu0 %v1221
  %2020 = vmatpush1.bf16.msra.mxu0 %v1220
  %2021 = vmatprep.subr.bf16.mxu0 %v1229
  %2022 = vmatpush1.bf16.msra.mxu0 %v1228
  %2023 = vmatprep.subr.bf16.mxu0 %v1237
  %2024 = vmatpush1.bf16.msra.mxu0 %v1236
  %2025 = vmatprep.subr.bf16.mxu0 %v1245
  %2026 = vmatpush1.bf16.msra.mxu0 %v1244
  %2027 = vmatprep.subr.bf16.mxu0 %v1253
  %2028 = vmatpush1.bf16.msra.mxu0 %v1252
  %2029 = vmatprep.subr.bf16.mxu0 %v1261
  %2030 = vmatpush1.bf16.msra.mxu0 %v1260
  %2031 = vmatprep.subr.bf16.mxu0 %v1269
  %2032 = vmatpush1.bf16.msra.mxu0 %v1268
  %2033 = vmatprep.mubr.bf16.mxu0 %v1875
  %2034 = vmatmul.mubr.bf16.gmra.mrb[0].mxu0 %v1874
  %v2035 = vpop.f32.mrb[0].mxu0
  %v2036 = vadd.f32 0.0, %v2035
  %v2037 = vpop.f32.mrb[0].mxu0
  %v2038 = vadd.f32 0.0, %v2037
  %v2039 = vpop.f32.mrb[0].mxu0
  %v2040 = vpop.f32.mrb[0].mxu0
  %2041 = vdwg.mxu0
  %v2050 = vrot.slane %v1913, 4
  %v2051 = vrot.slane %v1915, 4
  %v2052 = vrot.slane %v1954, 4
  %v2053 = vrot.slane %v1956, 4
  %v2054 = vrot.slane %v1995, 4
  %v2055 = vrot.slane %v1997, 4
  %v2056 = vrot.slane %v2036, 4
  %v2057 = vrot.slane %v2038, 4
  %v2066 = vadd.f32 %v493, %v2050
  %v2067 = vadd.f32 %v495, %v2051
  %v2068 = vadd.f32 %v536, %v2052
  %v2069 = vadd.f32 %v538, %v2053
  %v2070 = vadd.f32 %v579, %v2054
  %v2071 = vadd.f32 %v581, %v2055
  %v2072 = vadd.f32 %v622, %v2056
  %v2073 = vadd.f32 %v624, %v2057
  %v2074 = vxor.u32 %v2066, 2147483648
  %v2075 = vxor.u32 %v2067, 2147483648
  %v2076 = vmul.f32 %v2074, 1.442695
  %v2077 = vpow.pop %v2076
  %v2078 = vmul.f32 %v2075, 1.442695
  %v2079 = vpow.pop %v2078
  %v2080 = vadd.f32 %v2077, 1.0
  %v2081 = vadd.f32 %v2079, 1.0
  %v2082 = vrcp.pop %v2080
  %v2083 = vmul.f32 1.0, %v2082
  %v2084 = vrcp.pop %v2081
  %v2085 = vmul.f32 1.0, %v2084
  %v2086 = vxor.u32 %v2068, 2147483648
  %v2087 = vxor.u32 %v2069, 2147483648
  %v2088 = vmul.f32 %v2086, 1.442695
  %v2089 = vpow.pop %v2088
  %v2090 = vmul.f32 %v2087, 1.442695
  %v2091 = vpow.pop %v2090
  %v2092 = vadd.f32 %v2089, 1.0
  %v2093 = vadd.f32 %v2091, 1.0
  %v2094 = vrcp.pop %v2092
  %v2095 = vmul.f32 1.0, %v2094
  %v2096 = vrcp.pop %v2093
  %v2097 = vmul.f32 1.0, %v2096
  %v2098 = vtanh.pop %v2070
  %v2099 = vtanh.pop %v2071
  %v2100 = vxor.u32 %v2072, 2147483648
  %v2101 = vxor.u32 %v2073, 2147483648
  %v2102 = vmul.f32 %v2100, 1.442695
  %v2103 = vpow.pop %v2102
  %v2104 = vmul.f32 %v2101, 1.442695
  %v2105 = vpow.pop %v2104
  %v2106 = vadd.f32 %v2103, 1.0
  %v2107 = vadd.f32 %v2105, 1.0
  %v2108 = vrcp.pop %v2106
  %v2109 = vmul.f32 1.0, %v2108
  %v2110 = vrcp.pop %v2107
  %v2111 = vmul.f32 1.0, %v2110
  %v2114 = vrot.slane %v1864, 6
  %v2115 = vrot.slane %v1865, 6
  %v2118 = vmul.f32 %v2095, %v2114
  %v2119 = vmul.f32 %v2097, %v2115
  %v2120 = vmul.f32 %v2083, %v2098
  %v2121 = vmul.f32 %v2085, %v2099
  %v2122 = vadd.f32 %v2118, %v2120
  %v2123 = vadd.f32 %v2119, %v2121
  %v2124 = vtanh.pop %v2122
  %v2125 = vtanh.pop %v2123
  %v2126 = vmul.f32 %v2109, %v2124
  %v2127 = vmul.f32 %v2111, %v2125
  %v2128 = vpack.c.bf16 %v2126, %v2126
  %v2129 = vpack.c.bf16 %v2127, %v2127
  %v2132 = vrot.slane %v2128, 2
  %v2133 = vrot.slane %v2129, 2
  %2136 = vmatprep.subr.bf16.mxu0 %v1143
  %2137 = vmatpush1.bf16.msra.mxu0 %v1142
  %2138 = vmatprep.subr.bf16.mxu0 %v1151
  %2139 = vmatpush1.bf16.msra.mxu0 %v1150
  %2140 = vmatprep.subr.bf16.mxu0 %v1159
  %2141 = vmatpush1.bf16.msra.mxu0 %v1158
  %2142 = vmatprep.subr.bf16.mxu0 %v1167
  %2143 = vmatpush1.bf16.msra.mxu0 %v1166
  %2144 = vmatprep.subr.bf16.mxu0 %v1175
  %2145 = vmatpush1.bf16.msra.mxu0 %v1174
  %2146 = vmatprep.subr.bf16.mxu0 %v1183
  %2147 = vmatpush1.bf16.msra.mxu0 %v1182
  %2148 = vmatprep.subr.bf16.mxu0 %v1191
  %2149 = vmatpush1.bf16.msra.mxu0 %v1190
  %2150 = vmatprep.subr.bf16.mxu0 %v1199
  %2151 = vmatpush1.bf16.msra.mxu0 %v1198
  %2152 = vmatprep.subr.bf16.mxu0 %v1207
  %2153 = vmatpush1.bf16.msra.mxu0 %v1206
  %2154 = vmatprep.subr.bf16.mxu0 %v1215
  %2155 = vmatpush1.bf16.msra.mxu0 %v1214
  %2156 = vmatprep.subr.bf16.mxu0 %v1223
  %2157 = vmatpush1.bf16.msra.mxu0 %v1222
  %2158 = vmatprep.subr.bf16.mxu0 %v1231
  %2159 = vmatpush1.bf16.msra.mxu0 %v1230
  %2160 = vmatprep.subr.bf16.mxu0 %v1239
  %2161 = vmatpush1.bf16.msra.mxu0 %v1238
  %2162 = vmatprep.subr.bf16.mxu0 %v1247
  %2163 = vmatpush1.bf16.msra.mxu0 %v1246
  %2164 = vmatprep.subr.bf16.mxu0 %v1255
  %2165 = vmatpush1.bf16.msra.mxu0 %v1254
  %2166 = vmatprep.subr.bf16.mxu0 %v1263
  %2167 = vmatpush1.bf16.msra.mxu0 %v1262
  %2168 = vmatprep.mubr.bf16.mxu0 %v2133
  %2169 = vmatmul.mubr.bf16.gmra.mrb[0].mxu0 %v2132
  %v2170 = vpop.f32.mrb[0].mxu0
  %v2171 = vadd.f32 0.0, %v2170
  %v2172 = vpop.f32.mrb[0].mxu0
  %v2173 = vadd.f32 0.0, %v2172
  %v2174 = vpop.f32.mrb[0].mxu0
  %v2175 = vpop.f32.mrb[0].mxu0
  %2176 = vdwg.mxu0
  %2177 = vmatprep.subr.bf16.mxu0 %v1145
  %2178 = vmatpush1.bf16.msra.mxu0 %v1144
  %2179 = vmatprep.subr.bf16.mxu0 %v1153
  %2180 = vmatpush1.bf16.msra.mxu0 %v1152
  %2181 = vmatprep.subr.bf16.mxu0 %v1161
  %2182 = vmatpush1.bf16.msra.mxu0 %v1160
  %2183 = vmatprep.subr.bf16.mxu0 %v1169
  %2184 = vmatpush1.bf16.msra.mxu0 %v1168
  %2185 = vmatprep.subr.bf16.mxu0 %v1177
  %2186 = vmatpush1.bf16.msra.mxu0 %v1176
  %2187 = vmatprep.subr.bf16.mxu0 %v1185
  %2188 = vmatpush1.bf16.msra.mxu0 %v1184
  %2189 = vmatprep.subr.bf16.mxu0 %v1193
  %2190 = vmatpush1.bf16.msra.mxu0 %v1192
  %2191 = vmatprep.subr.bf16.mxu0 %v1201
  %2192 = vmatpush1.bf16.msra.mxu0 %v1200
  %2193 = vmatprep.subr.bf16.mxu0 %v1209
  %2194 = vmatpush1.bf16.msra.mxu0 %v1208
  %2195 = vmatprep.subr.bf16.mxu0 %v1217
  %2196 = vmatpush1.bf16.msra.mxu0 %v1216
  %2197 = vmatprep.subr.bf16.mxu0 %v1225
  %2198 = vmatpush1.bf16.msra.mxu0 %v1224
  %2199 = vmatprep.subr.bf16.mxu0 %v1233
  %2200 = vmatpush1.bf16.msra.mxu0 %v1232
  %2201 = vmatprep.subr.bf16.mxu0 %v1241
  %2202 = vmatpush1.bf16.msra.mxu0 %v1240
  %2203 = vmatprep.subr.bf16.mxu0 %v1249
  %2204 = vmatpush1.bf16.msra.mxu0 %v1248
  %2205 = vmatprep.subr.bf16.mxu0 %v1257
  %2206 = vmatpush1.bf16.msra.mxu0 %v1256
  %2207 = vmatprep.subr.bf16.mxu0 %v1265
  %2208 = vmatpush1.bf16.msra.mxu0 %v1264
  %2209 = vmatprep.mubr.bf16.mxu0 %v2133
  %2210 = vmatmul.mubr.bf16.gmra.mrb[0].mxu0 %v2132
  %v2211 = vpop.f32.mrb[0].mxu0
  %v2212 = vadd.f32 0.0, %v2211
  %v2213 = vpop.f32.mrb[0].mxu0
  %v2214 = vadd.f32 0.0, %v2213
  %v2215 = vpop.f32.mrb[0].mxu0
  %v2216 = vpop.f32.mrb[0].mxu0
  %2217 = vdwg.mxu0
  %2218 = vmatprep.subr.bf16.mxu0 %v1147
  %2219 = vmatpush1.bf16.msra.mxu0 %v1146
  %2220 = vmatprep.subr.bf16.mxu0 %v1155
  %2221 = vmatpush1.bf16.msra.mxu0 %v1154
  %2222 = vmatprep.subr.bf16.mxu0 %v1163
  %2223 = vmatpush1.bf16.msra.mxu0 %v1162
  %2224 = vmatprep.subr.bf16.mxu0 %v1171
  %2225 = vmatpush1.bf16.msra.mxu0 %v1170
  %2226 = vmatprep.subr.bf16.mxu0 %v1179
  %2227 = vmatpush1.bf16.msra.mxu0 %v1178
  %2228 = vmatprep.subr.bf16.mxu0 %v1187
  %2229 = vmatpush1.bf16.msra.mxu0 %v1186
  %2230 = vmatprep.subr.bf16.mxu0 %v1195
  %2231 = vmatpush1.bf16.msra.mxu0 %v1194
  %2232 = vmatprep.subr.bf16.mxu0 %v1203
  %2233 = vmatpush1.bf16.msra.mxu0 %v1202
  %2234 = vmatprep.subr.bf16.mxu0 %v1211
  %2235 = vmatpush1.bf16.msra.mxu0 %v1210
  %2236 = vmatprep.subr.bf16.mxu0 %v1219
  %2237 = vmatpush1.bf16.msra.mxu0 %v1218
  %2238 = vmatprep.subr.bf16.mxu0 %v1227
  %2239 = vmatpush1.bf16.msra.mxu0 %v1226
  %2240 = vmatprep.subr.bf16.mxu0 %v1235
  %2241 = vmatpush1.bf16.msra.mxu0 %v1234
  %2242 = vmatprep.subr.bf16.mxu0 %v1243
  %2243 = vmatpush1.bf16.msra.mxu0 %v1242
  %2244 = vmatprep.subr.bf16.mxu0 %v1251
  %2245 = vmatpush1.bf16.msra.mxu0 %v1250
  %2246 = vmatprep.subr.bf16.mxu0 %v1259
  %2247 = vmatpush1.bf16.msra.mxu0 %v1258
  %2248 = vmatprep.subr.bf16.mxu0 %v1267
  %2249 = vmatpush1.bf16.msra.mxu0 %v1266
  %2250 = vmatprep.mubr.bf16.mxu0 %v2133
  %2251 = vmatmul.mubr.bf16.gmra.mrb[0].mxu0 %v2132
  %v2252 = vpop.f32.mrb[0].mxu0
  %v2253 = vadd.f32 0.0, %v2252
  %v2254 = vpop.f32.mrb[0].mxu0
  %v2255 = vadd.f32 0.0, %v2254
  %v2256 = vpop.f32.mrb[0].mxu0
  %v2257 = vpop.f32.mrb[0].mxu0
  %2258 = vdwg.mxu0
  %2259 = vmatprep.subr.bf16.mxu0 %v1149
  %2260 = vmatpush1.bf16.msra.mxu0 %v1148
  %2261 = vmatprep.subr.bf16.mxu0 %v1157
  %2262 = vmatpush1.bf16.msra.mxu0 %v1156
  %2263 = vmatprep.subr.bf16.mxu0 %v1165
  %2264 = vmatpush1.bf16.msra.mxu0 %v1164
  %2265 = vmatprep.subr.bf16.mxu0 %v1173
  %2266 = vmatpush1.bf16.msra.mxu0 %v1172
  %2267 = vmatprep.subr.bf16.mxu0 %v1181
  %2268 = vmatpush1.bf16.msra.mxu0 %v1180
  %2269 = vmatprep.subr.bf16.mxu0 %v1189
  %2270 = vmatpush1.bf16.msra.mxu0 %v1188
  %2271 = vmatprep.subr.bf16.mxu0 %v1197
  %2272 = vmatpush1.bf16.msra.mxu0 %v1196
  %2273 = vmatprep.subr.bf16.mxu0 %v1205
  %2274 = vmatpush1.bf16.msra.mxu0 %v1204
  %2275 = vmatprep.subr.bf16.mxu0 %v1213
  %2276 = vmatpush1.bf16.msra.mxu0 %v1212
  %2277 = vmatprep.subr.bf16.mxu0 %v1221
  %2278 = vmatpush1.bf16.msra.mxu0 %v1220
  %2279 = vmatprep.subr.bf16.mxu0 %v1229
  %2280 = vmatpush1.bf16.msra.mxu0 %v1228
  %2281 = vmatprep.subr.bf16.mxu0 %v1237
  %2282 = vmatpush1.bf16.msra.mxu0 %v1236
  %2283 = vmatprep.subr.bf16.mxu0 %v1245
  %2284 = vmatpush1.bf16.msra.mxu0 %v1244
  %2285 = vmatprep.subr.bf16.mxu0 %v1253
  %2286 = vmatpush1.bf16.msra.mxu0 %v1252
  %2287 = vmatprep.subr.bf16.mxu0 %v1261
  %2288 = vmatpush1.bf16.msra.mxu0 %v1260
  %2289 = vmatprep.subr.bf16.mxu0 %v1269
  %2290 = vmatpush1.bf16.msra.mxu0 %v1268
  %2291 = vmatprep.mubr.bf16.mxu0 %v2133
  %2292 = vmatmul.mubr.bf16.gmra.mrb[0].mxu0 %v2132
  %v2293 = vpop.f32.mrb[0].mxu0
  %v2294 = vadd.f32 0.0, %v2293
  %v2295 = vpop.f32.mrb[0].mxu0
  %v2296 = vadd.f32 0.0, %v2295
  %v2297 = vpop.f32.mrb[0].mxu0
  %v2298 = vpop.f32.mrb[0].mxu0
  %2299 = vdwg.mxu0
  %v2308 = vrot.slane %v2171, 2
  %v2309 = vrot.slane %v2173, 2
  %v2310 = vrot.slane %v2212, 2
  %v2311 = vrot.slane %v2214, 2
  %v2312 = vrot.slane %v2253, 2
  %v2313 = vrot.slane %v2255, 2
  %v2314 = vrot.slane %v2294, 2
  %v2315 = vrot.slane %v2296, 2
  %v2324 = vadd.f32 %v493, %v2308
  %v2325 = vadd.f32 %v495, %v2309
  %v2326 = vadd.f32 %v536, %v2310
  %v2327 = vadd.f32 %v538, %v2311
  %v2328 = vadd.f32 %v579, %v2312
  %v2329 = vadd.f32 %v581, %v2313
  %v2330 = vadd.f32 %v622, %v2314
  %v2331 = vadd.f32 %v624, %v2315
  %v2332 = vxor.u32 %v2324, 2147483648
  %v2333 = vxor.u32 %v2325, 2147483648
  %v2334 = vmul.f32 %v2332, 1.442695
  %v2335 = vpow.pop %v2334
  %v2336 = vmul.f32 %v2333, 1.442695
  %v2337 = vpow.pop %v2336
  %v2338 = vadd.f32 %v2335, 1.0
  %v2339 = vadd.f32 %v2337, 1.0
  %v2340 = vrcp.pop %v2338
  %v2341 = vmul.f32 1.0, %v2340
  %v2342 = vrcp.pop %v2339
  %v2343 = vmul.f32 1.0, %v2342
  %v2344 = vxor.u32 %v2326, 2147483648
  %v2345 = vxor.u32 %v2327, 2147483648
  %v2346 = vmul.f32 %v2344, 1.442695
  %v2347 = vpow.pop %v2346
  %v2348 = vmul.f32 %v2345, 1.442695
  %v2349 = vpow.pop %v2348
  %v2350 = vadd.f32 %v2347, 1.0
  %v2351 = vadd.f32 %v2349, 1.0
  %v2352 = vrcp.pop %v2350
  %v2353 = vmul.f32 1.0, %v2352
  %v2354 = vrcp.pop %v2351
  %v2355 = vmul.f32 1.0, %v2354
  %v2356 = vtanh.pop %v2328
  %v2357 = vtanh.pop %v2329
  %v2358 = vxor.u32 %v2330, 2147483648
  %v2359 = vxor.u32 %v2331, 2147483648
  %v2360 = vmul.f32 %v2358, 1.442695
  %v2361 = vpow.pop %v2360
  %v2362 = vmul.f32 %v2359, 1.442695
  %v2363 = vpow.pop %v2362
  %v2364 = vadd.f32 %v2361, 1.0
  %v2365 = vadd.f32 %v2363, 1.0
  %v2366 = vrcp.pop %v2364
  %v2367 = vmul.f32 1.0, %v2366
  %v2368 = vrcp.pop %v2365
  %v2369 = vmul.f32 1.0, %v2368
  %v2372 = vrot.slane %v2122, 6
  %v2373 = vrot.slane %v2123, 6
  %v2376 = vmul.f32 %v2353, %v2372
  %v2377 = vmul.f32 %v2355, %v2373
  %v2378 = vmul.f32 %v2341, %v2356
  %v2379 = vmul.f32 %v2343, %v2357
  %v2380 = vadd.f32 %v2376, %v2378
  %v2381 = vadd.f32 %v2377, %v2379
  %v2382 = vtanh.pop %v2380
  %v2383 = vtanh.pop %v2381
  %v2384 = vmul.f32 %v2367, %v2382
  %v2385 = vmul.f32 %v2369, %v2383
  %v2386 = vpack.c.bf16 %v2384, %v2384
  %v2387 = vpack.c.bf16 %v2385, %v2385
  %v2390 = vrot.slane %v2386, 3
  %v2391 = vrot.slane %v2387, 3
  %2394 = vmatprep.subr.bf16.mxu0 %v1143
  %2395 = vmatpush1.bf16.msra.mxu0 %v1142
  %2396 = vmatprep.subr.bf16.mxu0 %v1151
  %2397 = vmatpush1.bf16.msra.mxu0 %v1150
  %2398 = vmatprep.subr.bf16.mxu0 %v1159
  %2399 = vmatpush1.bf16.msra.mxu0 %v1158
  %2400 = vmatprep.subr.bf16.mxu0 %v1167
  %2401 = vmatpush1.bf16.msra.mxu0 %v1166
  %2402 = vmatprep.subr.bf16.mxu0 %v1175
  %2403 = vmatpush1.bf16.msra.mxu0 %v1174
  %2404 = vmatprep.subr.bf16.mxu0 %v1183
  %2405 = vmatpush1.bf16.msra.mxu0 %v1182
  %2406 = vmatprep.subr.bf16.mxu0 %v1191
  %2407 = vmatpush1.bf16.msra.mxu0 %v1190
  %2408 = vmatprep.subr.bf16.mxu0 %v1199
  %2409 = vmatpush1.bf16.msra.mxu0 %v1198
  %2410 = vmatprep.subr.bf16.mxu0 %v1207
  %2411 = vmatpush1.bf16.msra.mxu0 %v1206
  %2412 = vmatprep.subr.bf16.mxu0 %v1215
  %2413 = vmatpush1.bf16.msra.mxu0 %v1214
  %2414 = vmatprep.subr.bf16.mxu0 %v1223
  %2415 = vmatpush1.bf16.msra.mxu0 %v1222
  %2416 = vmatprep.subr.bf16.mxu0 %v1231
  %2417 = vmatpush1.bf16.msra.mxu0 %v1230
  %2418 = vmatprep.subr.bf16.mxu0 %v1239
  %2419 = vmatpush1.bf16.msra.mxu0 %v1238
  %2420 = vmatprep.subr.bf16.mxu0 %v1247
  %2421 = vmatpush1.bf16.msra.mxu0 %v1246
  %2422 = vmatprep.subr.bf16.mxu0 %v1255
  %2423 = vmatpush1.bf16.msra.mxu0 %v1254
  %2424 = vmatprep.subr.bf16.mxu0 %v1263
  %2425 = vmatpush1.bf16.msra.mxu0 %v1262
  %2426 = vmatprep.mubr.bf16.mxu0 %v2391
  %2427 = vmatmul.mubr.bf16.gmra.mrb[0].mxu0 %v2390
  %v2428 = vpop.f32.mrb[0].mxu0
  %v2429 = vadd.f32 0.0, %v2428
  %v2430 = vpop.f32.mrb[0].mxu0
  %v2431 = vadd.f32 0.0, %v2430
  %v2432 = vpop.f32.mrb[0].mxu0
  %v2433 = vpop.f32.mrb[0].mxu0
  %2434 = vdwg.mxu0
  %2435 = vmatprep.subr.bf16.mxu0 %v1145
  %2436 = vmatpush1.bf16.msra.mxu0 %v1144
  %2437 = vmatprep.subr.bf16.mxu0 %v1153
  %2438 = vmatpush1.bf16.msra.mxu0 %v1152
  %2439 = vmatprep.subr.bf16.mxu0 %v1161
  %2440 = vmatpush1.bf16.msra.mxu0 %v1160
  %2441 = vmatprep.subr.bf16.mxu0 %v1169
  %2442 = vmatpush1.bf16.msra.mxu0 %v1168
  %2443 = vmatprep.subr.bf16.mxu0 %v1177
  %2444 = vmatpush1.bf16.msra.mxu0 %v1176
  %2445 = vmatprep.subr.bf16.mxu0 %v1185
  %2446 = vmatpush1.bf16.msra.mxu0 %v1184
  %2447 = vmatprep.subr.bf16.mxu0 %v1193
  %2448 = vmatpush1.bf16.msra.mxu0 %v1192
  %2449 = vmatprep.subr.bf16.mxu0 %v1201
  %2450 = vmatpush1.bf16.msra.mxu0 %v1200
  %2451 = vmatprep.subr.bf16.mxu0 %v1209
  %2452 = vmatpush1.bf16.msra.mxu0 %v1208
  %2453 = vmatprep.subr.bf16.mxu0 %v1217
  %2454 = vmatpush1.bf16.msra.mxu0 %v1216
  %2455 = vmatprep.subr.bf16.mxu0 %v1225
  %2456 = vmatpush1.bf16.msra.mxu0 %v1224
  %2457 = vmatprep.subr.bf16.mxu0 %v1233
  %2458 = vmatpush1.bf16.msra.mxu0 %v1232
  %2459 = vmatprep.subr.bf16.mxu0 %v1241
  %2460 = vmatpush1.bf16.msra.mxu0 %v1240
  %2461 = vmatprep.subr.bf16.mxu0 %v1249
  %2462 = vmatpush1.bf16.msra.mxu0 %v1248
  %2463 = vmatprep.subr.bf16.mxu0 %v1257
  %2464 = vmatpush1.bf16.msra.mxu0 %v1256
  %2465 = vmatprep.subr.bf16.mxu0 %v1265
  %2466 = vmatpush1.bf16.msra.mxu0 %v1264
  %2467 = vmatprep.mubr.bf16.mxu0 %v2391
  %2468 = vmatmul.mubr.bf16.gmra.mrb[0].mxu0 %v2390
  %v2469 = vpop.f32.mrb[0].mxu0
  %v2470 = vadd.f32 0.0, %v2469
  %v2471 = vpop.f32.mrb[0].mxu0
  %v2472 = vadd.f32 0.0, %v2471
  %v2473 = vpop.f32.mrb[0].mxu0
  %v2474 = vpop.f32.mrb[0].mxu0
  %2475 = vdwg.mxu0
  %2476 = vmatprep.subr.bf16.mxu0 %v1147
  %2477 = vmatpush1.bf16.msra.mxu0 %v1146
  %2478 = vmatprep.subr.bf16.mxu0 %v1155
  %2479 = vmatpush1.bf16.msra.mxu0 %v1154
  %2480 = vmatprep.subr.bf16.mxu0 %v1163
  %2481 = vmatpush1.bf16.msra.mxu0 %v1162
  %2482 = vmatprep.subr.bf16.mxu0 %v1171
  %2483 = vmatpush1.bf16.msra.mxu0 %v1170
  %2484 = vmatprep.subr.bf16.mxu0 %v1179
  %2485 = vmatpush1.bf16.msra.mxu0 %v1178
  %2486 = vmatprep.subr.bf16.mxu0 %v1187
  %2487 = vmatpush1.bf16.msra.mxu0 %v1186
  %2488 = vmatprep.subr.bf16.mxu0 %v1195
  %2489 = vmatpush1.bf16.msra.mxu0 %v1194
  %2490 = vmatprep.subr.bf16.mxu0 %v1203
  %2491 = vmatpush1.bf16.msra.mxu0 %v1202
  %2492 = vmatprep.subr.bf16.mxu0 %v1211
  %2493 = vmatpush1.bf16.msra.mxu0 %v1210
  %2494 = vmatprep.subr.bf16.mxu0 %v1219
  %2495 = vmatpush1.bf16.msra.mxu0 %v1218
  %2496 = vmatprep.subr.bf16.mxu0 %v1227
  %2497 = vmatpush1.bf16.msra.mxu0 %v1226
  %2498 = vmatprep.subr.bf16.mxu0 %v1235
  %2499 = vmatpush1.bf16.msra.mxu0 %v1234
  %2500 = vmatprep.subr.bf16.mxu0 %v1243
  %2501 = vmatpush1.bf16.msra.mxu0 %v1242
  %2502 = vmatprep.subr.bf16.mxu0 %v1251
  %2503 = vmatpush1.bf16.msra.mxu0 %v1250
  %2504 = vmatprep.subr.bf16.mxu0 %v1259
  %2505 = vmatpush1.bf16.msra.mxu0 %v1258
  %2506 = vmatprep.subr.bf16.mxu0 %v1267
  %2507 = vmatpush1.bf16.msra.mxu0 %v1266
  %2508 = vmatprep.mubr.bf16.mxu0 %v2391
  %2509 = vmatmul.mubr.bf16.gmra.mrb[0].mxu0 %v2390
  %v2510 = vpop.f32.mrb[0].mxu0
  %v2511 = vadd.f32 0.0, %v2510
  %v2512 = vpop.f32.mrb[0].mxu0
  %v2513 = vadd.f32 0.0, %v2512
  %v2514 = vpop.f32.mrb[0].mxu0
  %v2515 = vpop.f32.mrb[0].mxu0
  %2516 = vdwg.mxu0
  %2517 = vmatprep.subr.bf16.mxu0 %v1149
  %2518 = vmatpush1.bf16.msra.mxu0 %v1148
  %2519 = vmatprep.subr.bf16.mxu0 %v1157
  %2520 = vmatpush1.bf16.msra.mxu0 %v1156
  %2521 = vmatprep.subr.bf16.mxu0 %v1165
  %2522 = vmatpush1.bf16.msra.mxu0 %v1164
  %2523 = vmatprep.subr.bf16.mxu0 %v1173
  %2524 = vmatpush1.bf16.msra.mxu0 %v1172
  %2525 = vmatprep.subr.bf16.mxu0 %v1181
  %2526 = vmatpush1.bf16.msra.mxu0 %v1180
  %2527 = vmatprep.subr.bf16.mxu0 %v1189
  %2528 = vmatpush1.bf16.msra.mxu0 %v1188
  %2529 = vmatprep.subr.bf16.mxu0 %v1197
  %2530 = vmatpush1.bf16.msra.mxu0 %v1196
  %2531 = vmatprep.subr.bf16.mxu0 %v1205
  %2532 = vmatpush1.bf16.msra.mxu0 %v1204
  %2533 = vmatprep.subr.bf16.mxu0 %v1213
  %2534 = vmatpush1.bf16.msra.mxu0 %v1212
  %2535 = vmatprep.subr.bf16.mxu0 %v1221
  %2536 = vmatpush1.bf16.msra.mxu0 %v1220
  %2537 = vmatprep.subr.bf16.mxu0 %v1229
  %2538 = vmatpush1.bf16.msra.mxu0 %v1228
  %2539 = vmatprep.subr.bf16.mxu0 %v1237
  %2540 = vmatpush1.bf16.msra.mxu0 %v1236
  %2541 = vmatprep.subr.bf16.mxu0 %v1245
  %2542 = vmatpush1.bf16.msra.mxu0 %v1244
  %2543 = vmatprep.subr.bf16.mxu0 %v1253
  %2544 = vmatpush1.bf16.msra.mxu0 %v1252
  %2545 = vmatprep.subr.bf16.mxu0 %v1261
  %2546 = vmatpush1.bf16.msra.mxu0 %v1260
  %2547 = vmatprep.subr.bf16.mxu0 %v1269
  %2548 = vmatpush1.bf16.msra.mxu0 %v1268
  %2549 = vmatprep.mubr.bf16.mxu0 %v2391
  %2550 = vmatmul.mubr.bf16.gmra.mrb[0].mxu0 %v2390
  %v2551 = vpop.f32.mrb[0].mxu0
  %v2552 = vadd.f32 0.0, %v2551
  %v2553 = vpop.f32.mrb[0].mxu0
  %v2554 = vadd.f32 0.0, %v2553
  %v2555 = vpop.f32.mrb[0].mxu0
  %v2556 = vpop.f32.mrb[0].mxu0
  %2557 = vdwg.mxu0
  %v2558 = vadd.f32 %v497, %v2429
  %v2559 = vadd.f32 %v499, %v2431
  %v2560 = vadd.f32 %v540, %v2470
  %v2561 = vadd.f32 %v542, %v2472
  %v2562 = vadd.f32 %v583, %v2511
  %v2563 = vadd.f32 %v585, %v2513
  %v2564 = vadd.f32 %v626, %v2552
  %v2565 = vadd.f32 %v628, %v2554
  %v2566 = vxor.u32 %v2558, 2147483648
  %v2567 = vxor.u32 %v2559, 2147483648
  %v2568 = vmul.f32 %v2566, 1.442695
  %v2569 = vpow.pop %v2568
  %v2570 = vmul.f32 %v2567, 1.442695
  %v2571 = vpow.pop %v2570
  %v2572 = vadd.f32 %v2569, 1.0
  %v2573 = vadd.f32 %v2571, 1.0
  %v2574 = vrcp.pop %v2572
  %v2575 = vmul.f32 1.0, %v2574
  %v2576 = vrcp.pop %v2573
  %v2577 = vmul.f32 1.0, %v2576
  %v2578 = vxor.u32 %v2560, 2147483648
  %v2579 = vxor.u32 %v2561, 2147483648
  %v2580 = vmul.f32 %v2578, 1.442695
  %v2581 = vpow.pop %v2580
  %v2582 = vmul.f32 %v2579, 1.442695
  %v2583 = vpow.pop %v2582
  %v2584 = vadd.f32 %v2581, 1.0
  %v2585 = vadd.f32 %v2583, 1.0
  %v2586 = vrcp.pop %v2584
  %v2587 = vmul.f32 1.0, %v2586
  %v2588 = vrcp.pop %v2585
  %v2589 = vmul.f32 1.0, %v2588
  %v2590 = vtanh.pop %v2562
  %v2591 = vtanh.pop %v2563
  %v2592 = vxor.u32 %v2564, 2147483648
  %v2593 = vxor.u32 %v2565, 2147483648
  %v2594 = vmul.f32 %v2592, 1.442695
  %v2595 = vpow.pop %v2594
  %v2596 = vmul.f32 %v2593, 1.442695
  %v2597 = vpow.pop %v2596
  %v2598 = vadd.f32 %v2595, 1.0
  %v2599 = vadd.f32 %v2597, 1.0
  %v2600 = vrcp.pop %v2598
  %v2601 = vmul.f32 1.0, %v2600
  %v2602 = vrcp.pop %v2599
  %v2603 = vmul.f32 1.0, %v2602
  %v2606 = vrot.slane %v2380, 6
  %v2607 = vrot.slane %v2381, 6
  %v2610 = vmul.f32 %v2587, %v2606
  %v2611 = vmul.f32 %v2589, %v2607
  %v2612 = vmul.f32 %v2575, %v2590
  %v2613 = vmul.f32 %v2577, %v2591
  %v2614 = vadd.f32 %v2610, %v2612
  %v2615 = vadd.f32 %v2611, %v2613
  %v2616 = vtanh.pop %v2614
  %v2617 = vtanh.pop %v2615
  %v2618 = vmul.f32 %v2601, %v2616
  %v2619 = vmul.f32 %v2603, %v2617
  %v2620 = vpack.c.bf16 %v2618, %v2618
  %v2621 = vpack.c.bf16 %v2619, %v2619
  %2622 = vmatprep.subr.bf16.mxu0 %v1143
  %2623 = vmatpush1.bf16.msra.mxu0 %v1142
  %2624 = vmatprep.subr.bf16.mxu0 %v1151
  %2625 = vmatpush1.bf16.msra.mxu0 %v1150
  %2626 = vmatprep.subr.bf16.mxu0 %v1159
  %2627 = vmatpush1.bf16.msra.mxu0 %v1158
  %2628 = vmatprep.subr.bf16.mxu0 %v1167
  %2629 = vmatpush1.bf16.msra.mxu0 %v1166
  %2630 = vmatprep.subr.bf16.mxu0 %v1175
  %2631 = vmatpush1.bf16.msra.mxu0 %v1174
  %2632 = vmatprep.subr.bf16.mxu0 %v1183
  %2633 = vmatpush1.bf16.msra.mxu0 %v1182
  %2634 = vmatprep.subr.bf16.mxu0 %v1191
  %2635 = vmatpush1.bf16.msra.mxu0 %v1190
  %2636 = vmatprep.subr.bf16.mxu0 %v1199
  %2637 = vmatpush1.bf16.msra.mxu0 %v1198
  %2638 = vmatprep.subr.bf16.mxu0 %v1207
  %2639 = vmatpush1.bf16.msra.mxu0 %v1206
  %2640 = vmatprep.subr.bf16.mxu0 %v1215
  %2641 = vmatpush1.bf16.msra.mxu0 %v1214
  %2642 = vmatprep.subr.bf16.mxu0 %v1223
  %2643 = vmatpush1.bf16.msra.mxu0 %v1222
  %2644 = vmatprep.subr.bf16.mxu0 %v1231
  %2645 = vmatpush1.bf16.msra.mxu0 %v1230
  %2646 = vmatprep.subr.bf16.mxu0 %v1239
  %2647 = vmatpush1.bf16.msra.mxu0 %v1238
  %2648 = vmatprep.subr.bf16.mxu0 %v1247
  %2649 = vmatpush1.bf16.msra.mxu0 %v1246
  %2650 = vmatprep.subr.bf16.mxu0 %v1255
  %2651 = vmatpush1.bf16.msra.mxu0 %v1254
  %2652 = vmatprep.subr.bf16.mxu0 %v1263
  %2653 = vmatpush1.bf16.msra.mxu0 %v1262
  %2654 = vmatprep.mubr.bf16.mxu0 %v2621
  %2655 = vmatmul.mubr.bf16.gmra.mrb[0].mxu0 %v2620
  %v2656 = vpop.f32.mrb[0].mxu0
  %v2657 = vadd.f32 0.0, %v2656
  %v2658 = vpop.f32.mrb[0].mxu0
  %v2659 = vadd.f32 0.0, %v2658
  %v2660 = vpop.f32.mrb[0].mxu0
  %v2661 = vpop.f32.mrb[0].mxu0
  %2662 = vdwg.mxu0
  %2663 = vmatprep.subr.bf16.mxu0 %v1145
  %2664 = vmatpush1.bf16.msra.mxu0 %v1144
  %2665 = vmatprep.subr.bf16.mxu0 %v1153
  %2666 = vmatpush1.bf16.msra.mxu0 %v1152
  %2667 = vmatprep.subr.bf16.mxu0 %v1161
  %2668 = vmatpush1.bf16.msra.mxu0 %v1160
  %2669 = vmatprep.subr.bf16.mxu0 %v1169
  %2670 = vmatpush1.bf16.msra.mxu0 %v1168
  %2671 = vmatprep.subr.bf16.mxu0 %v1177
  %2672 = vmatpush1.bf16.msra.mxu0 %v1176
  %2673 = vmatprep.subr.bf16.mxu0 %v1185
  %2674 = vmatpush1.bf16.msra.mxu0 %v1184
  %2675 = vmatprep.subr.bf16.mxu0 %v1193
  %2676 = vmatpush1.bf16.msra.mxu0 %v1192
  %2677 = vmatprep.subr.bf16.mxu0 %v1201
  %2678 = vmatpush1.bf16.msra.mxu0 %v1200
  %2679 = vmatprep.subr.bf16.mxu0 %v1209
  %2680 = vmatpush1.bf16.msra.mxu0 %v1208
  %2681 = vmatprep.subr.bf16.mxu0 %v1217
  %2682 = vmatpush1.bf16.msra.mxu0 %v1216
  %2683 = vmatprep.subr.bf16.mxu0 %v1225
  %2684 = vmatpush1.bf16.msra.mxu0 %v1224
  %2685 = vmatprep.subr.bf16.mxu0 %v1233
  %2686 = vmatpush1.bf16.msra.mxu0 %v1232
  %2687 = vmatprep.subr.bf16.mxu0 %v1241
  %2688 = vmatpush1.bf16.msra.mxu0 %v1240
  %2689 = vmatprep.subr.bf16.mxu0 %v1249
  %2690 = vmatpush1.bf16.msra.mxu0 %v1248
  %2691 = vmatprep.subr.bf16.mxu0 %v1257
  %2692 = vmatpush1.bf16.msra.mxu0 %v1256
  %2693 = vmatprep.subr.bf16.mxu0 %v1265
  %2694 = vmatpush1.bf16.msra.mxu0 %v1264
  %2695 = vmatprep.mubr.bf16.mxu0 %v2621
  %2696 = vmatmul.mubr.bf16.gmra.mrb[0].mxu0 %v2620
  %v2697 = vpop.f32.mrb[0].mxu0
  %v2698 = vadd.f32 0.0, %v2697
  %v2699 = vpop.f32.mrb[0].mxu0
  %v2700 = vadd.f32 0.0, %v2699
  %v2701 = vpop.f32.mrb[0].mxu0
  %v2702 = vpop.f32.mrb[0].mxu0
  %2703 = vdwg.mxu0
  %2704 = vmatprep.subr.bf16.mxu0 %v1147
  %2705 = vmatpush1.bf16.msra.mxu0 %v1146
  %2706 = vmatprep.subr.bf16.mxu0 %v1155
  %2707 = vmatpush1.bf16.msra.mxu0 %v1154
  %2708 = vmatprep.subr.bf16.mxu0 %v1163
  %2709 = vmatpush1.bf16.msra.mxu0 %v1162
  %2710 = vmatprep.subr.bf16.mxu0 %v1171
  %2711 = vmatpush1.bf16.msra.mxu0 %v1170
  %2712 = vmatprep.subr.bf16.mxu0 %v1179
  %2713 = vmatpush1.bf16.msra.mxu0 %v1178
  %2714 = vmatprep.subr.bf16.mxu0 %v1187
  %2715 = vmatpush1.bf16.msra.mxu0 %v1186
  %2716 = vmatprep.subr.bf16.mxu0 %v1195
  %2717 = vmatpush1.bf16.msra.mxu0 %v1194
  %2718 = vmatprep.subr.bf16.mxu0 %v1203
  %2719 = vmatpush1.bf16.msra.mxu0 %v1202
  %2720 = vmatprep.subr.bf16.mxu0 %v1211
  %2721 = vmatpush1.bf16.msra.mxu0 %v1210
  %2722 = vmatprep.subr.bf16.mxu0 %v1219
  %2723 = vmatpush1.bf16.msra.mxu0 %v1218
  %2724 = vmatprep.subr.bf16.mxu0 %v1227
  %2725 = vmatpush1.bf16.msra.mxu0 %v1226
  %2726 = vmatprep.subr.bf16.mxu0 %v1235
  %2727 = vmatpush1.bf16.msra.mxu0 %v1234
  %2728 = vmatprep.subr.bf16.mxu0 %v1243
  %2729 = vmatpush1.bf16.msra.mxu0 %v1242
  %2730 = vmatprep.subr.bf16.mxu0 %v1251
  %2731 = vmatpush1.bf16.msra.mxu0 %v1250
  %2732 = vmatprep.subr.bf16.mxu0 %v1259
  %2733 = vmatpush1.bf16.msra.mxu0 %v1258
  %2734 = vmatprep.subr.bf16.mxu0 %v1267
  %2735 = vmatpush1.bf16.msra.mxu0 %v1266
  %2736 = vmatprep.mubr.bf16.mxu0 %v2621
  %2737 = vmatmul.mubr.bf16.gmra.mrb[0].mxu0 %v2620
  %v2738 = vpop.f32.mrb[0].mxu0
  %v2739 = vadd.f32 0.0, %v2738
  %v2740 = vpop.f32.mrb[0].mxu0
  %v2741 = vadd.f32 0.0, %v2740
  %v2742 = vpop.f32.mrb[0].mxu0
  %v2743 = vpop.f32.mrb[0].mxu0
  %2744 = vdwg.mxu0
  %2745 = vmatprep.subr.bf16.mxu0 %v1149
  %2746 = vmatpush1.bf16.msra.mxu0 %v1148
  %2747 = vmatprep.subr.bf16.mxu0 %v1157
  %2748 = vmatpush1.bf16.msra.mxu0 %v1156
  %2749 = vmatprep.subr.bf16.mxu0 %v1165
  %2750 = vmatpush1.bf16.msra.mxu0 %v1164
  %2751 = vmatprep.subr.bf16.mxu0 %v1173
  %2752 = vmatpush1.bf16.msra.mxu0 %v1172
  %2753 = vmatprep.subr.bf16.mxu0 %v1181
  %2754 = vmatpush1.bf16.msra.mxu0 %v1180
  %2755 = vmatprep.subr.bf16.mxu0 %v1189
  %2756 = vmatpush1.bf16.msra.mxu0 %v1188
  %2757 = vmatprep.subr.bf16.mxu0 %v1197
  %2758 = vmatpush1.bf16.msra.mxu0 %v1196
  %2759 = vmatprep.subr.bf16.mxu0 %v1205
  %2760 = vmatpush1.bf16.msra.mxu0 %v1204
  %2761 = vmatprep.subr.bf16.mxu0 %v1213
  %2762 = vmatpush1.bf16.msra.mxu0 %v1212
  %2763 = vmatprep.subr.bf16.mxu0 %v1221
  %2764 = vmatpush1.bf16.msra.mxu0 %v1220
  %2765 = vmatprep.subr.bf16.mxu0 %v1229
  %2766 = vmatpush1.bf16.msra.mxu0 %v1228
  %2767 = vmatprep.subr.bf16.mxu0 %v1237
  %2768 = vmatpush1.bf16.msra.mxu0 %v1236
  %2769 = vmatprep.subr.bf16.mxu0 %v1245
  %2770 = vmatpush1.bf16.msra.mxu0 %v1244
  %2771 = vmatprep.subr.bf16.mxu0 %v1253
  %2772 = vmatpush1.bf16.msra.mxu0 %v1252
  %2773 = vmatprep.subr.bf16.mxu0 %v1261
  %2774 = vmatpush1.bf16.msra.mxu0 %v1260
  %2775 = vmatprep.subr.bf16.mxu0 %v1269
  %2776 = vmatpush1.bf16.msra.mxu0 %v1268
  %2777 = vmatprep.mubr.bf16.mxu0 %v2621
  %2778 = vmatmul.mubr.bf16.gmra.mrb[0].mxu0 %v2620
  %v2779 = vpop.f32.mrb[0].mxu0
  %v2780 = vadd.f32 0.0, %v2779
  %v2781 = vpop.f32.mrb[0].mxu0
  %v2782 = vadd.f32 0.0, %v2781
  %v2783 = vpop.f32.mrb[0].mxu0
  %v2784 = vpop.f32.mrb[0].mxu0
  %2785 = vdwg.mxu0
  %v2794 = vrot.slane %v2657, 6
  %v2795 = vrot.slane %v2659, 6
  %v2796 = vrot.slane %v2698, 6
  %v2797 = vrot.slane %v2700, 6
  %v2798 = vrot.slane %v2739, 6
  %v2799 = vrot.slane %v2741, 6
  %v2800 = vrot.slane %v2780, 6
  %v2801 = vrot.slane %v2782, 6
  %v2810 = vadd.f32 %v497, %v2794
  %v2811 = vadd.f32 %v499, %v2795
  %v2812 = vadd.f32 %v540, %v2796
  %v2813 = vadd.f32 %v542, %v2797
  %v2814 = vadd.f32 %v583, %v2798
  %v2815 = vadd.f32 %v585, %v2799
  %v2816 = vadd.f32 %v626, %v2800
  %v2817 = vadd.f32 %v628, %v2801
  %v2818 = vxor.u32 %v2810, 2147483648
  %v2819 = vxor.u32 %v2811, 2147483648
  %v2820 = vmul.f32 %v2818, 1.442695
  %v2821 = vpow.pop %v2820
  %v2822 = vmul.f32 %v2819, 1.442695
  %v2823 = vpow.pop %v2822
  %v2824 = vadd.f32 %v2821, 1.0
  %v2825 = vadd.f32 %v2823, 1.0
  %v2826 = vrcp.pop %v2824
  %v2827 = vmul.f32 1.0, %v2826
  %v2828 = vrcp.pop %v2825
  %v2829 = vmul.f32 1.0, %v2828
  %v2830 = vxor.u32 %v2812, 2147483648
  %v2831 = vxor.u32 %v2813, 2147483648
  %v2832 = vmul.f32 %v2830, 1.442695
  %v2833 = vpow.pop %v2832
  %v2834 = vmul.f32 %v2831, 1.442695
  %v2835 = vpow.pop %v2834
  %v2836 = vadd.f32 %v2833, 1.0
  %v2837 = vadd.f32 %v2835, 1.0
  %v2838 = vrcp.pop %v2836
  %v2839 = vmul.f32 1.0, %v2838
  %v2840 = vrcp.pop %v2837
  %v2841 = vmul.f32 1.0, %v2840
  %v2842 = vtanh.pop %v2814
  %v2843 = vtanh.pop %v2815
  %v2844 = vxor.u32 %v2816, 2147483648
  %v2845 = vxor.u32 %v2817, 2147483648
  %v2846 = vmul.f32 %v2844, 1.442695
  %v2847 = vpow.pop %v2846
  %v2848 = vmul.f32 %v2845, 1.442695
  %v2849 = vpow.pop %v2848
  %v2850 = vadd.f32 %v2847, 1.0
  %v2851 = vadd.f32 %v2849, 1.0
  %v2852 = vrcp.pop %v2850
  %v2853 = vmul.f32 1.0, %v2852
  %v2854 = vrcp.pop %v2851
  %v2855 = vmul.f32 1.0, %v2854
  %v2858 = vrot.slane %v2614, 6
  %v2859 = vrot.slane %v2615, 6
  %v2862 = vmul.f32 %v2839, %v2858
  %v2863 = vmul.f32 %v2841, %v2859
  %v2864 = vmul.f32 %v2827, %v2842
  %v2865 = vmul.f32 %v2829, %v2843
  %v2866 = vadd.f32 %v2862, %v2864
  %v2867 = vadd.f32 %v2863, %v2865
  %v2868 = vtanh.pop %v2866
  %v2869 = vtanh.pop %v2867
  %v2870 = vmul.f32 %v2853, %v2868
  %v2871 = vmul.f32 %v2855, %v2869
  %v2872 = vpack.c.bf16 %v2870, %v2870
  %v2873 = vpack.c.bf16 %v2871, %v2871
  %v2876 = vrot.slane %v2872, 1
  %v2877 = vrot.slane %v2873, 1
  %2880 = vmatprep.subr.bf16.mxu0 %v1143
  %2881 = vmatpush1.bf16.msra.mxu0 %v1142
  %2882 = vmatprep.subr.bf16.mxu0 %v1151
  %2883 = vmatpush1.bf16.msra.mxu0 %v1150
  %2884 = vmatprep.subr.bf16.mxu0 %v1159
  %2885 = vmatpush1.bf16.msra.mxu0 %v1158
  %2886 = vmatprep.subr.bf16.mxu0 %v1167
  %2887 = vmatpush1.bf16.msra.mxu0 %v1166
  %2888 = vmatprep.subr.bf16.mxu0 %v1175
  %2889 = vmatpush1.bf16.msra.mxu0 %v1174
  %2890 = vmatprep.subr.bf16.mxu0 %v1183
  %2891 = vmatpush1.bf16.msra.mxu0 %v1182
  %2892 = vmatprep.subr.bf16.mxu0 %v1191
  %2893 = vmatpush1.bf16.msra.mxu0 %v1190
  %2894 = vmatprep.subr.bf16.mxu0 %v1199
  %2895 = vmatpush1.bf16.msra.mxu0 %v1198
  %2896 = vmatprep.subr.bf16.mxu0 %v1207
  %2897 = vmatpush1.bf16.msra.mxu0 %v1206
  %2898 = vmatprep.subr.bf16.mxu0 %v1215
  %2899 = vmatpush1.bf16.msra.mxu0 %v1214
  %2900 = vmatprep.subr.bf16.mxu0 %v1223
  %2901 = vmatpush1.bf16.msra.mxu0 %v1222
  %2902 = vmatprep.subr.bf16.mxu0 %v1231
  %2903 = vmatpush1.bf16.msra.mxu0 %v1230
  %2904 = vmatprep.subr.bf16.mxu0 %v1239
  %2905 = vmatpush1.bf16.msra.mxu0 %v1238
  %2906 = vmatprep.subr.bf16.mxu0 %v1247
  %2907 = vmatpush1.bf16.msra.mxu0 %v1246
  %2908 = vmatprep.subr.bf16.mxu0 %v1255
  %2909 = vmatpush1.bf16.msra.mxu0 %v1254
  %2910 = vmatprep.subr.bf16.mxu0 %v1263
  %2911 = vmatpush1.bf16.msra.mxu0 %v1262
  %2912 = vmatprep.mubr.bf16.mxu0 %v2877
  %2913 = vmatmul.mubr.bf16.gmra.mrb[0].mxu0 %v2876
  %v2914 = vpop.f32.mrb[0].mxu0
  %v2915 = vadd.f32 0.0, %v2914
  %v2916 = vpop.f32.mrb[0].mxu0
  %v2917 = vadd.f32 0.0, %v2916
  %v2918 = vpop.f32.mrb[0].mxu0
  %v2919 = vpop.f32.mrb[0].mxu0
  %2920 = vdwg.mxu0
  %2921 = vmatprep.subr.bf16.mxu0 %v1145
  %2922 = vmatpush1.bf16.msra.mxu0 %v1144
  %2923 = vmatprep.subr.bf16.mxu0 %v1153
  %2924 = vmatpush1.bf16.msra.mxu0 %v1152
  %2925 = vmatprep.subr.bf16.mxu0 %v1161
  %2926 = vmatpush1.bf16.msra.mxu0 %v1160
  %2927 = vmatprep.subr.bf16.mxu0 %v1169
  %2928 = vmatpush1.bf16.msra.mxu0 %v1168
  %2929 = vmatprep.subr.bf16.mxu0 %v1177
  %2930 = vmatpush1.bf16.msra.mxu0 %v1176
  %2931 = vmatprep.subr.bf16.mxu0 %v1185
  %2932 = vmatpush1.bf16.msra.mxu0 %v1184
  %2933 = vmatprep.subr.bf16.mxu0 %v1193
  %2934 = vmatpush1.bf16.msra.mxu0 %v1192
  %2935 = vmatprep.subr.bf16.mxu0 %v1201
  %2936 = vmatpush1.bf16.msra.mxu0 %v1200
  %2937 = vmatprep.subr.bf16.mxu0 %v1209
  %2938 = vmatpush1.bf16.msra.mxu0 %v1208
  %2939 = vmatprep.subr.bf16.mxu0 %v1217
  %2940 = vmatpush1.bf16.msra.mxu0 %v1216
  %2941 = vmatprep.subr.bf16.mxu0 %v1225
  %2942 = vmatpush1.bf16.msra.mxu0 %v1224
  %2943 = vmatprep.subr.bf16.mxu0 %v1233
  %2944 = vmatpush1.bf16.msra.mxu0 %v1232
  %2945 = vmatprep.subr.bf16.mxu0 %v1241
  %2946 = vmatpush1.bf16.msra.mxu0 %v1240
  %2947 = vmatprep.subr.bf16.mxu0 %v1249
  %2948 = vmatpush1.bf16.msra.mxu0 %v1248
  %2949 = vmatprep.subr.bf16.mxu0 %v1257
  %2950 = vmatpush1.bf16.msra.mxu0 %v1256
  %2951 = vmatprep.subr.bf16.mxu0 %v1265
  %2952 = vmatpush1.bf16.msra.mxu0 %v1264
  %2953 = vmatprep.mubr.bf16.mxu0 %v2877
  %2954 = vmatmul.mubr.bf16.gmra.mrb[0].mxu0 %v2876
  %v2955 = vpop.f32.mrb[0].mxu0
  %v2956 = vadd.f32 0.0, %v2955
  %v2957 = vpop.f32.mrb[0].mxu0
  %v2958 = vadd.f32 0.0, %v2957
  %v2959 = vpop.f32.mrb[0].mxu0
  %v2960 = vpop.f32.mrb[0].mxu0
  %2961 = vdwg.mxu0
  %2962 = vmatprep.subr.bf16.mxu0 %v1147
  %2963 = vmatpush1.bf16.msra.mxu0 %v1146
  %2964 = vmatprep.subr.bf16.mxu0 %v1155
  %2965 = vmatpush1.bf16.msra.mxu0 %v1154
  %2966 = vmatprep.subr.bf16.mxu0 %v1163
  %2967 = vmatpush1.bf16.msra.mxu0 %v1162
  %2968 = vmatprep.subr.bf16.mxu0 %v1171
  %2969 = vmatpush1.bf16.msra.mxu0 %v1170
  %2970 = vmatprep.subr.bf16.mxu0 %v1179
  %2971 = vmatpush1.bf16.msra.mxu0 %v1178
  %2972 = vmatprep.subr.bf16.mxu0 %v1187
  %2973 = vmatpush1.bf16.msra.mxu0 %v1186
  %2974 = vmatprep.subr.bf16.mxu0 %v1195
  %2975 = vmatpush1.bf16.msra.mxu0 %v1194
  %2976 = vmatprep.subr.bf16.mxu0 %v1203
  %2977 = vmatpush1.bf16.msra.mxu0 %v1202
  %2978 = vmatprep.subr.bf16.mxu0 %v1211
  %2979 = vmatpush1.bf16.msra.mxu0 %v1210
  %2980 = vmatprep.subr.bf16.mxu0 %v1219
  %2981 = vmatpush1.bf16.msra.mxu0 %v1218
  %2982 = vmatprep.subr.bf16.mxu0 %v1227
  %2983 = vmatpush1.bf16.msra.mxu0 %v1226
  %2984 = vmatprep.subr.bf16.mxu0 %v1235
  %2985 = vmatpush1.bf16.msra.mxu0 %v1234
  %2986 = vmatprep.subr.bf16.mxu0 %v1243
  %2987 = vmatpush1.bf16.msra.mxu0 %v1242
  %2988 = vmatprep.subr.bf16.mxu0 %v1251
  %2989 = vmatpush1.bf16.msra.mxu0 %v1250
  %2990 = vmatprep.subr.bf16.mxu0 %v1259
  %2991 = vmatpush1.bf16.msra.mxu0 %v1258
  %2992 = vmatprep.subr.bf16.mxu0 %v1267
  %2993 = vmatpush1.bf16.msra.mxu0 %v1266
  %2994 = vmatprep.mubr.bf16.mxu0 %v2877
  %2995 = vmatmul.mubr.bf16.gmra.mrb[0].mxu0 %v2876
  %v2996 = vpop.f32.mrb[0].mxu0
  %v2997 = vadd.f32 0.0, %v2996
  %v2998 = vpop.f32.mrb[0].mxu0
  %v2999 = vadd.f32 0.0, %v2998
  %v3000 = vpop.f32.mrb[0].mxu0
  %v3001 = vpop.f32.mrb[0].mxu0
  %3002 = vdwg.mxu0
  %3003 = vmatprep.subr.bf16.mxu0 %v1149
  %3004 = vmatpush1.bf16.msra.mxu0 %v1148
  %3005 = vmatprep.subr.bf16.mxu0 %v1157
  %3006 = vmatpush1.bf16.msra.mxu0 %v1156
  %3007 = vmatprep.subr.bf16.mxu0 %v1165
  %3008 = vmatpush1.bf16.msra.mxu0 %v1164
  %3009 = vmatprep.subr.bf16.mxu0 %v1173
  %3010 = vmatpush1.bf16.msra.mxu0 %v1172
  %3011 = vmatprep.subr.bf16.mxu0 %v1181
  %3012 = vmatpush1.bf16.msra.mxu0 %v1180
  %3013 = vmatprep.subr.bf16.mxu0 %v1189
  %3014 = vmatpush1.bf16.msra.mxu0 %v1188
  %3015 = vmatprep.subr.bf16.mxu0 %v1197
  %3016 = vmatpush1.bf16.msra.mxu0 %v1196
  %3017 = vmatprep.subr.bf16.mxu0 %v1205
  %3018 = vmatpush1.bf16.msra.mxu0 %v1204
  %3019 = vmatprep.subr.bf16.mxu0 %v1213
  %3020 = vmatpush1.bf16.msra.mxu0 %v1212
  %3021 = vmatprep.subr.bf16.mxu0 %v1221
  %3022 = vmatpush1.bf16.msra.mxu0 %v1220
  %3023 = vmatprep.subr.bf16.mxu0 %v1229
  %3024 = vmatpush1.bf16.msra.mxu0 %v1228
  %3025 = vmatprep.subr.bf16.mxu0 %v1237
  %3026 = vmatpush1.bf16.msra.mxu0 %v1236
  %3027 = vmatprep.subr.bf16.mxu0 %v1245
  %3028 = vmatpush1.bf16.msra.mxu0 %v1244
  %3029 = vmatprep.subr.bf16.mxu0 %v1253
  %3030 = vmatpush1.bf16.msra.mxu0 %v1252
  %3031 = vmatprep.subr.bf16.mxu0 %v1261
  %3032 = vmatpush1.bf16.msra.mxu0 %v1260
  %3033 = vmatprep.subr.bf16.mxu0 %v1269
  %3034 = vmatpush1.bf16.msra.mxu0 %v1268
  %3035 = vmatprep.mubr.bf16.mxu0 %v2877
  %3036 = vmatmul.mubr.bf16.gmra.mrb[0].mxu0 %v2876
  %v3037 = vpop.f32.mrb[0].mxu0
  %v3038 = vadd.f32 0.0, %v3037
  %v3039 = vpop.f32.mrb[0].mxu0
  %v3040 = vadd.f32 0.0, %v3039
  %v3041 = vpop.f32.mrb[0].mxu0
  %v3042 = vpop.f32.mrb[0].mxu0
  %3043 = vdwg.mxu0
  %v3052 = vrot.slane %v2915, 4
  %v3053 = vrot.slane %v2917, 4
  %v3054 = vrot.slane %v2956, 4
  %v3055 = vrot.slane %v2958, 4
  %v3056 = vrot.slane %v2997, 4
  %v3057 = vrot.slane %v2999, 4
  %v3058 = vrot.slane %v3038, 4
  %v3059 = vrot.slane %v3040, 4
  %v3068 = vadd.f32 %v497, %v3052
  %v3069 = vadd.f32 %v499, %v3053
  %v3070 = vadd.f32 %v540, %v3054
  %v3071 = vadd.f32 %v542, %v3055
  %v3072 = vadd.f32 %v583, %v3056
  %v3073 = vadd.f32 %v585, %v3057
  %v3074 = vadd.f32 %v626, %v3058
  %v3075 = vadd.f32 %v628, %v3059
  %v3076 = vxor.u32 %v3068, 2147483648
  %v3077 = vxor.u32 %v3069, 2147483648
  %v3078 = vmul.f32 %v3076, 1.442695
  %v3079 = vpow.pop %v3078
  %v3080 = vmul.f32 %v3077, 1.442695
  %v3081 = vpow.pop %v3080
  %v3082 = vadd.f32 %v3079, 1.0
  %v3083 = vadd.f32 %v3081, 1.0
  %v3084 = vrcp.pop %v3082
  %v3085 = vmul.f32 1.0, %v3084
  %v3086 = vrcp.pop %v3083
  %v3087 = vmul.f32 1.0, %v3086
  %v3088 = vxor.u32 %v3070, 2147483648
  %v3089 = vxor.u32 %v3071, 2147483648
  %v3090 = vmul.f32 %v3088, 1.442695
  %v3091 = vpow.pop %v3090
  %v3092 = vmul.f32 %v3089, 1.442695
  %v3093 = vpow.pop %v3092
  %v3094 = vadd.f32 %v3091, 1.0
  %v3095 = vadd.f32 %v3093, 1.0
  %v3096 = vrcp.pop %v3094
  %v3097 = vmul.f32 1.0, %v3096
  %v3098 = vrcp.pop %v3095
  %v3099 = vmul.f32 1.0, %v3098
  %v3100 = vtanh.pop %v3072
  %v3101 = vtanh.pop %v3073
  %v3102 = vxor.u32 %v3074, 2147483648
  %v3103 = vxor.u32 %v3075, 2147483648
  %v3104 = vmul.f32 %v3102, 1.442695
  %v3105 = vpow.pop %v3104
  %v3106 = vmul.f32 %v3103, 1.442695
  %v3107 = vpow.pop %v3106
  %v3108 = vadd.f32 %v3105, 1.0
  %v3109 = vadd.f32 %v3107, 1.0
  %v3110 = vrcp.pop %v3108
  %v3111 = vmul.f32 1.0, %v3110
  %v3112 = vrcp.pop %v3109
  %v3113 = vmul.f32 1.0, %v3112
  %v3116 = vrot.slane %v2866, 6
  %v3117 = vrot.slane %v2867, 6
  %v3120 = vmul.f32 %v3097, %v3116
  %v3121 = vmul.f32 %v3099, %v3117
  %v3122 = vmul.f32 %v3085, %v3100
  %v3123 = vmul.f32 %v3087, %v3101
  %v3124 = vadd.f32 %v3120, %v3122
  %v3125 = vadd.f32 %v3121, %v3123
  %v3126 = vtanh.pop %v3124
  %v3127 = vtanh.pop %v3125
  %v3128 = vmul.f32 %v3111, %v3126
  %v3129 = vmul.f32 %v3113, %v3127
  %v3130 = vpack.c.bf16 %v3128, %v3128
  %v3131 = vpack.c.bf16 %v3129, %v3129
  %v3134 = vrot.slane %v3130, 2
  %v3135 = vrot.slane %v3131, 2
  %3138 = vmatprep.subr.bf16.mxu0 %v1143
  %3139 = vmatpush1.bf16.msra.mxu0 %v1142
  %3140 = vmatprep.subr.bf16.mxu0 %v1151
  %3141 = vmatpush1.bf16.msra.mxu0 %v1150
  %3142 = vmatprep.subr.bf16.mxu0 %v1159
  %3143 = vmatpush1.bf16.msra.mxu0 %v1158
  %3144 = vmatprep.subr.bf16.mxu0 %v1167
  %3145 = vmatpush1.bf16.msra.mxu0 %v1166
  %3146 = vmatprep.subr.bf16.mxu0 %v1175
  %3147 = vmatpush1.bf16.msra.mxu0 %v1174
  %3148 = vmatprep.subr.bf16.mxu0 %v1183
  %3149 = vmatpush1.bf16.msra.mxu0 %v1182
  %3150 = vmatprep.subr.bf16.mxu0 %v1191
  %3151 = vmatpush1.bf16.msra.mxu0 %v1190
  %3152 = vmatprep.subr.bf16.mxu0 %v1199
  %3153 = vmatpush1.bf16.msra.mxu0 %v1198
  %3154 = vmatprep.subr.bf16.mxu0 %v1207
  %3155 = vmatpush1.bf16.msra.mxu0 %v1206
  %3156 = vmatprep.subr.bf16.mxu0 %v1215
  %3157 = vmatpush1.bf16.msra.mxu0 %v1214
  %3158 = vmatprep.subr.bf16.mxu0 %v1223
  %3159 = vmatpush1.bf16.msra.mxu0 %v1222
  %3160 = vmatprep.subr.bf16.mxu0 %v1231
  %3161 = vmatpush1.bf16.msra.mxu0 %v1230
  %3162 = vmatprep.subr.bf16.mxu0 %v1239
  %3163 = vmatpush1.bf16.msra.mxu0 %v1238
  %3164 = vmatprep.subr.bf16.mxu0 %v1247
  %3165 = vmatpush1.bf16.msra.mxu0 %v1246
  %3166 = vmatprep.subr.bf16.mxu0 %v1255
  %3167 = vmatpush1.bf16.msra.mxu0 %v1254
  %3168 = vmatprep.subr.bf16.mxu0 %v1263
  %3169 = vmatpush1.bf16.msra.mxu0 %v1262
  %3170 = vmatprep.mubr.bf16.mxu0 %v3135
  %3171 = vmatmul.mubr.bf16.gmra.mrb[0].mxu0 %v3134
  %v3172 = vpop.f32.mrb[0].mxu0
  %v3173 = vadd.f32 0.0, %v3172
  %v3174 = vpop.f32.mrb[0].mxu0
  %v3175 = vadd.f32 0.0, %v3174
  %v3176 = vpop.f32.mrb[0].mxu0
  %v3177 = vpop.f32.mrb[0].mxu0
  %3178 = vdwg.mxu0
  %3179 = vmatprep.subr.bf16.mxu0 %v1145
  %3180 = vmatpush1.bf16.msra.mxu0 %v1144
  %3181 = vmatprep.subr.bf16.mxu0 %v1153
  %3182 = vmatpush1.bf16.msra.mxu0 %v1152
  %3183 = vmatprep.subr.bf16.mxu0 %v1161
  %3184 = vmatpush1.bf16.msra.mxu0 %v1160
  %3185 = vmatprep.subr.bf16.mxu0 %v1169
  %3186 = vmatpush1.bf16.msra.mxu0 %v1168
  %3187 = vmatprep.subr.bf16.mxu0 %v1177
  %3188 = vmatpush1.bf16.msra.mxu0 %v1176
  %3189 = vmatprep.subr.bf16.mxu0 %v1185
  %3190 = vmatpush1.bf16.msra.mxu0 %v1184
  %3191 = vmatprep.subr.bf16.mxu0 %v1193
  %3192 = vmatpush1.bf16.msra.mxu0 %v1192
  %3193 = vmatprep.subr.bf16.mxu0 %v1201
  %3194 = vmatpush1.bf16.msra.mxu0 %v1200
  %3195 = vmatprep.subr.bf16.mxu0 %v1209
  %3196 = vmatpush1.bf16.msra.mxu0 %v1208
  %3197 = vmatprep.subr.bf16.mxu0 %v1217
  %3198 = vmatpush1.bf16.msra.mxu0 %v1216
  %3199 = vmatprep.subr.bf16.mxu0 %v1225
  %3200 = vmatpush1.bf16.msra.mxu0 %v1224
  %3201 = vmatprep.subr.bf16.mxu0 %v1233
  %3202 = vmatpush1.bf16.msra.mxu0 %v1232
  %3203 = vmatprep.subr.bf16.mxu0 %v1241
  %3204 = vmatpush1.bf16.msra.mxu0 %v1240
  %3205 = vmatprep.subr.bf16.mxu0 %v1249
  %3206 = vmatpush1.bf16.msra.mxu0 %v1248
  %3207 = vmatprep.subr.bf16.mxu0 %v1257
  %3208 = vmatpush1.bf16.msra.mxu0 %v1256
  %3209 = vmatprep.subr.bf16.mxu0 %v1265
  %3210 = vmatpush1.bf16.msra.mxu0 %v1264
  %3211 = vmatprep.mubr.bf16.mxu0 %v3135
  %3212 = vmatmul.mubr.bf16.gmra.mrb[0].mxu0 %v3134
  %v3213 = vpop.f32.mrb[0].mxu0
  %v3214 = vadd.f32 0.0, %v3213
  %v3215 = vpop.f32.mrb[0].mxu0
  %v3216 = vadd.f32 0.0, %v3215
  %v3217 = vpop.f32.mrb[0].mxu0
  %v3218 = vpop.f32.mrb[0].mxu0
  %3219 = vdwg.mxu0
  %3220 = vmatprep.subr.bf16.mxu0 %v1147
  %3221 = vmatpush1.bf16.msra.mxu0 %v1146
  %3222 = vmatprep.subr.bf16.mxu0 %v1155
  %3223 = vmatpush1.bf16.msra.mxu0 %v1154
  %3224 = vmatprep.subr.bf16.mxu0 %v1163
  %3225 = vmatpush1.bf16.msra.mxu0 %v1162
  %3226 = vmatprep.subr.bf16.mxu0 %v1171
  %3227 = vmatpush1.bf16.msra.mxu0 %v1170
  %3228 = vmatprep.subr.bf16.mxu0 %v1179
  %3229 = vmatpush1.bf16.msra.mxu0 %v1178
  %3230 = vmatprep.subr.bf16.mxu0 %v1187
  %3231 = vmatpush1.bf16.msra.mxu0 %v1186
  %3232 = vmatprep.subr.bf16.mxu0 %v1195
  %3233 = vmatpush1.bf16.msra.mxu0 %v1194
  %3234 = vmatprep.subr.bf16.mxu0 %v1203
  %3235 = vmatpush1.bf16.msra.mxu0 %v1202
  %3236 = vmatprep.subr.bf16.mxu0 %v1211
  %3237 = vmatpush1.bf16.msra.mxu0 %v1210
  %3238 = vmatprep.subr.bf16.mxu0 %v1219
  %3239 = vmatpush1.bf16.msra.mxu0 %v1218
  %3240 = vmatprep.subr.bf16.mxu0 %v1227
  %3241 = vmatpush1.bf16.msra.mxu0 %v1226
  %3242 = vmatprep.subr.bf16.mxu0 %v1235
  %3243 = vmatpush1.bf16.msra.mxu0 %v1234
  %3244 = vmatprep.subr.bf16.mxu0 %v1243
  %3245 = vmatpush1.bf16.msra.mxu0 %v1242
  %3246 = vmatprep.subr.bf16.mxu0 %v1251
  %3247 = vmatpush1.bf16.msra.mxu0 %v1250
  %3248 = vmatprep.subr.bf16.mxu0 %v1259
  %3249 = vmatpush1.bf16.msra.mxu0 %v1258
  %3250 = vmatprep.subr.bf16.mxu0 %v1267
  %3251 = vmatpush1.bf16.msra.mxu0 %v1266
  %3252 = vmatprep.mubr.bf16.mxu0 %v3135
  %3253 = vmatmul.mubr.bf16.gmra.mrb[0].mxu0 %v3134
  %v3254 = vpop.f32.mrb[0].mxu0
  %v3255 = vadd.f32 0.0, %v3254
  %v3256 = vpop.f32.mrb[0].mxu0
  %v3257 = vadd.f32 0.0, %v3256
  %v3258 = vpop.f32.mrb[0].mxu0
  %v3259 = vpop.f32.mrb[0].mxu0
  %3260 = vdwg.mxu0
  %3261 = vmatprep.subr.bf16.mxu0 %v1149
  %3262 = vmatpush1.bf16.msra.mxu0 %v1148
  %3263 = vmatprep.subr.bf16.mxu0 %v1157
  %3264 = vmatpush1.bf16.msra.mxu0 %v1156
  %3265 = vmatprep.subr.bf16.mxu0 %v1165
  %3266 = vmatpush1.bf16.msra.mxu0 %v1164
  %3267 = vmatprep.subr.bf16.mxu0 %v1173
  %3268 = vmatpush1.bf16.msra.mxu0 %v1172
  %3269 = vmatprep.subr.bf16.mxu0 %v1181
  %3270 = vmatpush1.bf16.msra.mxu0 %v1180
  %3271 = vmatprep.subr.bf16.mxu0 %v1189
  %3272 = vmatpush1.bf16.msra.mxu0 %v1188
  %3273 = vmatprep.subr.bf16.mxu0 %v1197
  %3274 = vmatpush1.bf16.msra.mxu0 %v1196
  %3275 = vmatprep.subr.bf16.mxu0 %v1205
  %3276 = vmatpush1.bf16.msra.mxu0 %v1204
  %3277 = vmatprep.subr.bf16.mxu0 %v1213
  %3278 = vmatpush1.bf16.msra.mxu0 %v1212
  %3279 = vmatprep.subr.bf16.mxu0 %v1221
  %3280 = vmatpush1.bf16.msra.mxu0 %v1220
  %3281 = vmatprep.subr.bf16.mxu0 %v1229
  %3282 = vmatpush1.bf16.msra.mxu0 %v1228
  %3283 = vmatprep.subr.bf16.mxu0 %v1237
  %3284 = vmatpush1.bf16.msra.mxu0 %v1236
  %3285 = vmatprep.subr.bf16.mxu0 %v1245
  %3286 = vmatpush1.bf16.msra.mxu0 %v1244
  %3287 = vmatprep.subr.bf16.mxu0 %v1253
  %3288 = vmatpush1.bf16.msra.mxu0 %v1252
  %3289 = vmatprep.subr.bf16.mxu0 %v1261
  %3290 = vmatpush1.bf16.msra.mxu0 %v1260
  %3291 = vmatprep.subr.bf16.mxu0 %v1269
  %3292 = vmatpush1.bf16.msra.mxu0 %v1268
  %3293 = vmatprep.mubr.bf16.mxu0 %v3135
  %3294 = vmatmul.mubr.bf16.gmra.mrb[0].mxu0 %v3134
  %v3295 = vpop.f32.mrb[0].mxu0
  %v3296 = vadd.f32 0.0, %v3295
  %v3297 = vpop.f32.mrb[0].mxu0
  %v3298 = vadd.f32 0.0, %v3297
  %v3299 = vpop.f32.mrb[0].mxu0
  %v3300 = vpop.f32.mrb[0].mxu0
  %3301 = vdwg.mxu0
  %v3310 = vrot.slane %v3173, 2
  %v3311 = vrot.slane %v3175, 2
  %v3312 = vrot.slane %v3214, 2
  %v3313 = vrot.slane %v3216, 2
  %v3314 = vrot.slane %v3255, 2
  %v3315 = vrot.slane %v3257, 2
  %v3316 = vrot.slane %v3296, 2
  %v3317 = vrot.slane %v3298, 2
  %v3326 = vadd.f32 %v497, %v3310
  %v3327 = vadd.f32 %v499, %v3311
  %v3328 = vadd.f32 %v540, %v3312
  %v3329 = vadd.f32 %v542, %v3313
  %v3330 = vadd.f32 %v583, %v3314
  %v3331 = vadd.f32 %v585, %v3315
  %v3332 = vadd.f32 %v626, %v3316
  %v3333 = vadd.f32 %v628, %v3317
  %v3334 = vxor.u32 %v3326, 2147483648
  %v3335 = vxor.u32 %v3327, 2147483648
  %v3336 = vmul.f32 %v3334, 1.442695
  %v3337 = vpow.pop %v3336
  %v3338 = vmul.f32 %v3335, 1.442695
  %v3339 = vpow.pop %v3338
  %v3340 = vadd.f32 %v3337, 1.0
  %v3341 = vadd.f32 %v3339, 1.0
  %v3342 = vrcp.pop %v3340
  %v3343 = vmul.f32 1.0, %v3342
  %v3344 = vrcp.pop %v3341
  %v3345 = vmul.f32 1.0, %v3344
  %v3346 = vxor.u32 %v3328, 2147483648
  %v3347 = vxor.u32 %v3329, 2147483648
  %v3348 = vmul.f32 %v3346, 1.442695
  %v3349 = vpow.pop %v3348
  %v3350 = vmul.f32 %v3347, 1.442695
  %v3351 = vpow.pop %v3350
  %v3352 = vadd.f32 %v3349, 1.0
  %v3353 = vadd.f32 %v3351, 1.0
  %v3354 = vrcp.pop %v3352
  %v3355 = vmul.f32 1.0, %v3354
  %v3356 = vrcp.pop %v3353
  %v3357 = vmul.f32 1.0, %v3356
  %v3358 = vtanh.pop %v3330
  %v3359 = vtanh.pop %v3331
  %v3360 = vxor.u32 %v3332, 2147483648
  %v3361 = vxor.u32 %v3333, 2147483648
  %v3362 = vmul.f32 %v3360, 1.442695
  %v3363 = vpow.pop %v3362
  %v3364 = vmul.f32 %v3361, 1.442695
  %v3365 = vpow.pop %v3364
  %v3366 = vadd.f32 %v3363, 1.0
  %v3367 = vadd.f32 %v3365, 1.0
  %v3368 = vrcp.pop %v3366
  %v3369 = vmul.f32 1.0, %v3368
  %v3370 = vrcp.pop %v3367
  %v3371 = vmul.f32 1.0, %v3370
  %v3374 = vrot.slane %v3124, 6
  %v3375 = vrot.slane %v3125, 6
  %v3378 = vmul.f32 %v3355, %v3374
  %v3379 = vmul.f32 %v3357, %v3375
  %v3380 = vmul.f32 %v3343, %v3358
  %v3381 = vmul.f32 %v3345, %v3359
  %v3382 = vadd.f32 %v3378, %v3380
  %v3383 = vadd.f32 %v3379, %v3381
  %v3384 = vtanh.pop %v3382
  %v3385 = vtanh.pop %v3383
  %v3386 = vmul.f32 %v3369, %v3384
  %v3387 = vmul.f32 %v3371, %v3385
  %vm3388 = vcmask 1041408
  %v3389 = vsel %vm3388, %v1616, %v1868
  %v3390 = vsel %vm3388, %v1617, %v1869
  %vm3391 = vcmask 1043456
  %v3392 = vsel %vm3391, %v3389, %v2126
  %v3393 = vsel %vm3391, %v3390, %v2127
  %vm3394 = vcmask 1045504
  %v3395 = vsel %vm3394, %v3392, %v2384
  %v3396 = vsel %vm3394, %v3393, %v2385
  %v3397 = vsel %vm3388, %v2618, %v2870
  %v3398 = vsel %vm3388, %v2619, %v2871
  %v3399 = vsel %vm3391, %v3397, %v3128
  %v3400 = vsel %vm3391, %v3398, %v3129
  %v3401 = vsel %vm3394, %v3399, %v3386
  %v3402 = vsel %vm3394, %v3400, %v3387
  %v3403 = vpack.c.bf16 %v3401, %v3395
  %v3404 = vpack.c.bf16 %v3402, %v3396
  %v3405 = vld [vmem:[%s4] sm:$0xf]
  %v3406 = vld [vmem:[%s4 + $0x4] sm:$0xf]
  %v3407 = vld [vmem:[%s4 + $0x8] sm:$0xf]
  %v3408 = vld [vmem:[%s4 + $0xc] sm:$0xf]
  %v3409 = vld [vmem:[%s4 + $0x10] sm:$0xf]
  %v3410 = vld [vmem:[%s4 + $0x14] sm:$0xf]
  %v3411 = vld [vmem:[%s4 + $0x18] sm:$0xf]
  %v3412 = vld [vmem:[%s4 + $0x1c] sm:$0xf]
  %v3413 = vld [vmem:[%s4 + $0x20] sm:$0xf]
  %v3414 = vld [vmem:[%s4 + $0x24] sm:$0xf]
  %v3415 = vld [vmem:[%s4 + $0x28] sm:$0xf]
  %v3416 = vld [vmem:[%s4 + $0x2c] sm:$0xf]
  %v3417 = vld [vmem:[%s4 + $0x30] sm:$0xf]
  %v3418 = vld [vmem:[%s4 + $0x34] sm:$0xf]
  %v3419 = vld [vmem:[%s4 + $0x38] sm:$0xf]
  %v3420 = vld [vmem:[%s4 + $0x3c] sm:$0xf]
  %v3421 = vld [vmem:[%s4 + $0x40] sm:$0xf]
  %v3422 = vld [vmem:[%s4 + $0x44] sm:$0xf]
  %v3423 = vld [vmem:[%s4 + $0x48] sm:$0xf]
  %v3424 = vld [vmem:[%s4 + $0x4c] sm:$0xf]
  %v3425 = vld [vmem:[%s4 + $0x50] sm:$0xf]
  %v3426 = vld [vmem:[%s4 + $0x54] sm:$0xf]
  %v3427 = vld [vmem:[%s4 + $0x58] sm:$0xf]
  %v3428 = vld [vmem:[%s4 + $0x5c] sm:$0xf]
  %v3429 = vld [vmem:[%s4 + $0x60] sm:$0xf]
  %v3430 = vld [vmem:[%s4 + $0x64] sm:$0xf]
  %v3431 = vld [vmem:[%s4 + $0x68] sm:$0xf]
  %v3432 = vld [vmem:[%s4 + $0x6c] sm:$0xf]
  %v3433 = vld [vmem:[%s4 + $0x70] sm:$0xf]
  %v3434 = vld [vmem:[%s4 + $0x74] sm:$0xf]
  %v3435 = vld [vmem:[%s4 + $0x78] sm:$0xf]
  %v3436 = vld [vmem:[%s4 + $0x7c] sm:$0xf]
  %v3437 = vld [vmem:[%s5] sm:$0x1]
  %v3439 = vlaneseq
  %v3440 = vshrl.u32 %v3439, 7
  %v3441 = vsub.s32 0, %v3440
  %v3442 = vrot.slane %v3437, %v3441
  %v3476 = vunpack.c.l.b16 %v3405
  %v3477 = vunpack.c.l.b16 %v3406
  %v3478 = vunpack.c.l.b16 %v3407
  %v3479 = vunpack.c.l.b16 %v3408
  %v3480 = vunpack.c.l.b16 %v3409
  %v3481 = vunpack.c.l.b16 %v3410
  %v3482 = vunpack.c.l.b16 %v3411
  %v3483 = vunpack.c.l.b16 %v3412
  %v3484 = vunpack.c.l.b16 %v3413
  %v3485 = vunpack.c.l.b16 %v3414
  %v3486 = vunpack.c.l.b16 %v3415
  %v3487 = vunpack.c.l.b16 %v3416
  %v3488 = vunpack.c.l.b16 %v3417
  %v3489 = vunpack.c.l.b16 %v3418
  %v3490 = vunpack.c.l.b16 %v3419
  %v3491 = vunpack.c.l.b16 %v3420
  %v3492 = vunpack.c.l.b16 %v3421
  %v3493 = vunpack.c.l.b16 %v3422
  %v3494 = vunpack.c.l.b16 %v3423
  %v3495 = vunpack.c.l.b16 %v3424
  %v3496 = vunpack.c.l.b16 %v3425
  %v3497 = vunpack.c.l.b16 %v3426
  %v3498 = vunpack.c.l.b16 %v3427
  %v3499 = vunpack.c.l.b16 %v3428
  %v3500 = vunpack.c.l.b16 %v3429
  %v3501 = vunpack.c.l.b16 %v3430
  %v3502 = vunpack.c.l.b16 %v3431
  %v3503 = vunpack.c.l.b16 %v3432
  %v3504 = vunpack.c.l.b16 %v3433
  %v3505 = vunpack.c.l.b16 %v3434
  %v3506 = vunpack.c.l.b16 %v3435
  %v3507 = vunpack.c.l.b16 %v3436
  %v3508 = vpack.c.b16 %v3477, %v3476
  %v3509 = vpack.c.b16 %v3479, %v3478
  %v3510 = vpack.c.b16 %v3481, %v3480
  %v3511 = vpack.c.b16 %v3483, %v3482
  %v3512 = vpack.c.b16 %v3485, %v3484
  %v3513 = vpack.c.b16 %v3487, %v3486
  %v3514 = vpack.c.b16 %v3489, %v3488
  %v3515 = vpack.c.b16 %v3491, %v3490
  %v3516 = vpack.c.b16 %v3493, %v3492
  %v3517 = vpack.c.b16 %v3495, %v3494
  %v3518 = vpack.c.b16 %v3497, %v3496
  %v3519 = vpack.c.b16 %v3499, %v3498
  %v3520 = vpack.c.b16 %v3501, %v3500
  %v3521 = vpack.c.b16 %v3503, %v3502
  %v3522 = vpack.c.b16 %v3505, %v3504
  %v3523 = vpack.c.b16 %v3507, %v3506
  %3540 = vmatprep.subr.bf16.mxu0 0
  %3541 = vmatpush1.bf16.msra.mxu0 %v3508
  %3542 = vmatprep.subr.bf16.mxu0 0
  %3543 = vmatpush1.bf16.msra.mxu0 %v3509
  %3544 = vmatprep.subr.bf16.mxu0 0
  %3545 = vmatpush1.bf16.msra.mxu0 %v3510
  %3546 = vmatprep.subr.bf16.mxu0 0
  %3547 = vmatpush1.bf16.msra.mxu0 %v3511
  %3548 = vmatprep.subr.bf16.mxu0 0
  %3549 = vmatpush1.bf16.msra.mxu0 %v3512
  %3550 = vmatprep.subr.bf16.mxu0 0
  %3551 = vmatpush1.bf16.msra.mxu0 %v3513
  %3552 = vmatprep.subr.bf16.mxu0 0
  %3553 = vmatpush1.bf16.msra.mxu0 %v3514
  %3554 = vmatprep.subr.bf16.mxu0 0
  %3555 = vmatpush1.bf16.msra.mxu0 %v3515
  %3556 = vmatprep.subr.bf16.mxu0 0
  %3557 = vmatpush1.bf16.msra.mxu0 %v3516
  %3558 = vmatprep.subr.bf16.mxu0 0
  %3559 = vmatpush1.bf16.msra.mxu0 %v3517
  %3560 = vmatprep.subr.bf16.mxu0 0
  %3561 = vmatpush1.bf16.msra.mxu0 %v3518
  %3562 = vmatprep.subr.bf16.mxu0 0
  %3563 = vmatpush1.bf16.msra.mxu0 %v3519
  %3564 = vmatprep.subr.bf16.mxu0 0
  %3565 = vmatpush1.bf16.msra.mxu0 %v3520
  %3566 = vmatprep.subr.bf16.mxu0 0
  %3567 = vmatpush1.bf16.msra.mxu0 %v3521
  %3568 = vmatprep.subr.bf16.mxu0 0
  %3569 = vmatpush1.bf16.msra.mxu0 %v3522
  %3570 = vmatprep.subr.bf16.mxu0 0
  %3571 = vmatpush1.bf16.msra.mxu0 %v3523
  %3572 = vmatprep.mubr.bf16.mxu0 %v3404
  %3573 = vmatmul.mubr.bf16.gmra.mrb[0].mxu0 %v3403
  %v3574 = vpop.f32.mrb[0].mxu0
  %v3575 = vadd.f32 %v3442, %v3574
  %v3576 = vpop.f32.mrb[0].mxu0
  %v3577 = vpop.f32.mrb[0].mxu0
  %v3578 = vadd.f32 %v3442, %v3577
  %v3579 = vpop.f32.mrb[0].mxu0
  %3580 = vdwg.mxu0
  %3581 = vst [vmem:[%s6] sm:$0xff] %v3575
  %3582 = vst [vmem:[%s6 + $0x8] sm:$0xff] %v3578
  // Predicated region
  $region26: #{temporal_cnn_forward.3} parent=0 // pred_check
    _
  $region27: #{temporal_cnn_forward.3} parent=0 // pred_check_branch
    %3584 = sbr.rel (0) target = $region29
  $region28: #{temporal_cnn_forward.3} parent=0 // pred_region
    _
  $region29: #{temporal_cnn_forward.3} parent=0 // pred_fallthru
    _
  // Predicated region
  $region30: #{temporal_cnn_forward.3} parent=0 // pred_check
    _
  $region31: #{temporal_cnn_forward.3} parent=0 // pred_check_branch
    %3586 = sbr.rel (0) target = $region33
  $region32: #{temporal_cnn_forward.3} parent=0 // pred_region
    _
  $region33: #{temporal_cnn_forward.3} parent=0 // pred_fallthru
    _

</llo_original>
